<compile_context>
chip_gen: v6e
topology: v6e:2x2x1
jax: 0.10.0
libtpu: 0.0.40
codegen_flags: <defaults>
</compile_context>

<pallas_src>
import math

import jax
import jax.numpy as jnp
from jax.experimental import pallas as pl
from jax.experimental.pallas import tpu as pltpu

# bf16 MXU inputs with f32 accumulation.  Set to jnp.float32 for exact-f32 matmuls.
MATMUL_DTYPE = jnp.bfloat16

_VMEM = pl.BlockSpec(memory_space=pltpu.MemorySpace.VMEM)


# ------------------------------ fused kernel -------------------------------

def _cnn_kernel(x_ref,
                w1_ref, b1_ref, w2_ref, b2_ref, w3_ref, b3_ref,
                w4_ref, b4_ref, w5_ref, b5_ref, w6_ref, b6_ref,
                o_ref):
    f32 = jnp.float32

    def pad_hw(a, ph, pw):
        # Zero-pad the two leading (spatial) axes via leading-dim concats.
        if ph:
            z = jnp.zeros((ph,) + a.shape[1:], f32)
            a = jnp.concatenate([z, a, z], axis=0)
        if pw:
            z = jnp.zeros((a.shape[0], pw) + a.shape[2:], f32)
            a = jnp.concatenate([z, a, z], axis=1)
        return a

    def pool2(a, axis):
        # Max-pool (window 2, stride 2, floor) along a *leading* axis.
        n_out = a.shape[axis] // 2

        def sl(k):
            idx = [slice(None)] * a.ndim
            idx[axis] = slice(k, k + 1)
            return a[tuple(idx)]

        parts = [jnp.maximum(sl(2 * i), sl(2 * i + 1)) for i in range(n_out)]
        return parts[0] if n_out == 1 else jnp.concatenate(parts, axis=axis)

    def conv_relu(a, w_taps, b_row, kh, kw, ph, pw):
        # a: (H, W, N, Cin) f32   w_taps: (kh*kw, Cin, Cout)   b_row: (1, Cout) f32
        a = pad_hw(a, ph, pw)
        hp, wp, n, cin = a.shape
        ho, wo = hp - kh + 1, wp - kw + 1
        acc = None
        for i in range(kh):
            for j in range(kw):
                # shifted-slice im2col tap; flatten is layout-preserving (n == 8k)
                lhs = a[i:i + ho, j:j + wo].reshape(ho * wo * n, cin)
                t = jnp.dot(lhs.astype(w_taps.dtype), w_taps[i * kw + j],
                            preferred_element_type=f32)
                acc = t if acc is None else acc + t
        acc = jnp.maximum(acc + b_row[...], 0.0)
        return acc.reshape(ho, wo, n, acc.shape[-1])

    # ---- conv1_1: Conv(1->64, k=(2,1), pad=(1,1)) + ReLU + MaxPool(2,2) ----
    # Cin*kh*kw == 2  ->  two VPU broadcast FMAs instead of a K=2 MXU matmul.
    xp = pad_hw(x_ref[...], 1, 1)                          # (5, 29, N, 1)
    y = (xp[0:4] * w1_ref[0:1, :]
         + xp[1:5] * w1_ref[1:2, :]
         + b1_ref[...])                                    # (4, 29, N, 64)
    y = jnp.maximum(y, 0.0)
    y = pool2(pool2(y, 0), 1)                              # (2, 14, N, 64)

    # ---- conv1_2: Conv(64->128, k=(1,3), pad=(1,1)) + ReLU + MaxPool(1,2) --
    y = conv_relu(y, w2_ref, b2_ref, 1, 3, 1, 1)           # (4, 14, N, 128)
    y = pool2(y, 1)                                        # (4, 7, N, 128)

    # ---- conv1_3: Conv(128->256, k=(2,2), pad=(1,1)) + ReLU + MaxPool(2,2) -
    y = conv_relu(y, w3_ref, b3_ref, 2, 2, 1, 1)           # (5, 8, N, 256)
    y = pool2(pool2(y, 0), 1)                              # (2, 4, N, 256)

    # ---- conv1_4: Conv(256->128, k=(2,2), pad=(0,0)) + ReLU + MaxPool(1,2) -
    y = conv_relu(y, w4_ref, b4_ref, 2, 2, 0, 0)           # (1, 3, N, 128)
    y = pool2(y, 1)                                        # (1, 1, N, 128)

    # ---- torch.squeeze -> (N, 128) (assumes batch > 1), then two Linears ---
    h = y.reshape(y.shape[2], 128)
    h = jnp.dot(h.astype(w5_ref.dtype), w5_ref[...],
                preferred_element_type=f32) + b5_ref[...]
    out = jnp.dot(h.astype(w6_ref.dtype), w6_ref[...],
                  preferred_element_type=f32) + b6_ref[...]
    o_ref[...] = out.astype(o_ref.dtype)


# ------------------------------- parameters --------------------------------

def init_params(key):
    """Deterministic init matching PyTorch default U(-1/sqrt(fan_in), +)."""
    def conv_init(k, cout, cin, kh, kw):
        k1, k2 = jax.random.split(k)
        s = 1.0 / math.sqrt(cin * kh * kw)
        return (jax.random.uniform(k1, (cout, cin, kh, kw), jnp.float32, -s, s),
                jax.random.uniform(k2, (cout,), jnp.float32, -s, s))

    def lin_init(k, cout, cin):
        k1, k2 = jax.random.split(k)
        s = 1.0 / math.sqrt(cin)
        return (jax.random.uniform(k1, (cout, cin), jnp.float32, -s, s),
                jax.random.uniform(k2, (cout,), jnp.float32, -s, s))

    ks = jax.random.split(key, 6)
    return {
        "conv1_1": conv_init(ks[0], 64, 1, 2, 1),
        "conv1_2": conv_init(ks[1], 128, 64, 1, 3),
        "conv1_3": conv_init(ks[2], 256, 128, 2, 2),
        "conv1_4": conv_init(ks[3], 128, 256, 2, 2),
        "mlp1_1": lin_init(ks[4], 128, 128),
        "mlp1_2": lin_init(ks[5], 27, 128),
    }


def prepare_params(params):
    """One-time weight-layout preparation (hoisted out of the forward pass):
    conv weights -> per-tap (kh*kw, Cin, Cout) matrices, linear weights -> (K, N).
    Matmul weights are cast to MATMUL_DTYPE; conv1_1 (VPU path) and all biases
    stay f32."""
    def conv_taps(w):
        cout, cin, kh, kw = w.shape
        return jnp.transpose(w, (2, 3, 1, 0)).reshape(kh * kw, cin, cout)

    w1, b1 = params["conv1_1"]
    w2, b2 = params["conv1_2"]
    w3, b3 = params["conv1_3"]
    w4, b4 = params["conv1_4"]
    w5, b5 = params["mlp1_1"]
    w6, b6 = params["mlp1_2"]
    return {
        "w1": conv_taps(w1).reshape(2, 64).astype(jnp.float32),
        "b1": b1.reshape(1, -1).astype(jnp.float32),
        "w2": conv_taps(w2).astype(MATMUL_DTYPE),
        "b2": b2.reshape(1, -1).astype(jnp.float32),
        "w3": conv_taps(w3).astype(MATMUL_DTYPE),
        "b3": b3.reshape(1, -1).astype(jnp.float32),
        "w4": conv_taps(w4).astype(MATMUL_DTYPE),
        "b4": b4.reshape(1, -1).astype(jnp.float32),
        "w5": jnp.transpose(w5).astype(MATMUL_DTYPE),
        "b5": b5.reshape(1, -1).astype(jnp.float32),
        "w6": jnp.transpose(w6).astype(MATMUL_DTYPE),
        "b6": b6.reshape(1, -1).astype(jnp.float32),
    }


# --------------------------------- forward ---------------------------------

def cnn_forward(prep, x_nchw):
    """x_nchw: (N, 1, 3, 27) float32 — same input as the PyTorch module."""
    n = x_nchw.shape[0]
    n_pad = -(-n // 8) * 8                        # batch lives on sublanes: pad to 8
    x = jnp.transpose(x_nchw, (2, 3, 0, 1))       # NCHW -> (H, W, N, C) = (3, 27, N, 1)
    if n_pad != n:
        x = jnp.pad(x, ((0, 0), (0, 0), (0, n_pad - n), (0, 0)))

    args = (x, prep["w1"], prep["b1"], prep["w2"], prep["b2"],
            prep["w3"], prep["b3"], prep["w4"], prep["b4"],
            prep["w5"], prep["b5"], prep["w6"], prep["b6"])
    out = pl.pallas_call(
        _cnn_kernel,
        out_shape=jax.ShapeDtypeStruct((n_pad, 27), jnp.float32),
        in_specs=[_VMEM] * len(args),
        out_specs=_VMEM,
    )(*args)
    return out[:n]                                # (N, 27)


if __name__ == "__main__":
    key = jax.random.PRNGKey(0)
    kp, kx = jax.random.split(key)
    params = init_params(kp)
    prep = prepare_params(params)                 # weight prep hoisted out of forward

    # module globals: row=3, col=27, single input channel; small batch of 8
    x = jax.random.normal(kx, (8, 1, 3, 27), dtype=jnp.float32)

    fwd = jax.jit(cnn_forward)
    out = jax.block_until_ready(fwd(prep, x))
    assert out.shape == (8, 27), out.shape
    print("KERNEL_OK")
</pallas_src>

<mosaic_0001>
module attributes {stable_mosaic.version = 11 : i64} {
  func.func @_cnn_kernel(%arg0: memref<3x27x8x1xf32, #tpu.memory_space<vmem>>, %arg1: memref<2x64xf32, #tpu.memory_space<vmem>>, %arg2: memref<1x64xf32, #tpu.memory_space<vmem>>, %arg3: memref<3x64x128xbf16, #tpu.memory_space<vmem>>, %arg4: memref<1x128xf32, #tpu.memory_space<vmem>>, %arg5: memref<4x128x256xbf16, #tpu.memory_space<vmem>>, %arg6: memref<1x256xf32, #tpu.memory_space<vmem>>, %arg7: memref<4x256x128xbf16, #tpu.memory_space<vmem>>, %arg8: memref<1x128xf32, #tpu.memory_space<vmem>>, %arg9: memref<128x128xbf16, #tpu.memory_space<vmem>>, %arg10: memref<1x128xf32, #tpu.memory_space<vmem>>, %arg11: memref<128x27xbf16, #tpu.memory_space<vmem>>, %arg12: memref<1x27xf32, #tpu.memory_space<vmem>>, %arg13: memref<8x27xf32, #tpu.memory_space<vmem>>) attributes {dimension_semantics = [], scalar_prefetch = 0 : i64, scratch_operands = 0 : i64, tpu.core_type = #tpu.core_type<tc>} {
    %c0 = arith.constant 0 : index
    %c0_0 = arith.constant 0 : index
    %c0_1 = arith.constant 0 : index
    %c0_2 = arith.constant 0 : index
    %0 = vector.load %arg0[%c0, %c0_0, %c0_1, %c0_2] : memref<3x27x8x1xf32, #tpu.memory_space<vmem>>, vector<3x27x8x1xf32>
    %cst = arith.constant 0.000000e+00 : f32
    %1 = vector.broadcast %cst : f32 to vector<1x27x8x1xf32>
    %2 = tpu.concatenate %1, %0, %1 in 0 : vector<1x27x8x1xf32>, vector<3x27x8x1xf32>, vector<1x27x8x1xf32> -> vector<5x27x8x1xf32>
    %cst_3 = arith.constant 0.000000e+00 : f32
    %3 = vector.broadcast %cst_3 : f32 to vector<5x1x8x1xf32>
    %4 = tpu.concatenate %3, %2, %3 in 1 : vector<5x1x8x1xf32>, vector<5x27x8x1xf32>, vector<5x1x8x1xf32> -> vector<5x29x8x1xf32>
    %5 = vector.extract_strided_slice %4 {offsets = [0, 0, 0, 0], sizes = [4, 29, 8, 1], strides = [1, 1, 1, 1]} : vector<5x29x8x1xf32> to vector<4x29x8x1xf32>
    %c0_4 = arith.constant 0 : index
    %c0_5 = arith.constant 0 : index
    %6 = vector.load %arg1[%c0_4, %c0_5] : memref<2x64xf32, #tpu.memory_space<vmem>>, vector<1x64xf32>
    %7 = vector.shape_cast %6 : vector<1x64xf32> to vector<1x1x1x64xf32>
    %8 = vector.broadcast %5 : vector<4x29x8x1xf32> to vector<4x29x8x64xf32>
    %9 = vector.broadcast %7 : vector<1x1x1x64xf32> to vector<4x29x8x64xf32>
    %10 = arith.mulf %8, %9 : vector<4x29x8x64xf32>
    %11 = vector.extract_strided_slice %4 {offsets = [1, 0, 0, 0], sizes = [4, 29, 8, 1], strides = [1, 1, 1, 1]} : vector<5x29x8x1xf32> to vector<4x29x8x1xf32>
    %c1 = arith.constant 1 : index
    %c0_6 = arith.constant 0 : index
    %12 = vector.load %arg1[%c1, %c0_6] : memref<2x64xf32, #tpu.memory_space<vmem>>, vector<1x64xf32>
    %13 = vector.shape_cast %12 : vector<1x64xf32> to vector<1x1x1x64xf32>
    %14 = vector.broadcast %11 : vector<4x29x8x1xf32> to vector<4x29x8x64xf32>
    %15 = vector.broadcast %13 : vector<1x1x1x64xf32> to vector<4x29x8x64xf32>
    %16 = arith.mulf %14, %15 : vector<4x29x8x64xf32>
    %17 = arith.addf %10, %16 : vector<4x29x8x64xf32>
    %c0_7 = arith.constant 0 : index
    %c0_8 = arith.constant 0 : index
    %18 = vector.load %arg2[%c0_7, %c0_8] : memref<1x64xf32, #tpu.memory_space<vmem>>, vector<1x64xf32>
    %19 = vector.shape_cast %18 : vector<1x64xf32> to vector<1x1x1x64xf32>
    %20 = vector.broadcast %19 : vector<1x1x1x64xf32> to vector<4x29x8x64xf32>
    %21 = arith.addf %17, %20 : vector<4x29x8x64xf32>
    %cst_9 = arith.constant 0.000000e+00 : f32
    %22 = vector.broadcast %cst_9 : f32 to vector<4x29x8x64xf32>
    %23 = arith.maximumf %21, %22 : vector<4x29x8x64xf32>
    %24 = vector.extract_strided_slice %23 {offsets = [0, 0, 0, 0], sizes = [1, 29, 8, 64], strides = [1, 1, 1, 1]} : vector<4x29x8x64xf32> to vector<1x29x8x64xf32>
    %25 = vector.extract_strided_slice %23 {offsets = [1, 0, 0, 0], sizes = [1, 29, 8, 64], strides = [1, 1, 1, 1]} : vector<4x29x8x64xf32> to vector<1x29x8x64xf32>
    %26 = arith.maximumf %24, %25 : vector<1x29x8x64xf32>
    %27 = vector.extract_strided_slice %23 {offsets = [2, 0, 0, 0], sizes = [1, 29, 8, 64], strides = [1, 1, 1, 1]} : vector<4x29x8x64xf32> to vector<1x29x8x64xf32>
    %28 = vector.extract_strided_slice %23 {offsets = [3, 0, 0, 0], sizes = [1, 29, 8, 64], strides = [1, 1, 1, 1]} : vector<4x29x8x64xf32> to vector<1x29x8x64xf32>
    %29 = arith.maximumf %27, %28 : vector<1x29x8x64xf32>
    %30 = tpu.concatenate %26, %29 in 0 : vector<1x29x8x64xf32>, vector<1x29x8x64xf32> -> vector<2x29x8x64xf32>
    %31 = vector.extract_strided_slice %30 {offsets = [0, 0, 0, 0], sizes = [2, 1, 8, 64], strides = [1, 1, 1, 1]} : vector<2x29x8x64xf32> to vector<2x1x8x64xf32>
    %32 = vector.extract_strided_slice %30 {offsets = [0, 1, 0, 0], sizes = [2, 1, 8, 64], strides = [1, 1, 1, 1]} : vector<2x29x8x64xf32> to vector<2x1x8x64xf32>
    %33 = arith.maximumf %31, %32 : vector<2x1x8x64xf32>
    %34 = vector.extract_strided_slice %30 {offsets = [0, 2, 0, 0], sizes = [2, 1, 8, 64], strides = [1, 1, 1, 1]} : vector<2x29x8x64xf32> to vector<2x1x8x64xf32>
    %35 = vector.extract_strided_slice %30 {offsets = [0, 3, 0, 0], sizes = [2, 1, 8, 64], strides = [1, 1, 1, 1]} : vector<2x29x8x64xf32> to vector<2x1x8x64xf32>
    %36 = arith.maximumf %34, %35 : vector<2x1x8x64xf32>
    %37 = vector.extract_strided_slice %30 {offsets = [0, 4, 0, 0], sizes = [2, 1, 8, 64], strides = [1, 1, 1, 1]} : vector<2x29x8x64xf32> to vector<2x1x8x64xf32>
    %38 = vector.extract_strided_slice %30 {offsets = [0, 5, 0, 0], sizes = [2, 1, 8, 64], strides = [1, 1, 1, 1]} : vector<2x29x8x64xf32> to vector<2x1x8x64xf32>
    %39 = arith.maximumf %37, %38 : vector<2x1x8x64xf32>
    %40 = vector.extract_strided_slice %30 {offsets = [0, 6, 0, 0], sizes = [2, 1, 8, 64], strides = [1, 1, 1, 1]} : vector<2x29x8x64xf32> to vector<2x1x8x64xf32>
    %41 = vector.extract_strided_slice %30 {offsets = [0, 7, 0, 0], sizes = [2, 1, 8, 64], strides = [1, 1, 1, 1]} : vector<2x29x8x64xf32> to vector<2x1x8x64xf32>
    %42 = arith.maximumf %40, %41 : vector<2x1x8x64xf32>
    %43 = vector.extract_strided_slice %30 {offsets = [0, 8, 0, 0], sizes = [2, 1, 8, 64], strides = [1, 1, 1, 1]} : vector<2x29x8x64xf32> to vector<2x1x8x64xf32>
    %44 = vector.extract_strided_slice %30 {offsets = [0, 9, 0, 0], sizes = [2, 1, 8, 64], strides = [1, 1, 1, 1]} : vector<2x29x8x64xf32> to vector<2x1x8x64xf32>
    %45 = arith.maximumf %43, %44 : vector<2x1x8x64xf32>
    %46 = vector.extract_strided_slice %30 {offsets = [0, 10, 0, 0], sizes = [2, 1, 8, 64], strides = [1, 1, 1, 1]} : vector<2x29x8x64xf32> to vector<2x1x8x64xf32>
    %47 = vector.extract_strided_slice %30 {offsets = [0, 11, 0, 0], sizes = [2, 1, 8, 64], strides = [1, 1, 1, 1]} : vector<2x29x8x64xf32> to vector<2x1x8x64xf32>
    %48 = arith.maximumf %46, %47 : vector<2x1x8x64xf32>
    %49 = vector.extract_strided_slice %30 {offsets = [0, 12, 0, 0], sizes = [2, 1, 8, 64], strides = [1, 1, 1, 1]} : vector<2x29x8x64xf32> to vector<2x1x8x64xf32>
    %50 = vector.extract_strided_slice %30 {offsets = [0, 13, 0, 0], sizes = [2, 1, 8, 64], strides = [1, 1, 1, 1]} : vector<2x29x8x64xf32> to vector<2x1x8x64xf32>
    %51 = arith.maximumf %49, %50 : vector<2x1x8x64xf32>
    %52 = vector.extract_strided_slice %30 {offsets = [0, 14, 0, 0], sizes = [2, 1, 8, 64], strides = [1, 1, 1, 1]} : vector<2x29x8x64xf32> to vector<2x1x8x64xf32>
    %53 = vector.extract_strided_slice %30 {offsets = [0, 15, 0, 0], sizes = [2, 1, 8, 64], strides = [1, 1, 1, 1]} : vector<2x29x8x64xf32> to vector<2x1x8x64xf32>
    %54 = arith.maximumf %52, %53 : vector<2x1x8x64xf32>
    %55 = vector.extract_strided_slice %30 {offsets = [0, 16, 0, 0], sizes = [2, 1, 8, 64], strides = [1, 1, 1, 1]} : vector<2x29x8x64xf32> to vector<2x1x8x64xf32>
    %56 = vector.extract_strided_slice %30 {offsets = [0, 17, 0, 0], sizes = [2, 1, 8, 64], strides = [1, 1, 1, 1]} : vector<2x29x8x64xf32> to vector<2x1x8x64xf32>
    %57 = arith.maximumf %55, %56 : vector<2x1x8x64xf32>
    %58 = vector.extract_strided_slice %30 {offsets = [0, 18, 0, 0], sizes = [2, 1, 8, 64], strides = [1, 1, 1, 1]} : vector<2x29x8x64xf32> to vector<2x1x8x64xf32>
    %59 = vector.extract_strided_slice %30 {offsets = [0, 19, 0, 0], sizes = [2, 1, 8, 64], strides = [1, 1, 1, 1]} : vector<2x29x8x64xf32> to vector<2x1x8x64xf32>
    %60 = arith.maximumf %58, %59 : vector<2x1x8x64xf32>
    %61 = vector.extract_strided_slice %30 {offsets = [0, 20, 0, 0], sizes = [2, 1, 8, 64], strides = [1, 1, 1, 1]} : vector<2x29x8x64xf32> to vector<2x1x8x64xf32>
    %62 = vector.extract_strided_slice %30 {offsets = [0, 21, 0, 0], sizes = [2, 1, 8, 64], strides = [1, 1, 1, 1]} : vector<2x29x8x64xf32> to vector<2x1x8x64xf32>
    %63 = arith.maximumf %61, %62 : vector<2x1x8x64xf32>
    %64 = vector.extract_strided_slice %30 {offsets = [0, 22, 0, 0], sizes = [2, 1, 8, 64], strides = [1, 1, 1, 1]} : vector<2x29x8x64xf32> to vector<2x1x8x64xf32>
    %65 = vector.extract_strided_slice %30 {offsets = [0, 23, 0, 0], sizes = [2, 1, 8, 64], strides = [1, 1, 1, 1]} : vector<2x29x8x64xf32> to vector<2x1x8x64xf32>
    %66 = arith.maximumf %64, %65 : vector<2x1x8x64xf32>
    %67 = vector.extract_strided_slice %30 {offsets = [0, 24, 0, 0], sizes = [2, 1, 8, 64], strides = [1, 1, 1, 1]} : vector<2x29x8x64xf32> to vector<2x1x8x64xf32>
    %68 = vector.extract_strided_slice %30 {offsets = [0, 25, 0, 0], sizes = [2, 1, 8, 64], strides = [1, 1, 1, 1]} : vector<2x29x8x64xf32> to vector<2x1x8x64xf32>
    %69 = arith.maximumf %67, %68 : vector<2x1x8x64xf32>
    %70 = vector.extract_strided_slice %30 {offsets = [0, 26, 0, 0], sizes = [2, 1, 8, 64], strides = [1, 1, 1, 1]} : vector<2x29x8x64xf32> to vector<2x1x8x64xf32>
    %71 = vector.extract_strided_slice %30 {offsets = [0, 27, 0, 0], sizes = [2, 1, 8, 64], strides = [1, 1, 1, 1]} : vector<2x29x8x64xf32> to vector<2x1x8x64xf32>
    %72 = arith.maximumf %70, %71 : vector<2x1x8x64xf32>
    %73 = tpu.concatenate %33, %36, %39, %42, %45, %48, %51, %54, %57, %60, %63, %66, %69, %72 in 1 : vector<2x1x8x64xf32>, vector<2x1x8x64xf32>, vector<2x1x8x64xf32>, vector<2x1x8x64xf32>, vector<2x1x8x64xf32>, vector<2x1x8x64xf32>, vector<2x1x8x64xf32>, vector<2x1x8x64xf32>, vector<2x1x8x64xf32>, vector<2x1x8x64xf32>, vector<2x1x8x64xf32>, vector<2x1x8x64xf32>, vector<2x1x8x64xf32>, vector<2x1x8x64xf32> -> vector<2x14x8x64xf32>
    %cst_10 = arith.constant 0.000000e+00 : f32
    %74 = vector.broadcast %cst_10 : f32 to vector<1x14x8x64xf32>
    %75 = tpu.concatenate %74, %73, %74 in 0 : vector<1x14x8x64xf32>, vector<2x14x8x64xf32>, vector<1x14x8x64xf32> -> vector<4x14x8x64xf32>
    %cst_11 = arith.constant 0.000000e+00 : f32
    %76 = vector.broadcast %cst_11 : f32 to vector<4x1x8x64xf32>
    %77 = tpu.concatenate %76, %75, %76 in 1 : vector<4x1x8x64xf32>, vector<4x14x8x64xf32>, vector<4x1x8x64xf32> -> vector<4x16x8x64xf32>
    %78 = vector.extract_strided_slice %77 {offsets = [0, 0, 0, 0], sizes = [4, 14, 8, 64], strides = [1, 1, 1, 1]} : vector<4x16x8x64xf32> to vector<4x14x8x64xf32>
    %79 = vector.shape_cast %78 : vector<4x14x8x64xf32> to vector<448x64xf32>
    %80 = arith.truncf %79 : vector<448x64xf32> to vector<448x64xbf16>
    %c0_12 = arith.constant 0 : index
    %c0_13 = arith.constant 0 : index
    %c0_14 = arith.constant 0 : index
    %81 = vector.load %arg3[%c0_12, %c0_13, %c0_14] : memref<3x64x128xbf16, #tpu.memory_space<vmem>>, vector<1x64x128xbf16>
    %82 = vector.shape_cast %81 : vector<1x64x128xbf16> to vector<64x128xbf16>
    %cst_15 = arith.constant dense<0.000000e+00> : vector<448x128xf32>
    %83 = tpu.matmul %80, %82, %cst_15 {dimension_numbers = #tpu.dot_dimension_numbers<[1], [0], [0], [1], [0, 0, 1, 1], [], []>} : vector<448x64xbf16>, vector<64x128xbf16>, vector<448x128xf32> -> vector<448x128xf32>
    %84 = vector.extract_strided_slice %77 {offsets = [0, 1, 0, 0], sizes = [4, 14, 8, 64], strides = [1, 1, 1, 1]} : vector<4x16x8x64xf32> to vector<4x14x8x64xf32>
    %85 = vector.shape_cast %84 : vector<4x14x8x64xf32> to vector<448x64xf32>
    %86 = arith.truncf %85 : vector<448x64xf32> to vector<448x64xbf16>
    %c1_16 = arith.constant 1 : index
    %c0_17 = arith.constant 0 : index
    %c0_18 = arith.constant 0 : index
    %87 = vector.load %arg3[%c1_16, %c0_17, %c0_18] : memref<3x64x128xbf16, #tpu.memory_space<vmem>>, vector<1x64x128xbf16>
    %88 = vector.shape_cast %87 : vector<1x64x128xbf16> to vector<64x128xbf16>
    %cst_19 = arith.constant dense<0.000000e+00> : vector<448x128xf32>
    %89 = tpu.matmul %86, %88, %cst_19 {dimension_numbers = #tpu.dot_dimension_numbers<[1], [0], [0], [1], [0, 0, 1, 1], [], []>} : vector<448x64xbf16>, vector<64x128xbf16>, vector<448x128xf32> -> vector<448x128xf32>
    %90 = arith.addf %83, %89 : vector<448x128xf32>
    %91 = vector.extract_strided_slice %77 {offsets = [0, 2, 0, 0], sizes = [4, 14, 8, 64], strides = [1, 1, 1, 1]} : vector<4x16x8x64xf32> to vector<4x14x8x64xf32>
    %92 = vector.shape_cast %91 : vector<4x14x8x64xf32> to vector<448x64xf32>
    %93 = arith.truncf %92 : vector<448x64xf32> to vector<448x64xbf16>
    %c2 = arith.constant 2 : index
    %c0_20 = arith.constant 0 : index
    %c0_21 = arith.constant 0 : index
    %94 = vector.load %arg3[%c2, %c0_20, %c0_21] : memref<3x64x128xbf16, #tpu.memory_space<vmem>>, vector<1x64x128xbf16>
    %95 = vector.shape_cast %94 : vector<1x64x128xbf16> to vector<64x128xbf16>
    %cst_22 = arith.constant dense<0.000000e+00> : vector<448x128xf32>
    %96 = tpu.matmul %93, %95, %cst_22 {dimension_numbers = #tpu.dot_dimension_numbers<[1], [0], [0], [1], [0, 0, 1, 1], [], []>} : vector<448x64xbf16>, vector<64x128xbf16>, vector<448x128xf32> -> vector<448x128xf32>
    %97 = arith.addf %90, %96 : vector<448x128xf32>
    %c0_23 = arith.constant 0 : index
    %c0_24 = arith.constant 0 : index
    %98 = vector.load %arg4[%c0_23, %c0_24] : memref<1x128xf32, #tpu.memory_space<vmem>>, vector<1x128xf32>
    %99 = vector.broadcast %98 : vector<1x128xf32> to vector<448x128xf32>
    %100 = arith.addf %97, %99 : vector<448x128xf32>
    %cst_25 = arith.constant 0.000000e+00 : f32
    %101 = vector.broadcast %cst_25 : f32 to vector<448x128xf32>
    %102 = arith.maximumf %100, %101 : vector<448x128xf32>
    %103 = vector.shape_cast %102 : vector<448x128xf32> to vector<4x14x8x128xf32>
    %104 = vector.extract_strided_slice %103 {offsets = [0, 0, 0, 0], sizes = [4, 1, 8, 128], strides = [1, 1, 1, 1]} : vector<4x14x8x128xf32> to vector<4x1x8x128xf32>
    %105 = vector.extract_strided_slice %103 {offsets = [0, 1, 0, 0], sizes = [4, 1, 8, 128], strides = [1, 1, 1, 1]} : vector<4x14x8x128xf32> to vector<4x1x8x128xf32>
    %106 = arith.maximumf %104, %105 : vector<4x1x8x128xf32>
    %107 = vector.extract_strided_slice %103 {offsets = [0, 2, 0, 0], sizes = [4, 1, 8, 128], strides = [1, 1, 1, 1]} : vector<4x14x8x128xf32> to vector<4x1x8x128xf32>
    %108 = vector.extract_strided_slice %103 {offsets = [0, 3, 0, 0], sizes = [4, 1, 8, 128], strides = [1, 1, 1, 1]} : vector<4x14x8x128xf32> to vector<4x1x8x128xf32>
    %109 = arith.maximumf %107, %108 : vector<4x1x8x128xf32>
    %110 = vector.extract_strided_slice %103 {offsets = [0, 4, 0, 0], sizes = [4, 1, 8, 128], strides = [1, 1, 1, 1]} : vector<4x14x8x128xf32> to vector<4x1x8x128xf32>
    %111 = vector.extract_strided_slice %103 {offsets = [0, 5, 0, 0], sizes = [4, 1, 8, 128], strides = [1, 1, 1, 1]} : vector<4x14x8x128xf32> to vector<4x1x8x128xf32>
    %112 = arith.maximumf %110, %111 : vector<4x1x8x128xf32>
    %113 = vector.extract_strided_slice %103 {offsets = [0, 6, 0, 0], sizes = [4, 1, 8, 128], strides = [1, 1, 1, 1]} : vector<4x14x8x128xf32> to vector<4x1x8x128xf32>
    %114 = vector.extract_strided_slice %103 {offsets = [0, 7, 0, 0], sizes = [4, 1, 8, 128], strides = [1, 1, 1, 1]} : vector<4x14x8x128xf32> to vector<4x1x8x128xf32>
    %115 = arith.maximumf %113, %114 : vector<4x1x8x128xf32>
    %116 = vector.extract_strided_slice %103 {offsets = [0, 8, 0, 0], sizes = [4, 1, 8, 128], strides = [1, 1, 1, 1]} : vector<4x14x8x128xf32> to vector<4x1x8x128xf32>
    %117 = vector.extract_strided_slice %103 {offsets = [0, 9, 0, 0], sizes = [4, 1, 8, 128], strides = [1, 1, 1, 1]} : vector<4x14x8x128xf32> to vector<4x1x8x128xf32>
    %118 = arith.maximumf %116, %117 : vector<4x1x8x128xf32>
    %119 = vector.extract_strided_slice %103 {offsets = [0, 10, 0, 0], sizes = [4, 1, 8, 128], strides = [1, 1, 1, 1]} : vector<4x14x8x128xf32> to vector<4x1x8x128xf32>
    %120 = vector.extract_strided_slice %103 {offsets = [0, 11, 0, 0], sizes = [4, 1, 8, 128], strides = [1, 1, 1, 1]} : vector<4x14x8x128xf32> to vector<4x1x8x128xf32>
    %121 = arith.maximumf %119, %120 : vector<4x1x8x128xf32>
    %122 = vector.extract_strided_slice %103 {offsets = [0, 12, 0, 0], sizes = [4, 1, 8, 128], strides = [1, 1, 1, 1]} : vector<4x14x8x128xf32> to vector<4x1x8x128xf32>
    %123 = vector.extract_strided_slice %103 {offsets = [0, 13, 0, 0], sizes = [4, 1, 8, 128], strides = [1, 1, 1, 1]} : vector<4x14x8x128xf32> to vector<4x1x8x128xf32>
    %124 = arith.maximumf %122, %123 : vector<4x1x8x128xf32>
    %125 = tpu.concatenate %106, %109, %112, %115, %118, %121, %124 in 1 : vector<4x1x8x128xf32>, vector<4x1x8x128xf32>, vector<4x1x8x128xf32>, vector<4x1x8x128xf32>, vector<4x1x8x128xf32>, vector<4x1x8x128xf32>, vector<4x1x8x128xf32> -> vector<4x7x8x128xf32>
    %cst_26 = arith.constant 0.000000e+00 : f32
    %126 = vector.broadcast %cst_26 : f32 to vector<1x7x8x128xf32>
    %127 = tpu.concatenate %126, %125, %126 in 0 : vector<1x7x8x128xf32>, vector<4x7x8x128xf32>, vector<1x7x8x128xf32> -> vector<6x7x8x128xf32>
    %cst_27 = arith.constant 0.000000e+00 : f32
    %128 = vector.broadcast %cst_27 : f32 to vector<6x1x8x128xf32>
    %129 = tpu.concatenate %128, %127, %128 in 1 : vector<6x1x8x128xf32>, vector<6x7x8x128xf32>, vector<6x1x8x128xf32> -> vector<6x9x8x128xf32>
    %130 = vector.extract_strided_slice %129 {offsets = [0, 0, 0, 0], sizes = [5, 8, 8, 128], strides = [1, 1, 1, 1]} : vector<6x9x8x128xf32> to vector<5x8x8x128xf32>
    %131 = vector.shape_cast %130 : vector<5x8x8x128xf32> to vector<320x128xf32>
    %132 = arith.truncf %131 : vector<320x128xf32> to vector<320x128xbf16>
    %c0_28 = arith.constant 0 : index
    %c0_29 = arith.constant 0 : index
    %c0_30 = arith.constant 0 : index
    %133 = vector.load %arg5[%c0_28, %c0_29, %c0_30] : memref<4x128x256xbf16, #tpu.memory_space<vmem>>, vector<1x128x256xbf16>
    %134 = vector.shape_cast %133 : vector<1x128x256xbf16> to vector<128x256xbf16>
    %cst_31 = arith.constant dense<0.000000e+00> : vector<320x256xf32>
    %135 = tpu.matmul %132, %134, %cst_31 {dimension_numbers = #tpu.dot_dimension_numbers<[1], [0], [0], [1], [0, 0, 1, 1], [], []>} : vector<320x128xbf16>, vector<128x256xbf16>, vector<320x256xf32> -> vector<320x256xf32>
    %136 = vector.extract_strided_slice %129 {offsets = [0, 1, 0, 0], sizes = [5, 8, 8, 128], strides = [1, 1, 1, 1]} : vector<6x9x8x128xf32> to vector<5x8x8x128xf32>
    %137 = vector.shape_cast %136 : vector<5x8x8x128xf32> to vector<320x128xf32>
    %138 = arith.truncf %137 : vector<320x128xf32> to vector<320x128xbf16>
    %c1_32 = arith.constant 1 : index
    %c0_33 = arith.constant 0 : index
    %c0_34 = arith.constant 0 : index
    %139 = vector.load %arg5[%c1_32, %c0_33, %c0_34] : memref<4x128x256xbf16, #tpu.memory_space<vmem>>, vector<1x128x256xbf16>
    %140 = vector.shape_cast %139 : vector<1x128x256xbf16> to vector<128x256xbf16>
    %cst_35 = arith.constant dense<0.000000e+00> : vector<320x256xf32>
    %141 = tpu.matmul %138, %140, %cst_35 {dimension_numbers = #tpu.dot_dimension_numbers<[1], [0], [0], [1], [0, 0, 1, 1], [], []>} : vector<320x128xbf16>, vector<128x256xbf16>, vector<320x256xf32> -> vector<320x256xf32>
    %142 = arith.addf %135, %141 : vector<320x256xf32>
    %143 = vector.extract_strided_slice %129 {offsets = [1, 0, 0, 0], sizes = [5, 8, 8, 128], strides = [1, 1, 1, 1]} : vector<6x9x8x128xf32> to vector<5x8x8x128xf32>
    %144 = vector.shape_cast %143 : vector<5x8x8x128xf32> to vector<320x128xf32>
    %145 = arith.truncf %144 : vector<320x128xf32> to vector<320x128xbf16>
    %c2_36 = arith.constant 2 : index
    %c0_37 = arith.constant 0 : index
    %c0_38 = arith.constant 0 : index
    %146 = vector.load %arg5[%c2_36, %c0_37, %c0_38] : memref<4x128x256xbf16, #tpu.memory_space<vmem>>, vector<1x128x256xbf16>
    %147 = vector.shape_cast %146 : vector<1x128x256xbf16> to vector<128x256xbf16>
    %cst_39 = arith.constant dense<0.000000e+00> : vector<320x256xf32>
    %148 = tpu.matmul %145, %147, %cst_39 {dimension_numbers = #tpu.dot_dimension_numbers<[1], [0], [0], [1], [0, 0, 1, 1], [], []>} : vector<320x128xbf16>, vector<128x256xbf16>, vector<320x256xf32> -> vector<320x256xf32>
    %149 = arith.addf %142, %148 : vector<320x256xf32>
    %150 = vector.extract_strided_slice %129 {offsets = [1, 1, 0, 0], sizes = [5, 8, 8, 128], strides = [1, 1, 1, 1]} : vector<6x9x8x128xf32> to vector<5x8x8x128xf32>
    %151 = vector.shape_cast %150 : vector<5x8x8x128xf32> to vector<320x128xf32>
    %152 = arith.truncf %151 : vector<320x128xf32> to vector<320x128xbf16>
    %c3 = arith.constant 3 : index
    %c0_40 = arith.constant 0 : index
    %c0_41 = arith.constant 0 : index
    %153 = vector.load %arg5[%c3, %c0_40, %c0_41] : memref<4x128x256xbf16, #tpu.memory_space<vmem>>, vector<1x128x256xbf16>
    %154 = vector.shape_cast %153 : vector<1x128x256xbf16> to vector<128x256xbf16>
    %cst_42 = arith.constant dense<0.000000e+00> : vector<320x256xf32>
    %155 = tpu.matmul %152, %154, %cst_42 {dimension_numbers = #tpu.dot_dimension_numbers<[1], [0], [0], [1], [0, 0, 1, 1], [], []>} : vector<320x128xbf16>, vector<128x256xbf16>, vector<320x256xf32> -> vector<320x256xf32>
    %156 = arith.addf %149, %155 : vector<320x256xf32>
    %c0_43 = arith.constant 0 : index
    %c0_44 = arith.constant 0 : index
    %157 = vector.load %arg6[%c0_43, %c0_44] : memref<1x256xf32, #tpu.memory_space<vmem>>, vector<1x256xf32>
    %158 = vector.broadcast %157 : vector<1x256xf32> to vector<320x256xf32>
    %159 = arith.addf %156, %158 : vector<320x256xf32>
    %cst_45 = arith.constant 0.000000e+00 : f32
    %160 = vector.broadcast %cst_45 : f32 to vector<320x256xf32>
    %161 = arith.maximumf %159, %160 : vector<320x256xf32>
    %162 = vector.shape_cast %161 : vector<320x256xf32> to vector<5x8x8x256xf32>
    %163 = vector.extract_strided_slice %162 {offsets = [0, 0, 0, 0], sizes = [1, 8, 8, 256], strides = [1, 1, 1, 1]} : vector<5x8x8x256xf32> to vector<1x8x8x256xf32>
    %164 = vector.extract_strided_slice %162 {offsets = [1, 0, 0, 0], sizes = [1, 8, 8, 256], strides = [1, 1, 1, 1]} : vector<5x8x8x256xf32> to vector<1x8x8x256xf32>
    %165 = arith.maximumf %163, %164 : vector<1x8x8x256xf32>
    %166 = vector.extract_strided_slice %162 {offsets = [2, 0, 0, 0], sizes = [1, 8, 8, 256], strides = [1, 1, 1, 1]} : vector<5x8x8x256xf32> to vector<1x8x8x256xf32>
    %167 = vector.extract_strided_slice %162 {offsets = [3, 0, 0, 0], sizes = [1, 8, 8, 256], strides = [1, 1, 1, 1]} : vector<5x8x8x256xf32> to vector<1x8x8x256xf32>
    %168 = arith.maximumf %166, %167 : vector<1x8x8x256xf32>
    %169 = tpu.concatenate %165, %168 in 0 : vector<1x8x8x256xf32>, vector<1x8x8x256xf32> -> vector<2x8x8x256xf32>
    %170 = vector.extract_strided_slice %169 {offsets = [0, 0, 0, 0], sizes = [2, 1, 8, 256], strides = [1, 1, 1, 1]} : vector<2x8x8x256xf32> to vector<2x1x8x256xf32>
    %171 = vector.extract_strided_slice %169 {offsets = [0, 1, 0, 0], sizes = [2, 1, 8, 256], strides = [1, 1, 1, 1]} : vector<2x8x8x256xf32> to vector<2x1x8x256xf32>
    %172 = arith.maximumf %170, %171 : vector<2x1x8x256xf32>
    %173 = vector.extract_strided_slice %169 {offsets = [0, 2, 0, 0], sizes = [2, 1, 8, 256], strides = [1, 1, 1, 1]} : vector<2x8x8x256xf32> to vector<2x1x8x256xf32>
    %174 = vector.extract_strided_slice %169 {offsets = [0, 3, 0, 0], sizes = [2, 1, 8, 256], strides = [1, 1, 1, 1]} : vector<2x8x8x256xf32> to vector<2x1x8x256xf32>
    %175 = arith.maximumf %173, %174 : vector<2x1x8x256xf32>
    %176 = vector.extract_strided_slice %169 {offsets = [0, 4, 0, 0], sizes = [2, 1, 8, 256], strides = [1, 1, 1, 1]} : vector<2x8x8x256xf32> to vector<2x1x8x256xf32>
    %177 = vector.extract_strided_slice %169 {offsets = [0, 5, 0, 0], sizes = [2, 1, 8, 256], strides = [1, 1, 1, 1]} : vector<2x8x8x256xf32> to vector<2x1x8x256xf32>
    %178 = arith.maximumf %176, %177 : vector<2x1x8x256xf32>
    %179 = vector.extract_strided_slice %169 {offsets = [0, 6, 0, 0], sizes = [2, 1, 8, 256], strides = [1, 1, 1, 1]} : vector<2x8x8x256xf32> to vector<2x1x8x256xf32>
    %180 = vector.extract_strided_slice %169 {offsets = [0, 7, 0, 0], sizes = [2, 1, 8, 256], strides = [1, 1, 1, 1]} : vector<2x8x8x256xf32> to vector<2x1x8x256xf32>
    %181 = arith.maximumf %179, %180 : vector<2x1x8x256xf32>
    %182 = tpu.concatenate %172, %175, %178, %181 in 1 : vector<2x1x8x256xf32>, vector<2x1x8x256xf32>, vector<2x1x8x256xf32>, vector<2x1x8x256xf32> -> vector<2x4x8x256xf32>
    %183 = vector.extract_strided_slice %182 {offsets = [0, 0, 0, 0], sizes = [1, 3, 8, 256], strides = [1, 1, 1, 1]} : vector<2x4x8x256xf32> to vector<1x3x8x256xf32>
    %184 = vector.shape_cast %183 : vector<1x3x8x256xf32> to vector<24x256xf32>
    %185 = arith.truncf %184 : vector<24x256xf32> to vector<24x256xbf16>
    %c0_46 = arith.constant 0 : index
    %c0_47 = arith.constant 0 : index
    %c0_48 = arith.constant 0 : index
    %186 = vector.load %arg7[%c0_46, %c0_47, %c0_48] : memref<4x256x128xbf16, #tpu.memory_space<vmem>>, vector<1x256x128xbf16>
    %187 = vector.shape_cast %186 : vector<1x256x128xbf16> to vector<256x128xbf16>
    %cst_49 = arith.constant dense<0.000000e+00> : vector<24x128xf32>
    %188 = tpu.matmul %185, %187, %cst_49 {dimension_numbers = #tpu.dot_dimension_numbers<[1], [0], [0], [1], [0, 0, 1, 1], [], []>} : vector<24x256xbf16>, vector<256x128xbf16>, vector<24x128xf32> -> vector<24x128xf32>
    %189 = vector.extract_strided_slice %182 {offsets = [0, 1, 0, 0], sizes = [1, 3, 8, 256], strides = [1, 1, 1, 1]} : vector<2x4x8x256xf32> to vector<1x3x8x256xf32>
    %190 = vector.shape_cast %189 : vector<1x3x8x256xf32> to vector<24x256xf32>
    %191 = arith.truncf %190 : vector<24x256xf32> to vector<24x256xbf16>
    %c1_50 = arith.constant 1 : index
    %c0_51 = arith.constant 0 : index
    %c0_52 = arith.constant 0 : index
    %192 = vector.load %arg7[%c1_50, %c0_51, %c0_52] : memref<4x256x128xbf16, #tpu.memory_space<vmem>>, vector<1x256x128xbf16>
    %193 = vector.shape_cast %192 : vector<1x256x128xbf16> to vector<256x128xbf16>
    %cst_53 = arith.constant dense<0.000000e+00> : vector<24x128xf32>
    %194 = tpu.matmul %191, %193, %cst_53 {dimension_numbers = #tpu.dot_dimension_numbers<[1], [0], [0], [1], [0, 0, 1, 1], [], []>} : vector<24x256xbf16>, vector<256x128xbf16>, vector<24x128xf32> -> vector<24x128xf32>
    %195 = arith.addf %188, %194 : vector<24x128xf32>
    %196 = vector.extract_strided_slice %182 {offsets = [1, 0, 0, 0], sizes = [1, 3, 8, 256], strides = [1, 1, 1, 1]} : vector<2x4x8x256xf32> to vector<1x3x8x256xf32>
    %197 = vector.shape_cast %196 : vector<1x3x8x256xf32> to vector<24x256xf32>
    %198 = arith.truncf %197 : vector<24x256xf32> to vector<24x256xbf16>
    %c2_54 = arith.constant 2 : index
    %c0_55 = arith.constant 0 : index
    %c0_56 = arith.constant 0 : index
    %199 = vector.load %arg7[%c2_54, %c0_55, %c0_56] : memref<4x256x128xbf16, #tpu.memory_space<vmem>>, vector<1x256x128xbf16>
    %200 = vector.shape_cast %199 : vector<1x256x128xbf16> to vector<256x128xbf16>
    %cst_57 = arith.constant dense<0.000000e+00> : vector<24x128xf32>
    %201 = tpu.matmul %198, %200, %cst_57 {dimension_numbers = #tpu.dot_dimension_numbers<[1], [0], [0], [1], [0, 0, 1, 1], [], []>} : vector<24x256xbf16>, vector<256x128xbf16>, vector<24x128xf32> -> vector<24x128xf32>
    %202 = arith.addf %195, %201 : vector<24x128xf32>
    %203 = vector.extract_strided_slice %182 {offsets = [1, 1, 0, 0], sizes = [1, 3, 8, 256], strides = [1, 1, 1, 1]} : vector<2x4x8x256xf32> to vector<1x3x8x256xf32>
    %204 = vector.shape_cast %203 : vector<1x3x8x256xf32> to vector<24x256xf32>
    %205 = arith.truncf %204 : vector<24x256xf32> to vector<24x256xbf16>
    %c3_58 = arith.constant 3 : index
    %c0_59 = arith.constant 0 : index
    %c0_60 = arith.constant 0 : index
    %206 = vector.load %arg7[%c3_58, %c0_59, %c0_60] : memref<4x256x128xbf16, #tpu.memory_space<vmem>>, vector<1x256x128xbf16>
    %207 = vector.shape_cast %206 : vector<1x256x128xbf16> to vector<256x128xbf16>
    %cst_61 = arith.constant dense<0.000000e+00> : vector<24x128xf32>
    %208 = tpu.matmul %205, %207, %cst_61 {dimension_numbers = #tpu.dot_dimension_numbers<[1], [0], [0], [1], [0, 0, 1, 1], [], []>} : vector<24x256xbf16>, vector<256x128xbf16>, vector<24x128xf32> -> vector<24x128xf32>
    %209 = arith.addf %202, %208 : vector<24x128xf32>
    %c0_62 = arith.constant 0 : index
    %c0_63 = arith.constant 0 : index
    %210 = vector.load %arg8[%c0_62, %c0_63] : memref<1x128xf32, #tpu.memory_space<vmem>>, vector<1x128xf32>
    %211 = vector.broadcast %210 : vector<1x128xf32> to vector<24x128xf32>
    %212 = arith.addf %209, %211 : vector<24x128xf32>
    %cst_64 = arith.constant 0.000000e+00 : f32
    %213 = vector.broadcast %cst_64 : f32 to vector<24x128xf32>
    %214 = arith.maximumf %212, %213 : vector<24x128xf32>
    %215 = vector.shape_cast %214 : vector<24x128xf32> to vector<1x3x8x128xf32>
    %216 = vector.extract_strided_slice %215 {offsets = [0, 0, 0, 0], sizes = [1, 1, 8, 128], strides = [1, 1, 1, 1]} : vector<1x3x8x128xf32> to vector<1x1x8x128xf32>
    %217 = vector.extract_strided_slice %215 {offsets = [0, 1, 0, 0], sizes = [1, 1, 8, 128], strides = [1, 1, 1, 1]} : vector<1x3x8x128xf32> to vector<1x1x8x128xf32>
    %218 = arith.maximumf %216, %217 : vector<1x1x8x128xf32>
    %219 = vector.shape_cast %218 : vector<1x1x8x128xf32> to vector<8x128xf32>
    %220 = arith.truncf %219 : vector<8x128xf32> to vector<8x128xbf16>
    %c0_65 = arith.constant 0 : index
    %c0_66 = arith.constant 0 : index
    %221 = vector.load %arg9[%c0_65, %c0_66] : memref<128x128xbf16, #tpu.memory_space<vmem>>, vector<128x128xbf16>
    %cst_67 = arith.constant dense<0.000000e+00> : vector<8x128xf32>
    %222 = tpu.matmul %220, %221, %cst_67 {dimension_numbers = #tpu.dot_dimension_numbers<[1], [0], [0], [1], [0, 0, 1, 1], [], []>} : vector<8x128xbf16>, vector<128x128xbf16>, vector<8x128xf32> -> vector<8x128xf32>
    %c0_68 = arith.constant 0 : index
    %c0_69 = arith.constant 0 : index
    %223 = vector.load %arg10[%c0_68, %c0_69] : memref<1x128xf32, #tpu.memory_space<vmem>>, vector<1x128xf32>
    %224 = vector.broadcast %223 : vector<1x128xf32> to vector<8x128xf32>
    %225 = arith.addf %222, %224 : vector<8x128xf32>
    %226 = arith.truncf %225 : vector<8x128xf32> to vector<8x128xbf16>
    %c0_70 = arith.constant 0 : index
    %c0_71 = arith.constant 0 : index
    %227 = vector.load %arg11[%c0_70, %c0_71] : memref<128x27xbf16, #tpu.memory_space<vmem>>, vector<128x27xbf16>
    %cst_72 = arith.constant dense<0.000000e+00> : vector<8x27xf32>
    %228 = tpu.matmul %226, %227, %cst_72 {dimension_numbers = #tpu.dot_dimension_numbers<[1], [0], [0], [1], [0, 0, 1, 1], [], []>} : vector<8x128xbf16>, vector<128x27xbf16>, vector<8x27xf32> -> vector<8x27xf32>
    %c0_73 = arith.constant 0 : index
    %c0_74 = arith.constant 0 : index
    %229 = vector.load %arg12[%c0_73, %c0_74] : memref<1x27xf32, #tpu.memory_space<vmem>>, vector<1x27xf32>
    %230 = vector.broadcast %229 : vector<1x27xf32> to vector<8x27xf32>
    %231 = arith.addf %228, %230 : vector<8x27xf32>
    %c0_75 = arith.constant 0 : index
    %c0_76 = arith.constant 0 : index
    %232 = vector.load %arg13[%c0_75, %c0_76] : memref<8x27xf32, #tpu.memory_space<vmem>>, vector<8x27xf32>
    tpu.vector_store %arg13[%c0_75, %c0_76], %231 {strides = array<i32>} : memref<8x27xf32, #tpu.memory_space<vmem>>, vector<8x27xf32>,
    return
  }
}

</mosaic_0001>

<llo_original>
// kernel: cnn_forward.1
$region0: #{cnn_forward.1}
  #allocation0 [shape = 'u32[]', space=smem, size = 0x4, offset = 0x4, fixed_abs, tag = 'smem constant byte address 0x4 - core index']
  #allocation1 [shape = 'u32[144,128]{1,0:T(1,128)}', space=vmem, size = 0x12000, scoped, tag = 'internal scratch']
  %s0 = inlined_call_operand.vmem [shape: f32[3,27,8,1], index: 0, kind: input, shape index: {}]
  %s1 = inlined_call_operand.vmem [shape: f32[2,64], index: 1, kind: input, shape index: {}]
  %s2 = inlined_call_operand.vmem [shape: f32[1,64], index: 2, kind: input, shape index: {}]
  %s3 = inlined_call_operand.vmem [shape: bf16[3,64,128], index: 3, kind: input, shape index: {}]
  %s4 = inlined_call_operand.vmem [shape: f32[1,128], index: 4, kind: input, shape index: {}]
  %s5 = inlined_call_operand.vmem [shape: bf16[4,128,256], index: 5, kind: input, shape index: {}]
  %s6 = inlined_call_operand.vmem [shape: f32[1,256], index: 6, kind: input, shape index: {}]
  %s7 = inlined_call_operand.hbm [shape: bf16[4,256,128], index: 7, kind: input, shape index: {}]
  %s8 = inlined_call_operand.vmem [shape: f32[1,128], index: 8, kind: input, shape index: {}]
  %s9 = inlined_call_operand.vmem [shape: bf16[128,128], index: 9, kind: input, shape index: {}]
  %s10 = inlined_call_operand.vmem [shape: f32[1,128], index: 10, kind: input, shape index: {}]
  %s11 = inlined_call_operand.vmem [shape: bf16[128,27], index: 11, kind: input, shape index: {}]
  %s12 = inlined_call_operand.vmem [shape: f32[1,27], index: 12, kind: input, shape index: {}]
  %s13 = inlined_call_operand.hbm [shape: f32[8,27], index: 13, kind: output, shape index: {}]
  %s14 = sld [smem:[#allocation0]]
  $region66: #{cnn_forward.1} parent=0
    _
  %s16 = ssub.s32 1, %s14
  %s17 = scalar_select 0, %s16, %s14
  $region1: #{cnn_forward.1} parent=0
    #allocation2 [shape = 'u8[262144]{0}', space=vmem, size = 0x40000, scoped, tag = 'input window, operand 7, single buffered']
    #allocation3 [shape = 's32[1]{0}', space=sflag, size = 0x4, scoped, tag = 'scoped memory for cnn_forward.1']
    #allocation4 [shape = 's32[1]{0}', space=sflag, size = 0x4, scoped, tag = 'scoped memory for cnn_forward.1']
    #allocation5 [shape = 'u8[4096]{0}', space=vmem, size = 0x1000, scoped, tag = 'output window, operand 0, single buffered']
    %18 = vsyncpa [#allocation3], 0
    %19 = vsyncpa [#allocation4], 0
    // Predicated region
    $region2: #{cnn_forward.1} parent=1 // pred_check
      _
    $region3: #{cnn_forward.1} parent=1 // pred_check_branch
      %21 = sbr.rel (0) target = $region5
    $region4: #{cnn_forward.1} parent=1 // pred_region
      _
    $region5: #{cnn_forward.1} parent=1 // pred_fallthru
      _
    // Predicated region
    $region6: #{cnn_forward.1} parent=1 // pred_check
      _
    $region7: #{cnn_forward.1} parent=1 // pred_check_branch
      %23 = sbr.rel (0) target = $region9
    $region8: #{cnn_forward.1} parent=1 // pred_region
      _
    $region9: #{cnn_forward.1} parent=1 // pred_fallthru
      _
    // Predicated region
    $region10: #{cnn_forward.1} parent=1 // pred_check
      _
    $region11: #{cnn_forward.1} parent=1 // pred_check_branch
      %25 = sbr.rel (0) target = $region13
    $region12: #{cnn_forward.1} parent=1 // pred_region
      _
    $region13: #{cnn_forward.1} parent=1 // pred_fallthru
      _
    // Predicated region
    $region14: #{cnn_forward.1} parent=1 // pred_check
      _
    $region15: #{cnn_forward.1} parent=1 // pred_check_branch
      %27 = sbr.rel (0) target = $region17
    $region16: #{cnn_forward.1} parent=1 // pred_region
      _
    $region17: #{cnn_forward.1} parent=1 // pred_fallthru
      _
    // Predicated region
    $region18: #{cnn_forward.1} parent=1 // pred_check
      _
    $region19: #{cnn_forward.1} parent=1 // pred_check_branch
      %29 = sbr.rel (0) target = $region21
    $region20: #{cnn_forward.1} parent=1 // pred_region
      _
    $region21: #{cnn_forward.1} parent=1 // pred_fallthru
      _
    // Predicated region
    $region22: #{cnn_forward.1} parent=1 // pred_check
      _
    $region23: #{cnn_forward.1} parent=1 // pred_check_branch
      %31 = sbr.rel (0) target = $region25
    $region24: #{cnn_forward.1} parent=1 // pred_region
      _
    $region25: #{cnn_forward.1} parent=1 // pred_fallthru
      _
    // Predicated region
    $region26: #{cnn_forward.1} parent=1 // pred_check
      _
    $region27: #{cnn_forward.1} parent=1 // pred_check_branch
      %33 = sbr.rel (0) target = $region29
    $region28: #{cnn_forward.1} parent=1 // pred_region
      _
    $region29: #{cnn_forward.1} parent=1 // pred_fallthru
      _
    // Predicated region
    $region30: #{cnn_forward.1} parent=1 // pred_check
      _
    $region31: #{cnn_forward.1} parent=1 // pred_check_branch
      %35 = sbr.rel (0) target = $region33
    $region32: #{cnn_forward.1} parent=1 // pred_region
      %s37 = ssub.s32 8192, 8192
      %38 = vsyncadd [#allocation3], %s37
      %s39 = sshll.u32 [#allocation2], 4
      %s40 = int_to_ptr.vmem [resolvable:$true] %s39
      %45 = dma.hbm_to_vmem [thread:$0]  %s7, 8192, %s40, [#allocation3], 64, 64, 4
    $region33: #{cnn_forward.1} parent=1 // pred_fallthru
      _
    // Predicated region
    $region34: #{cnn_forward.1} parent=1 // pred_check
      _
    $region35: #{cnn_forward.1} parent=1 // pred_check_branch
      %47 = sbr.rel (0) target = $region37
    $region36: #{cnn_forward.1} parent=1 // pred_region
      _
    $region37: #{cnn_forward.1} parent=1 // pred_fallthru
      _
    // Predicated region
    $region38: #{cnn_forward.1} parent=1 // pred_check
      _
    $region39: #{cnn_forward.1} parent=1 // pred_check_branch
      %49 = sbr.rel (0) target = $region41
    $region40: #{cnn_forward.1} parent=1 // pred_region
      _
    $region41: #{cnn_forward.1} parent=1 // pred_fallthru
      _
    // Predicated region
    $region42: #{cnn_forward.1} parent=1 // pred_check
      _
    $region43: #{cnn_forward.1} parent=1 // pred_check_branch
      %51 = sbr.rel (0) target = $region45
    $region44: #{cnn_forward.1} parent=1 // pred_region
      _
    $region45: #{cnn_forward.1} parent=1 // pred_fallthru
      _
    // Predicated region
    $region46: #{cnn_forward.1} parent=1 // pred_check
      _
    $region47: #{cnn_forward.1} parent=1 // pred_check_branch
      %53 = sbr.rel (0) target = $region49
    $region48: #{cnn_forward.1} parent=1 // pred_region
      _
    $region49: #{cnn_forward.1} parent=1 // pred_fallthru
      _
    // Predicated region
    $region50: #{cnn_forward.1} parent=1 // pred_check
      _
    $region51: #{cnn_forward.1} parent=1 // pred_check_branch
      %55 = sbr.rel (0) target = $region53
    $region52: #{cnn_forward.1} parent=1 // pred_region
      _
    $region53: #{cnn_forward.1} parent=1 // pred_fallthru
      _
    // Predicated region
    $region54: #{cnn_forward.1} parent=1 // pred_check
      _
    $region55: #{cnn_forward.1} parent=1 // pred_check_branch
      %57 = sbr.rel (0) target = $region57
    $region56: #{cnn_forward.1} parent=1 // pred_region
      %58 = dma.done [#allocation3], 8192
    $region57: #{cnn_forward.1} parent=1 // pred_fallthru
      _
    %v60 = vld [vmem:[%s0] sm:$0xff]
    %v61 = vld [vmem:[%s0 + $0x8] sm:$0xff]
    %v62 = vld [vmem:[%s0 + $0x10] sm:$0xff]
    %v63 = vld [vmem:[%s0 + $0x18] sm:$0xff]
    %v64 = vld [vmem:[%s0 + $0x20] sm:$0xff]
    %v65 = vld [vmem:[%s0 + $0x28] sm:$0xff]
    %v66 = vld [vmem:[%s0 + $0x30] sm:$0xff]
    %v67 = vld [vmem:[%s0 + $0x38] sm:$0xff]
    %v68 = vld [vmem:[%s0 + $0x40] sm:$0xff]
    %v69 = vld [vmem:[%s0 + $0x48] sm:$0xff]
    %v70 = vld [vmem:[%s0 + $0x50] sm:$0xff]
    %v71 = vld [vmem:[%s0 + $0x58] sm:$0xff]
    %v72 = vld [vmem:[%s0 + $0x60] sm:$0xff]
    %v73 = vld [vmem:[%s0 + $0x68] sm:$0xff]
    %v74 = vld [vmem:[%s0 + $0x70] sm:$0xff]
    %v75 = vld [vmem:[%s0 + $0x78] sm:$0xff]
    %v76 = vld [vmem:[%s0 + $0x80] sm:$0xff]
    %v77 = vld [vmem:[%s0 + $0x88] sm:$0xff]
    %v78 = vld [vmem:[%s0 + $0x90] sm:$0xff]
    %v79 = vld [vmem:[%s0 + $0x98] sm:$0xff]
    %v80 = vld [vmem:[%s0 + $0xa0] sm:$0xff]
    %v81 = vld [vmem:[%s0 + $0xa8] sm:$0xff]
    %v82 = vld [vmem:[%s0 + $0xb0] sm:$0xff]
    %v83 = vld [vmem:[%s0 + $0xb8] sm:$0xff]
    %v84 = vld [vmem:[%s0 + $0xc0] sm:$0xff]
    %v85 = vld [vmem:[%s0 + $0xc8] sm:$0xff]
    %v86 = vld [vmem:[%s0 + $0xd0] sm:$0xff]
    %v87 = vld [vmem:[%s0 + $0xd8] sm:$0xff]
    %v88 = vld [vmem:[%s0 + $0xe0] sm:$0xff]
    %v89 = vld [vmem:[%s0 + $0xe8] sm:$0xff]
    %v90 = vld [vmem:[%s0 + $0xf0] sm:$0xff]
    %v91 = vld [vmem:[%s0 + $0xf8] sm:$0xff]
    %v92 = vld [vmem:[%s0 + $0x100] sm:$0xff]
    %v93 = vld [vmem:[%s0 + $0x108] sm:$0xff]
    %v94 = vld [vmem:[%s0 + $0x110] sm:$0xff]
    %v95 = vld [vmem:[%s0 + $0x118] sm:$0xff]
    %v96 = vld [vmem:[%s0 + $0x120] sm:$0xff]
    %v97 = vld [vmem:[%s0 + $0x128] sm:$0xff]
    %v98 = vld [vmem:[%s0 + $0x130] sm:$0xff]
    %v99 = vld [vmem:[%s0 + $0x138] sm:$0xff]
    %v100 = vld [vmem:[%s0 + $0x140] sm:$0xff]
    %v101 = vld [vmem:[%s0 + $0x148] sm:$0xff]
    %v102 = vld [vmem:[%s0 + $0x150] sm:$0xff]
    %v103 = vld [vmem:[%s0 + $0x158] sm:$0xff]
    %v104 = vld [vmem:[%s0 + $0x160] sm:$0xff]
    %v105 = vld [vmem:[%s0 + $0x168] sm:$0xff]
    %v106 = vld [vmem:[%s0 + $0x170] sm:$0xff]
    %v107 = vld [vmem:[%s0 + $0x178] sm:$0xff]
    %v108 = vld [vmem:[%s0 + $0x180] sm:$0xff]
    %v109 = vld [vmem:[%s0 + $0x188] sm:$0xff]
    %v110 = vld [vmem:[%s0 + $0x190] sm:$0xff]
    %v111 = vld [vmem:[%s0 + $0x198] sm:$0xff]
    %v112 = vld [vmem:[%s0 + $0x1a0] sm:$0xff]
    %v113 = vld [vmem:[%s0 + $0x1a8] sm:$0xff]
    %v114 = vld [vmem:[%s0 + $0x1b0] sm:$0xff]
    %v115 = vld [vmem:[%s0 + $0x1b8] sm:$0xff]
    %v116 = vld [vmem:[%s0 + $0x1c0] sm:$0xff]
    %v117 = vld [vmem:[%s0 + $0x1c8] sm:$0xff]
    %v118 = vld [vmem:[%s0 + $0x1d0] sm:$0xff]
    %v119 = vld [vmem:[%s0 + $0x1d8] sm:$0xff]
    %v120 = vld [vmem:[%s0 + $0x1e0] sm:$0xff]
    %v121 = vld [vmem:[%s0 + $0x1e8] sm:$0xff]
    %v122 = vld [vmem:[%s0 + $0x1f0] sm:$0xff]
    %v123 = vld [vmem:[%s0 + $0x1f8] sm:$0xff]
    %v124 = vld [vmem:[%s0 + $0x200] sm:$0xff]
    %v125 = vld [vmem:[%s0 + $0x208] sm:$0xff]
    %v126 = vld [vmem:[%s0 + $0x210] sm:$0xff]
    %v127 = vld [vmem:[%s0 + $0x218] sm:$0xff]
    %v128 = vld [vmem:[%s0 + $0x220] sm:$0xff]
    %v129 = vld [vmem:[%s0 + $0x228] sm:$0xff]
    %v130 = vld [vmem:[%s0 + $0x230] sm:$0xff]
    %v131 = vld [vmem:[%s0 + $0x238] sm:$0xff]
    %v132 = vld [vmem:[%s0 + $0x240] sm:$0xff]
    %v133 = vld [vmem:[%s0 + $0x248] sm:$0xff]
    %v134 = vld [vmem:[%s0 + $0x250] sm:$0xff]
    %v135 = vld [vmem:[%s0 + $0x258] sm:$0xff]
    %v136 = vld [vmem:[%s0 + $0x260] sm:$0xff]
    %v137 = vld [vmem:[%s0 + $0x268] sm:$0xff]
    %v138 = vld [vmem:[%s0 + $0x270] sm:$0xff]
    %v139 = vld [vmem:[%s0 + $0x278] sm:$0xff]
    %v140 = vld [vmem:[%s0 + $0x280] sm:$0xff]
    %v141 = vld [vmem:[%s1] sm:$0x1]
    %143 = vset.pattern.permute.xlu0 0
    %144 = vperm.xlu0 %143, 0.0
    %v145 = vpop.permute.xlu0 %144
    %148 = vset.pattern.permute.xlu0 0
    %149 = vperm.xlu0 %148, %v60
    %v150 = vpop.permute.xlu0 %149
    %153 = vset.pattern.permute.xlu0 0
    %154 = vperm.xlu0 %153, %v61
    %v155 = vpop.permute.xlu0 %154
    %158 = vset.pattern.permute.xlu0 0
    %159 = vperm.xlu0 %158, %v62
    %v160 = vpop.permute.xlu0 %159
    %163 = vset.pattern.permute.xlu0 0
    %164 = vperm.xlu0 %163, %v63
    %v165 = vpop.permute.xlu0 %164
    %168 = vset.pattern.permute.xlu0 0
    %169 = vperm.xlu0 %168, %v64
    %v170 = vpop.permute.xlu0 %169
    %173 = vset.pattern.permute.xlu0 0
    %174 = vperm.xlu0 %173, %v65
    %v175 = vpop.permute.xlu0 %174
    %178 = vset.pattern.permute.xlu0 0
    %179 = vperm.xlu0 %178, %v66
    %v180 = vpop.permute.xlu0 %179
    %183 = vset.pattern.permute.xlu0 0
    %184 = vperm.xlu0 %183, %v67
    %v185 = vpop.permute.xlu0 %184
    %188 = vset.pattern.permute.xlu0 0
    %189 = vperm.xlu0 %188, %v68
    %v190 = vpop.permute.xlu0 %189
    %193 = vset.pattern.permute.xlu0 0
    %194 = vperm.xlu0 %193, %v69
    %v195 = vpop.permute.xlu0 %194
    %198 = vset.pattern.permute.xlu0 0
    %199 = vperm.xlu0 %198, %v70
    %v200 = vpop.permute.xlu0 %199
    %203 = vset.pattern.permute.xlu0 0
    %204 = vperm.xlu0 %203, %v71
    %v205 = vpop.permute.xlu0 %204
    %208 = vset.pattern.permute.xlu0 0
    %209 = vperm.xlu0 %208, %v72
    %v210 = vpop.permute.xlu0 %209
    %213 = vset.pattern.permute.xlu0 0
    %214 = vperm.xlu0 %213, %v73
    %v215 = vpop.permute.xlu0 %214
    %218 = vset.pattern.permute.xlu0 0
    %219 = vperm.xlu0 %218, %v74
    %v220 = vpop.permute.xlu0 %219
    %223 = vset.pattern.permute.xlu0 0
    %224 = vperm.xlu0 %223, %v75
    %v225 = vpop.permute.xlu0 %224
    %228 = vset.pattern.permute.xlu0 0
    %229 = vperm.xlu0 %228, %v76
    %v230 = vpop.permute.xlu0 %229
    %233 = vset.pattern.permute.xlu0 0
    %234 = vperm.xlu0 %233, %v77
    %v235 = vpop.permute.xlu0 %234
    %238 = vset.pattern.permute.xlu0 0
    %239 = vperm.xlu0 %238, %v78
    %v240 = vpop.permute.xlu0 %239
    %243 = vset.pattern.permute.xlu0 0
    %244 = vperm.xlu0 %243, %v79
    %v245 = vpop.permute.xlu0 %244
    %248 = vset.pattern.permute.xlu0 0
    %249 = vperm.xlu0 %248, %v80
    %v250 = vpop.permute.xlu0 %249
    %253 = vset.pattern.permute.xlu0 0
    %254 = vperm.xlu0 %253, %v81
    %v255 = vpop.permute.xlu0 %254
    %258 = vset.pattern.permute.xlu0 0
    %259 = vperm.xlu0 %258, %v82
    %v260 = vpop.permute.xlu0 %259
    %263 = vset.pattern.permute.xlu0 0
    %264 = vperm.xlu0 %263, %v83
    %v265 = vpop.permute.xlu0 %264
    %268 = vset.pattern.permute.xlu0 0
    %269 = vperm.xlu0 %268, %v84
    %v270 = vpop.permute.xlu0 %269
    %273 = vset.pattern.permute.xlu0 0
    %274 = vperm.xlu0 %273, %v85
    %v275 = vpop.permute.xlu0 %274
    %278 = vset.pattern.permute.xlu0 0
    %279 = vperm.xlu0 %278, %v86
    %v280 = vpop.permute.xlu0 %279
    %283 = vset.pattern.permute.xlu0 0
    %284 = vperm.xlu0 %283, %v87
    %v285 = vpop.permute.xlu0 %284
    %288 = vset.pattern.permute.xlu0 0
    %289 = vperm.xlu0 %288, %v88
    %v290 = vpop.permute.xlu0 %289
    %293 = vset.pattern.permute.xlu0 0
    %294 = vperm.xlu0 %293, %v89
    %v295 = vpop.permute.xlu0 %294
    %298 = vset.pattern.permute.xlu0 0
    %299 = vperm.xlu0 %298, %v90
    %v300 = vpop.permute.xlu0 %299
    %303 = vset.pattern.permute.xlu0 0
    %304 = vperm.xlu0 %303, %v91
    %v305 = vpop.permute.xlu0 %304
    %308 = vset.pattern.permute.xlu0 0
    %309 = vperm.xlu0 %308, %v92
    %v310 = vpop.permute.xlu0 %309
    %313 = vset.pattern.permute.xlu0 0
    %314 = vperm.xlu0 %313, %v93
    %v315 = vpop.permute.xlu0 %314
    %318 = vset.pattern.permute.xlu0 0
    %319 = vperm.xlu0 %318, %v94
    %v320 = vpop.permute.xlu0 %319
    %323 = vset.pattern.permute.xlu0 0
    %324 = vperm.xlu0 %323, %v95
    %v325 = vpop.permute.xlu0 %324
    %328 = vset.pattern.permute.xlu0 0
    %329 = vperm.xlu0 %328, %v96
    %v330 = vpop.permute.xlu0 %329
    %333 = vset.pattern.permute.xlu0 0
    %334 = vperm.xlu0 %333, %v97
    %v335 = vpop.permute.xlu0 %334
    %338 = vset.pattern.permute.xlu0 0
    %339 = vperm.xlu0 %338, %v98
    %v340 = vpop.permute.xlu0 %339
    %343 = vset.pattern.permute.xlu0 0
    %344 = vperm.xlu0 %343, %v99
    %v345 = vpop.permute.xlu0 %344
    %348 = vset.pattern.permute.xlu0 0
    %349 = vperm.xlu0 %348, %v100
    %v350 = vpop.permute.xlu0 %349
    %353 = vset.pattern.permute.xlu0 0
    %354 = vperm.xlu0 %353, %v101
    %v355 = vpop.permute.xlu0 %354
    %358 = vset.pattern.permute.xlu0 0
    %359 = vperm.xlu0 %358, %v102
    %v360 = vpop.permute.xlu0 %359
    %363 = vset.pattern.permute.xlu0 0
    %364 = vperm.xlu0 %363, %v103
    %v365 = vpop.permute.xlu0 %364
    %368 = vset.pattern.permute.xlu0 0
    %369 = vperm.xlu0 %368, %v104
    %v370 = vpop.permute.xlu0 %369
    %373 = vset.pattern.permute.xlu0 0
    %374 = vperm.xlu0 %373, %v105
    %v375 = vpop.permute.xlu0 %374
    %378 = vset.pattern.permute.xlu0 0
    %379 = vperm.xlu0 %378, %v106
    %v380 = vpop.permute.xlu0 %379
    %383 = vset.pattern.permute.xlu0 0
    %384 = vperm.xlu0 %383, %v107
    %v385 = vpop.permute.xlu0 %384
    %388 = vset.pattern.permute.xlu0 0
    %389 = vperm.xlu0 %388, %v108
    %v390 = vpop.permute.xlu0 %389
    %393 = vset.pattern.permute.xlu0 0
    %394 = vperm.xlu0 %393, %v109
    %v395 = vpop.permute.xlu0 %394
    %398 = vset.pattern.permute.xlu0 0
    %399 = vperm.xlu0 %398, %v110
    %v400 = vpop.permute.xlu0 %399
    %403 = vset.pattern.permute.xlu0 0
    %404 = vperm.xlu0 %403, %v111
    %v405 = vpop.permute.xlu0 %404
    %408 = vset.pattern.permute.xlu0 0
    %409 = vperm.xlu0 %408, %v112
    %v410 = vpop.permute.xlu0 %409
    %413 = vset.pattern.permute.xlu0 0
    %414 = vperm.xlu0 %413, %v113
    %v415 = vpop.permute.xlu0 %414
    %418 = vset.pattern.permute.xlu0 0
    %419 = vperm.xlu0 %418, %v114
    %v420 = vpop.permute.xlu0 %419
    %423 = vset.pattern.permute.xlu0 0
    %424 = vperm.xlu0 %423, %v115
    %v425 = vpop.permute.xlu0 %424
    %428 = vset.pattern.permute.xlu0 0
    %429 = vperm.xlu0 %428, %v116
    %v430 = vpop.permute.xlu0 %429
    %433 = vset.pattern.permute.xlu0 0
    %434 = vperm.xlu0 %433, %v117
    %v435 = vpop.permute.xlu0 %434
    %438 = vset.pattern.permute.xlu0 0
    %439 = vperm.xlu0 %438, %v118
    %v440 = vpop.permute.xlu0 %439
    %443 = vset.pattern.permute.xlu0 0
    %444 = vperm.xlu0 %443, %v119
    %v445 = vpop.permute.xlu0 %444
    %448 = vset.pattern.permute.xlu0 0
    %449 = vperm.xlu0 %448, %v120
    %v450 = vpop.permute.xlu0 %449
    %453 = vset.pattern.permute.xlu0 0
    %454 = vperm.xlu0 %453, %v121
    %v455 = vpop.permute.xlu0 %454
    %458 = vset.pattern.permute.xlu0 0
    %459 = vperm.xlu0 %458, %v122
    %v460 = vpop.permute.xlu0 %459
    %463 = vset.pattern.permute.xlu0 0
    %464 = vperm.xlu0 %463, %v123
    %v465 = vpop.permute.xlu0 %464
    %468 = vset.pattern.permute.xlu0 0
    %469 = vperm.xlu0 %468, %v124
    %v470 = vpop.permute.xlu0 %469
    %473 = vset.pattern.permute.xlu0 0
    %474 = vperm.xlu0 %473, %v125
    %v475 = vpop.permute.xlu0 %474
    %478 = vset.pattern.permute.xlu0 0
    %479 = vperm.xlu0 %478, %v126
    %v480 = vpop.permute.xlu0 %479
    %483 = vset.pattern.permute.xlu0 0
    %484 = vperm.xlu0 %483, %v127
    %v485 = vpop.permute.xlu0 %484
    %488 = vset.pattern.permute.xlu0 0
    %489 = vperm.xlu0 %488, %v128
    %v490 = vpop.permute.xlu0 %489
    %493 = vset.pattern.permute.xlu0 0
    %494 = vperm.xlu0 %493, %v129
    %v495 = vpop.permute.xlu0 %494
    %498 = vset.pattern.permute.xlu0 0
    %499 = vperm.xlu0 %498, %v130
    %v500 = vpop.permute.xlu0 %499
    %503 = vset.pattern.permute.xlu0 0
    %504 = vperm.xlu0 %503, %v131
    %v505 = vpop.permute.xlu0 %504
    %508 = vset.pattern.permute.xlu0 0
    %509 = vperm.xlu0 %508, %v132
    %v510 = vpop.permute.xlu0 %509
    %513 = vset.pattern.permute.xlu0 0
    %514 = vperm.xlu0 %513, %v133
    %v515 = vpop.permute.xlu0 %514
    %518 = vset.pattern.permute.xlu0 0
    %519 = vperm.xlu0 %518, %v134
    %v520 = vpop.permute.xlu0 %519
    %523 = vset.pattern.permute.xlu0 0
    %524 = vperm.xlu0 %523, %v135
    %v525 = vpop.permute.xlu0 %524
    %528 = vset.pattern.permute.xlu0 0
    %529 = vperm.xlu0 %528, %v136
    %v530 = vpop.permute.xlu0 %529
    %533 = vset.pattern.permute.xlu0 0
    %534 = vperm.xlu0 %533, %v137
    %v535 = vpop.permute.xlu0 %534
    %538 = vset.pattern.permute.xlu0 0
    %539 = vperm.xlu0 %538, %v138
    %v540 = vpop.permute.xlu0 %539
    %543 = vset.pattern.permute.xlu0 0
    %544 = vperm.xlu0 %543, %v139
    %v545 = vpop.permute.xlu0 %544
    %548 = vset.pattern.permute.xlu0 0
    %549 = vperm.xlu0 %548, %v140
    %v550 = vpop.permute.xlu0 %549
    %v552 = vlaneseq
    %v553 = vshrl.u32 %v552, 7
    %v554 = vsub.s32 0, %v553
    %v555 = vrot.slane %v141, %v554
    %v556 = vmul.f32 %v145, %v555
    %v557 = vmul.f32 %v150, %v555
    %v558 = vmul.f32 %v155, %v555
    %v559 = vmul.f32 %v160, %v555
    %v560 = vmul.f32 %v165, %v555
    %v561 = vmul.f32 %v170, %v555
    %v562 = vmul.f32 %v175, %v555
    %v563 = vmul.f32 %v180, %v555
    %v564 = vmul.f32 %v185, %v555
    %v565 = vmul.f32 %v190, %v555
    %v566 = vmul.f32 %v195, %v555
    %v567 = vmul.f32 %v200, %v555
    %v568 = vmul.f32 %v205, %v555
    %v569 = vmul.f32 %v210, %v555
    %v570 = vmul.f32 %v215, %v555
    %v571 = vmul.f32 %v220, %v555
    %v572 = vmul.f32 %v225, %v555
    %v573 = vmul.f32 %v230, %v555
    %v574 = vmul.f32 %v235, %v555
    %v575 = vmul.f32 %v240, %v555
    %v576 = vmul.f32 %v245, %v555
    %v577 = vmul.f32 %v250, %v555
    %v578 = vmul.f32 %v255, %v555
    %v579 = vmul.f32 %v260, %v555
    %v580 = vmul.f32 %v265, %v555
    %v581 = vmul.f32 %v270, %v555
    %v582 = vmul.f32 %v275, %v555
    %v583 = vmul.f32 %v280, %v555
    %v584 = vmul.f32 %v285, %v555
    %v585 = vmul.f32 %v290, %v555
    %v586 = vmul.f32 %v295, %v555
    %v587 = vmul.f32 %v300, %v555
    %v588 = vmul.f32 %v305, %v555
    %v589 = vmul.f32 %v310, %v555
    %v590 = vmul.f32 %v315, %v555
    %v591 = vmul.f32 %v320, %v555
    %v592 = vmul.f32 %v325, %v555
    %v593 = vmul.f32 %v330, %v555
    %v594 = vmul.f32 %v335, %v555
    %v595 = vmul.f32 %v340, %v555
    %v596 = vmul.f32 %v345, %v555
    %v597 = vmul.f32 %v350, %v555
    %v598 = vmul.f32 %v355, %v555
    %v599 = vmul.f32 %v360, %v555
    %v600 = vmul.f32 %v365, %v555
    %v601 = vmul.f32 %v370, %v555
    %v602 = vmul.f32 %v375, %v555
    %v603 = vmul.f32 %v380, %v555
    %v604 = vmul.f32 %v385, %v555
    %v605 = vmul.f32 %v390, %v555
    %v606 = vmul.f32 %v395, %v555
    %v607 = vmul.f32 %v400, %v555
    %v608 = vmul.f32 %v405, %v555
    %v609 = vmul.f32 %v410, %v555
    %v610 = vmul.f32 %v415, %v555
    %v611 = vmul.f32 %v420, %v555
    %v612 = vmul.f32 %v425, %v555
    %v613 = vmul.f32 %v430, %v555
    %v614 = vmul.f32 %v435, %v555
    %v615 = vmul.f32 %v440, %v555
    %v616 = vmul.f32 %v445, %v555
    %v617 = vmul.f32 %v450, %v555
    %v618 = vmul.f32 %v455, %v555
    %v619 = vmul.f32 %v460, %v555
    %v620 = vmul.f32 %v465, %v555
    %v621 = vmul.f32 %v470, %v555
    %v622 = vmul.f32 %v475, %v555
    %v623 = vmul.f32 %v480, %v555
    %v624 = vmul.f32 %v485, %v555
    %v625 = vmul.f32 %v490, %v555
    %v626 = vmul.f32 %v495, %v555
    %v627 = vmul.f32 %v500, %v555
    %v628 = vmul.f32 %v505, %v555
    %v629 = vmul.f32 %v510, %v555
    %v630 = vmul.f32 %v515, %v555
    %v631 = vmul.f32 %v520, %v555
    %v632 = vmul.f32 %v525, %v555
    %v633 = vmul.f32 %v530, %v555
    %v634 = vmul.f32 %v535, %v555
    %v635 = vmul.f32 %v540, %v555
    %v636 = vmul.f32 %v545, %v555
    %v637 = vmul.f32 %v550, %v555
    %v638 = vld [vmem:[%s1 + $0x1] sm:$0x1]
    %v639 = vlaneseq
    %v640 = vshrl.u32 %v639, 7
    %v641 = vsub.s32 0, %v640
    %v642 = vrot.slane %v638, %v641
    %v643 = vmul.f32 %v145, %v642
    %v644 = vmul.f32 %v150, %v642
    %v645 = vmul.f32 %v155, %v642
    %v646 = vmul.f32 %v160, %v642
    %v647 = vmul.f32 %v165, %v642
    %v648 = vmul.f32 %v170, %v642
    %v649 = vmul.f32 %v175, %v642
    %v650 = vmul.f32 %v180, %v642
    %v651 = vmul.f32 %v185, %v642
    %v652 = vmul.f32 %v190, %v642
    %v653 = vmul.f32 %v195, %v642
    %v654 = vmul.f32 %v200, %v642
    %v655 = vmul.f32 %v205, %v642
    %v656 = vmul.f32 %v210, %v642
    %v657 = vmul.f32 %v215, %v642
    %v658 = vmul.f32 %v220, %v642
    %v659 = vmul.f32 %v225, %v642
    %v660 = vmul.f32 %v230, %v642
    %v661 = vmul.f32 %v235, %v642
    %v662 = vmul.f32 %v240, %v642
    %v663 = vmul.f32 %v245, %v642
    %v664 = vmul.f32 %v250, %v642
    %v665 = vmul.f32 %v255, %v642
    %v666 = vmul.f32 %v260, %v642
    %v667 = vmul.f32 %v265, %v642
    %v668 = vmul.f32 %v270, %v642
    %v669 = vmul.f32 %v275, %v642
    %v670 = vmul.f32 %v280, %v642
    %v671 = vmul.f32 %v285, %v642
    %v672 = vmul.f32 %v290, %v642
    %v673 = vmul.f32 %v295, %v642
    %v674 = vmul.f32 %v300, %v642
    %v675 = vmul.f32 %v305, %v642
    %v676 = vmul.f32 %v310, %v642
    %v677 = vmul.f32 %v315, %v642
    %v678 = vmul.f32 %v320, %v642
    %v679 = vmul.f32 %v325, %v642
    %v680 = vmul.f32 %v330, %v642
    %v681 = vmul.f32 %v335, %v642
    %v682 = vmul.f32 %v340, %v642
    %v683 = vmul.f32 %v345, %v642
    %v684 = vmul.f32 %v350, %v642
    %v685 = vmul.f32 %v355, %v642
    %v686 = vmul.f32 %v360, %v642
    %v687 = vmul.f32 %v365, %v642
    %v688 = vmul.f32 %v370, %v642
    %v689 = vmul.f32 %v375, %v642
    %v690 = vmul.f32 %v380, %v642
    %v691 = vmul.f32 %v385, %v642
    %v692 = vmul.f32 %v390, %v642
    %v693 = vmul.f32 %v395, %v642
    %v694 = vmul.f32 %v400, %v642
    %v695 = vmul.f32 %v405, %v642
    %v696 = vmul.f32 %v410, %v642
    %v697 = vmul.f32 %v415, %v642
    %v698 = vmul.f32 %v420, %v642
    %v699 = vmul.f32 %v425, %v642
    %v700 = vmul.f32 %v430, %v642
    %v701 = vmul.f32 %v435, %v642
    %v702 = vmul.f32 %v440, %v642
    %v703 = vmul.f32 %v445, %v642
    %v704 = vmul.f32 %v450, %v642
    %v705 = vmul.f32 %v455, %v642
    %v706 = vmul.f32 %v460, %v642
    %v707 = vmul.f32 %v465, %v642
    %v708 = vmul.f32 %v470, %v642
    %v709 = vmul.f32 %v475, %v642
    %v710 = vmul.f32 %v480, %v642
    %v711 = vmul.f32 %v485, %v642
    %v712 = vmul.f32 %v490, %v642
    %v713 = vmul.f32 %v495, %v642
    %v714 = vmul.f32 %v500, %v642
    %v715 = vmul.f32 %v505, %v642
    %v716 = vmul.f32 %v510, %v642
    %v717 = vmul.f32 %v515, %v642
    %v718 = vmul.f32 %v520, %v642
    %v719 = vmul.f32 %v525, %v642
    %v720 = vmul.f32 %v530, %v642
    %v721 = vmul.f32 %v535, %v642
    %v722 = vmul.f32 %v540, %v642
    %v723 = vmul.f32 %v545, %v642
    %v724 = vmul.f32 %v550, %v642
    %v725 = vadd.f32 %v556, %v643
    %v726 = vadd.f32 %v556, %v644
    %v727 = vadd.f32 %v556, %v645
    %v728 = vadd.f32 %v556, %v646
    %v729 = vadd.f32 %v556, %v647
    %v730 = vadd.f32 %v556, %v648
    %v731 = vadd.f32 %v556, %v649
    %v732 = vadd.f32 %v556, %v650
    %v733 = vadd.f32 %v556, %v651
    %v734 = vadd.f32 %v556, %v652
    %v735 = vadd.f32 %v556, %v653
    %v736 = vadd.f32 %v556, %v654
    %v737 = vadd.f32 %v556, %v655
    %v738 = vadd.f32 %v556, %v656
    %v739 = vadd.f32 %v556, %v657
    %v740 = vadd.f32 %v556, %v658
    %v741 = vadd.f32 %v556, %v659
    %v742 = vadd.f32 %v556, %v660
    %v743 = vadd.f32 %v556, %v661
    %v744 = vadd.f32 %v556, %v662
    %v745 = vadd.f32 %v556, %v663
    %v746 = vadd.f32 %v556, %v664
    %v747 = vadd.f32 %v556, %v665
    %v748 = vadd.f32 %v556, %v666
    %v749 = vadd.f32 %v556, %v667
    %v750 = vadd.f32 %v556, %v668
    %v751 = vadd.f32 %v556, %v669
    %v752 = vadd.f32 %v556, %v670
    %v753 = vadd.f32 %v557, %v671
    %v754 = vadd.f32 %v558, %v672
    %v755 = vadd.f32 %v559, %v673
    %v756 = vadd.f32 %v560, %v674
    %v757 = vadd.f32 %v561, %v675
    %v758 = vadd.f32 %v562, %v676
    %v759 = vadd.f32 %v563, %v677
    %v760 = vadd.f32 %v564, %v678
    %v761 = vadd.f32 %v565, %v679
    %v762 = vadd.f32 %v566, %v680
    %v763 = vadd.f32 %v567, %v681
    %v764 = vadd.f32 %v568, %v682
    %v765 = vadd.f32 %v569, %v683
    %v766 = vadd.f32 %v570, %v684
    %v767 = vadd.f32 %v571, %v685
    %v768 = vadd.f32 %v572, %v686
    %v769 = vadd.f32 %v573, %v687
    %v770 = vadd.f32 %v574, %v688
    %v771 = vadd.f32 %v575, %v689
    %v772 = vadd.f32 %v576, %v690
    %v773 = vadd.f32 %v577, %v691
    %v774 = vadd.f32 %v578, %v692
    %v775 = vadd.f32 %v579, %v693
    %v776 = vadd.f32 %v580, %v694
    %v777 = vadd.f32 %v581, %v695
    %v778 = vadd.f32 %v582, %v696
    %v779 = vadd.f32 %v583, %v697
    %v780 = vadd.f32 %v584, %v698
    %v781 = vadd.f32 %v585, %v699
    %v782 = vadd.f32 %v586, %v700
    %v783 = vadd.f32 %v587, %v701
    %v784 = vadd.f32 %v588, %v702
    %v785 = vadd.f32 %v589, %v703
    %v786 = vadd.f32 %v590, %v704
    %v787 = vadd.f32 %v591, %v705
    %v788 = vadd.f32 %v592, %v706
    %v789 = vadd.f32 %v593, %v707
    %v790 = vadd.f32 %v594, %v708
    %v791 = vadd.f32 %v595, %v709
    %v792 = vadd.f32 %v596, %v710
    %v793 = vadd.f32 %v597, %v711
    %v794 = vadd.f32 %v598, %v712
    %v795 = vadd.f32 %v599, %v713
    %v796 = vadd.f32 %v600, %v714
    %v797 = vadd.f32 %v601, %v715
    %v798 = vadd.f32 %v602, %v716
    %v799 = vadd.f32 %v603, %v717
    %v800 = vadd.f32 %v604, %v718
    %v801 = vadd.f32 %v605, %v719
    %v802 = vadd.f32 %v606, %v720
    %v803 = vadd.f32 %v607, %v721
    %v804 = vadd.f32 %v608, %v722
    %v805 = vadd.f32 %v609, %v723
    %v806 = vadd.f32 %v610, %v724
    %v807 = vadd.f32 %v611, %v643
    %v808 = vadd.f32 %v612, %v643
    %v809 = vadd.f32 %v613, %v643
    %v810 = vadd.f32 %v614, %v643
    %v811 = vadd.f32 %v615, %v643
    %v812 = vadd.f32 %v616, %v643
    %v813 = vadd.f32 %v617, %v643
    %v814 = vadd.f32 %v618, %v643
    %v815 = vadd.f32 %v619, %v643
    %v816 = vadd.f32 %v620, %v643
    %v817 = vadd.f32 %v621, %v643
    %v818 = vadd.f32 %v622, %v643
    %v819 = vadd.f32 %v623, %v643
    %v820 = vadd.f32 %v624, %v643
    %v821 = vadd.f32 %v625, %v643
    %v822 = vadd.f32 %v626, %v643
    %v823 = vadd.f32 %v627, %v643
    %v824 = vadd.f32 %v628, %v643
    %v825 = vadd.f32 %v629, %v643
    %v826 = vadd.f32 %v630, %v643
    %v827 = vadd.f32 %v631, %v643
    %v828 = vadd.f32 %v632, %v643
    %v829 = vadd.f32 %v633, %v643
    %v830 = vadd.f32 %v634, %v643
    %v831 = vadd.f32 %v635, %v643
    %v832 = vadd.f32 %v636, %v643
    %v833 = vadd.f32 %v637, %v643
    %v834 = vld [vmem:[%s2] sm:$0x1]
    %v836 = vlaneseq
    %v837 = vshrl.u32 %v836, 7
    %v838 = vsub.s32 0, %v837
    %v839 = vrot.slane %v834, %v838
    %v841 = vadd.f32 %v725, %v839
    %v842 = vadd.f32 %v726, %v839
    %v843 = vadd.f32 %v727, %v839
    %v844 = vadd.f32 %v728, %v839
    %v845 = vadd.f32 %v729, %v839
    %v846 = vadd.f32 %v730, %v839
    %v847 = vadd.f32 %v731, %v839
    %v848 = vadd.f32 %v732, %v839
    %v849 = vadd.f32 %v733, %v839
    %v850 = vadd.f32 %v734, %v839
    %v851 = vadd.f32 %v735, %v839
    %v852 = vadd.f32 %v736, %v839
    %v853 = vadd.f32 %v737, %v839
    %v854 = vadd.f32 %v738, %v839
    %v855 = vadd.f32 %v739, %v839
    %v856 = vadd.f32 %v740, %v839
    %v857 = vadd.f32 %v741, %v839
    %v858 = vadd.f32 %v742, %v839
    %v859 = vadd.f32 %v743, %v839
    %v860 = vadd.f32 %v744, %v839
    %v861 = vadd.f32 %v745, %v839
    %v862 = vadd.f32 %v746, %v839
    %v863 = vadd.f32 %v747, %v839
    %v864 = vadd.f32 %v748, %v839
    %v865 = vadd.f32 %v749, %v839
    %v866 = vadd.f32 %v750, %v839
    %v867 = vadd.f32 %v751, %v839
    %v868 = vadd.f32 %v752, %v839
    %v869 = vadd.f32 %v753, %v839
    %v870 = vadd.f32 %v754, %v839
    %v871 = vadd.f32 %v755, %v839
    %v872 = vadd.f32 %v756, %v839
    %v873 = vadd.f32 %v757, %v839
    %v874 = vadd.f32 %v758, %v839
    %v875 = vadd.f32 %v759, %v839
    %v876 = vadd.f32 %v760, %v839
    %v877 = vadd.f32 %v761, %v839
    %v878 = vadd.f32 %v762, %v839
    %v879 = vadd.f32 %v763, %v839
    %v880 = vadd.f32 %v764, %v839
    %v881 = vadd.f32 %v765, %v839
    %v882 = vadd.f32 %v766, %v839
    %v883 = vadd.f32 %v767, %v839
    %v884 = vadd.f32 %v768, %v839
    %v885 = vadd.f32 %v769, %v839
    %v886 = vadd.f32 %v770, %v839
    %v887 = vadd.f32 %v771, %v839
    %v888 = vadd.f32 %v772, %v839
    %v889 = vadd.f32 %v773, %v839
    %v890 = vadd.f32 %v774, %v839
    %v891 = vadd.f32 %v775, %v839
    %v892 = vadd.f32 %v776, %v839
    %v893 = vadd.f32 %v777, %v839
    %v894 = vadd.f32 %v778, %v839
    %v895 = vadd.f32 %v779, %v839
    %v896 = vadd.f32 %v780, %v839
    %v897 = vadd.f32 %v781, %v839
    %v898 = vadd.f32 %v782, %v839
    %v899 = vadd.f32 %v783, %v839
    %v900 = vadd.f32 %v784, %v839
    %v901 = vadd.f32 %v785, %v839
    %v902 = vadd.f32 %v786, %v839
    %v903 = vadd.f32 %v787, %v839
    %v904 = vadd.f32 %v788, %v839
    %v905 = vadd.f32 %v789, %v839
    %v906 = vadd.f32 %v790, %v839
    %v907 = vadd.f32 %v791, %v839
    %v908 = vadd.f32 %v792, %v839
    %v909 = vadd.f32 %v793, %v839
    %v910 = vadd.f32 %v794, %v839
    %v911 = vadd.f32 %v795, %v839
    %v912 = vadd.f32 %v796, %v839
    %v913 = vadd.f32 %v797, %v839
    %v914 = vadd.f32 %v798, %v839
    %v915 = vadd.f32 %v799, %v839
    %v916 = vadd.f32 %v800, %v839
    %v917 = vadd.f32 %v801, %v839
    %v918 = vadd.f32 %v802, %v839
    %v919 = vadd.f32 %v803, %v839
    %v920 = vadd.f32 %v804, %v839
    %v921 = vadd.f32 %v805, %v839
    %v922 = vadd.f32 %v806, %v839
    %v923 = vadd.f32 %v807, %v839
    %v924 = vadd.f32 %v808, %v839
    %v925 = vadd.f32 %v809, %v839
    %v926 = vadd.f32 %v810, %v839
    %v927 = vadd.f32 %v811, %v839
    %v928 = vadd.f32 %v812, %v839
    %v929 = vadd.f32 %v813, %v839
    %v930 = vadd.f32 %v814, %v839
    %v931 = vadd.f32 %v815, %v839
    %v932 = vadd.f32 %v816, %v839
    %v933 = vadd.f32 %v817, %v839
    %v934 = vadd.f32 %v818, %v839
    %v935 = vadd.f32 %v819, %v839
    %v936 = vadd.f32 %v820, %v839
    %v937 = vadd.f32 %v821, %v839
    %v938 = vadd.f32 %v822, %v839
    %v939 = vadd.f32 %v823, %v839
    %v940 = vadd.f32 %v824, %v839
    %v941 = vadd.f32 %v825, %v839
    %v942 = vadd.f32 %v826, %v839
    %v943 = vadd.f32 %v827, %v839
    %v944 = vadd.f32 %v828, %v839
    %v945 = vadd.f32 %v829, %v839
    %v946 = vadd.f32 %v830, %v839
    %v947 = vadd.f32 %v831, %v839
    %v948 = vadd.f32 %v832, %v839
    %v949 = vadd.f32 %v833, %v839
    %v950 = vmax.f32 %v841, 0.0
    %v951 = vmax.f32 %v842, 0.0
    %v952 = vmax.f32 %v843, 0.0
    %v953 = vmax.f32 %v844, 0.0
    %v954 = vmax.f32 %v845, 0.0
    %v955 = vmax.f32 %v846, 0.0
    %v956 = vmax.f32 %v847, 0.0
    %v957 = vmax.f32 %v848, 0.0
    %v958 = vmax.f32 %v849, 0.0
    %v959 = vmax.f32 %v850, 0.0
    %v960 = vmax.f32 %v851, 0.0
    %v961 = vmax.f32 %v852, 0.0
    %v962 = vmax.f32 %v853, 0.0
    %v963 = vmax.f32 %v854, 0.0
    %v964 = vmax.f32 %v855, 0.0
    %v965 = vmax.f32 %v856, 0.0
    %v966 = vmax.f32 %v857, 0.0
    %v967 = vmax.f32 %v858, 0.0
    %v968 = vmax.f32 %v859, 0.0
    %v969 = vmax.f32 %v860, 0.0
    %v970 = vmax.f32 %v861, 0.0
    %v971 = vmax.f32 %v862, 0.0
    %v972 = vmax.f32 %v863, 0.0
    %v973 = vmax.f32 %v864, 0.0
    %v974 = vmax.f32 %v865, 0.0
    %v975 = vmax.f32 %v866, 0.0
    %v976 = vmax.f32 %v867, 0.0
    %v977 = vmax.f32 %v868, 0.0
    %v978 = vmax.f32 %v869, 0.0
    %v979 = vmax.f32 %v870, 0.0
    %v980 = vmax.f32 %v871, 0.0
    %v981 = vmax.f32 %v872, 0.0
    %v982 = vmax.f32 %v873, 0.0
    %v983 = vmax.f32 %v874, 0.0
    %v984 = vmax.f32 %v875, 0.0
    %v985 = vmax.f32 %v876, 0.0
    %v986 = vmax.f32 %v877, 0.0
    %v987 = vmax.f32 %v878, 0.0
    %v988 = vmax.f32 %v879, 0.0
    %v989 = vmax.f32 %v880, 0.0
    %v990 = vmax.f32 %v881, 0.0
    %v991 = vmax.f32 %v882, 0.0
    %v992 = vmax.f32 %v883, 0.0
    %v993 = vmax.f32 %v884, 0.0
    %v994 = vmax.f32 %v885, 0.0
    %v995 = vmax.f32 %v886, 0.0
    %v996 = vmax.f32 %v887, 0.0
    %v997 = vmax.f32 %v888, 0.0
    %v998 = vmax.f32 %v889, 0.0
    %v999 = vmax.f32 %v890, 0.0
    %v1000 = vmax.f32 %v891, 0.0
    %v1001 = vmax.f32 %v892, 0.0
    %v1002 = vmax.f32 %v893, 0.0
    %v1003 = vmax.f32 %v894, 0.0
    %v1004 = vmax.f32 %v895, 0.0
    %v1005 = vmax.f32 %v896, 0.0
    %v1006 = vmax.f32 %v897, 0.0
    %v1007 = vmax.f32 %v898, 0.0
    %v1008 = vmax.f32 %v899, 0.0
    %v1009 = vmax.f32 %v900, 0.0
    %v1010 = vmax.f32 %v901, 0.0
    %v1011 = vmax.f32 %v902, 0.0
    %v1012 = vmax.f32 %v903, 0.0
    %v1013 = vmax.f32 %v904, 0.0
    %v1014 = vmax.f32 %v905, 0.0
    %v1015 = vmax.f32 %v906, 0.0
    %v1016 = vmax.f32 %v907, 0.0
    %v1017 = vmax.f32 %v908, 0.0
    %v1018 = vmax.f32 %v909, 0.0
    %v1019 = vmax.f32 %v910, 0.0
    %v1020 = vmax.f32 %v911, 0.0
    %v1021 = vmax.f32 %v912, 0.0
    %v1022 = vmax.f32 %v913, 0.0
    %v1023 = vmax.f32 %v914, 0.0
    %v1024 = vmax.f32 %v915, 0.0
    %v1025 = vmax.f32 %v916, 0.0
    %v1026 = vmax.f32 %v917, 0.0
    %v1027 = vmax.f32 %v918, 0.0
    %v1028 = vmax.f32 %v919, 0.0
    %v1029 = vmax.f32 %v920, 0.0
    %v1030 = vmax.f32 %v921, 0.0
    %v1031 = vmax.f32 %v922, 0.0
    %v1032 = vmax.f32 %v923, 0.0
    %v1033 = vmax.f32 %v924, 0.0
    %v1034 = vmax.f32 %v925, 0.0
    %v1035 = vmax.f32 %v926, 0.0
    %v1036 = vmax.f32 %v927, 0.0
    %v1037 = vmax.f32 %v928, 0.0
    %v1038 = vmax.f32 %v929, 0.0
    %v1039 = vmax.f32 %v930, 0.0
    %v1040 = vmax.f32 %v931, 0.0
    %v1041 = vmax.f32 %v932, 0.0
    %v1042 = vmax.f32 %v933, 0.0
    %v1043 = vmax.f32 %v934, 0.0
    %v1044 = vmax.f32 %v935, 0.0
    %v1045 = vmax.f32 %v936, 0.0
    %v1046 = vmax.f32 %v937, 0.0
    %v1047 = vmax.f32 %v938, 0.0
    %v1048 = vmax.f32 %v939, 0.0
    %v1049 = vmax.f32 %v940, 0.0
    %v1050 = vmax.f32 %v941, 0.0
    %v1051 = vmax.f32 %v942, 0.0
    %v1052 = vmax.f32 %v943, 0.0
    %v1053 = vmax.f32 %v944, 0.0
    %v1054 = vmax.f32 %v945, 0.0
    %v1055 = vmax.f32 %v946, 0.0
    %v1056 = vmax.f32 %v947, 0.0
    %v1057 = vmax.f32 %v948, 0.0
    %v1058 = vmax.f32 %v949, 0.0
    %v1059 = vmax.f32 %v951, %v978
    %v1060 = vmax.f32 %v952, %v979
    %v1061 = vmax.f32 %v953, %v980
    %v1062 = vmax.f32 %v954, %v981
    %v1063 = vmax.f32 %v955, %v982
    %v1064 = vmax.f32 %v956, %v983
    %v1065 = vmax.f32 %v957, %v984
    %v1066 = vmax.f32 %v958, %v985
    %v1067 = vmax.f32 %v959, %v986
    %v1068 = vmax.f32 %v960, %v987
    %v1069 = vmax.f32 %v961, %v988
    %v1070 = vmax.f32 %v962, %v989
    %v1071 = vmax.f32 %v963, %v990
    %v1072 = vmax.f32 %v964, %v991
    %v1073 = vmax.f32 %v965, %v992
    %v1074 = vmax.f32 %v966, %v993
    %v1075 = vmax.f32 %v967, %v994
    %v1076 = vmax.f32 %v968, %v995
    %v1077 = vmax.f32 %v969, %v996
    %v1078 = vmax.f32 %v970, %v997
    %v1079 = vmax.f32 %v971, %v998
    %v1080 = vmax.f32 %v972, %v999
    %v1081 = vmax.f32 %v973, %v1000
    %v1082 = vmax.f32 %v974, %v1001
    %v1083 = vmax.f32 %v975, %v1002
    %v1084 = vmax.f32 %v976, %v1003
    %v1085 = vmax.f32 %v977, %v1004
    %v1086 = vmax.f32 %v1005, %v1032
    %v1087 = vmax.f32 %v1006, %v1033
    %v1088 = vmax.f32 %v1007, %v1034
    %v1089 = vmax.f32 %v1008, %v1035
    %v1090 = vmax.f32 %v1009, %v1036
    %v1091 = vmax.f32 %v1010, %v1037
    %v1092 = vmax.f32 %v1011, %v1038
    %v1093 = vmax.f32 %v1012, %v1039
    %v1094 = vmax.f32 %v1013, %v1040
    %v1095 = vmax.f32 %v1014, %v1041
    %v1096 = vmax.f32 %v1015, %v1042
    %v1097 = vmax.f32 %v1016, %v1043
    %v1098 = vmax.f32 %v1017, %v1044
    %v1099 = vmax.f32 %v1018, %v1045
    %v1100 = vmax.f32 %v1019, %v1046
    %v1101 = vmax.f32 %v1020, %v1047
    %v1102 = vmax.f32 %v1021, %v1048
    %v1103 = vmax.f32 %v1022, %v1049
    %v1104 = vmax.f32 %v1023, %v1050
    %v1105 = vmax.f32 %v1024, %v1051
    %v1106 = vmax.f32 %v1025, %v1052
    %v1107 = vmax.f32 %v1026, %v1053
    %v1108 = vmax.f32 %v1027, %v1054
    %v1109 = vmax.f32 %v1028, %v1055
    %v1110 = vmax.f32 %v1029, %v1056
    %v1111 = vmax.f32 %v1030, %v1057
    %v1112 = vmax.f32 %v1031, %v1058
    %v1113 = vmax.f32 %v950, %v1059
    %v1114 = vmax.f32 %v950, %v1086
    %v1115 = vmax.f32 %v1060, %v1061
    %v1116 = vmax.f32 %v1087, %v1088
    %v1117 = vmax.f32 %v1062, %v1063
    %v1118 = vmax.f32 %v1089, %v1090
    %v1119 = vmax.f32 %v1064, %v1065
    %v1120 = vmax.f32 %v1091, %v1092
    %v1121 = vmax.f32 %v1066, %v1067
    %v1122 = vmax.f32 %v1093, %v1094
    %v1123 = vmax.f32 %v1068, %v1069
    %v1124 = vmax.f32 %v1095, %v1096
    %v1125 = vmax.f32 %v1070, %v1071
    %v1126 = vmax.f32 %v1097, %v1098
    %v1127 = vmax.f32 %v1072, %v1073
    %v1128 = vmax.f32 %v1099, %v1100
    %v1129 = vmax.f32 %v1074, %v1075
    %v1130 = vmax.f32 %v1101, %v1102
    %v1131 = vmax.f32 %v1076, %v1077
    %v1132 = vmax.f32 %v1103, %v1104
    %v1133 = vmax.f32 %v1078, %v1079
    %v1134 = vmax.f32 %v1105, %v1106
    %v1135 = vmax.f32 %v1080, %v1081
    %v1136 = vmax.f32 %v1107, %v1108
    %v1137 = vmax.f32 %v1082, %v1083
    %v1138 = vmax.f32 %v1109, %v1110
    %v1139 = vmax.f32 %v1084, %v1085
    %v1140 = vmax.f32 %v1111, %v1112
    %v1141 = vpack.c.bf16 0.0, 0.0
    %v1142 = vpack.c.bf16 %v1113, 0.0
    %v1143 = vpack.c.bf16 %v1117, %v1115
    %v1144 = vpack.c.bf16 %v1121, %v1119
    %v1145 = vpack.c.bf16 %v1125, %v1123
    %v1146 = vpack.c.bf16 %v1129, %v1127
    %v1147 = vpack.c.bf16 %v1133, %v1131
    %v1148 = vpack.c.bf16 %v1137, %v1135
    %v1149 = vpack.c.bf16 %v1114, 0.0
    %v1150 = vpack.c.bf16 %v1118, %v1116
    %v1151 = vpack.c.bf16 %v1122, %v1120
    %v1152 = vpack.c.bf16 %v1126, %v1124
    %v1153 = vpack.c.bf16 %v1130, %v1128
    %v1154 = vpack.c.bf16 %v1134, %v1132
    %v1155 = vpack.c.bf16 %v1138, %v1136
    %v1156 = vld [vmem:[%s3] sm:$0xf]
    %v1157 = vld [vmem:[%s3 + $0x4] sm:$0xf]
    %v1158 = vld [vmem:[%s3 + $0x8] sm:$0xf]
    %v1159 = vld [vmem:[%s3 + $0xc] sm:$0xf]
    %v1160 = vld [vmem:[%s3 + $0x10] sm:$0xf]
    %v1161 = vld [vmem:[%s3 + $0x14] sm:$0xf]
    %v1162 = vld [vmem:[%s3 + $0x18] sm:$0xf]
    %v1163 = vld [vmem:[%s3 + $0x1c] sm:$0xf]
    %v1164 = vpack.c.bf16 %v1115, %v1113
    %v1165 = vpack.c.bf16 %v1119, %v1117
    %v1166 = vpack.c.bf16 %v1123, %v1121
    %v1167 = vpack.c.bf16 %v1127, %v1125
    %v1168 = vpack.c.bf16 %v1131, %v1129
    %v1169 = vpack.c.bf16 %v1135, %v1133
    %v1170 = vpack.c.bf16 %v1139, %v1137
    %v1171 = vpack.c.bf16 %v1116, %v1114
    %v1172 = vpack.c.bf16 %v1120, %v1118
    %v1173 = vpack.c.bf16 %v1124, %v1122
    %v1174 = vpack.c.bf16 %v1128, %v1126
    %v1175 = vpack.c.bf16 %v1132, %v1130
    %v1176 = vpack.c.bf16 %v1136, %v1134
    %v1177 = vpack.c.bf16 %v1140, %v1138
    %s1178 = scalar_lea.vmem %s3, 32
    %v1179 = vld [vmem:[%s1178] sm:$0xf]
    %v1180 = vld [vmem:[%s1178 + $0x4] sm:$0xf]
    %v1181 = vld [vmem:[%s1178 + $0x8] sm:$0xf]
    %v1182 = vld [vmem:[%s1178 + $0xc] sm:$0xf]
    %v1183 = vld [vmem:[%s1178 + $0x10] sm:$0xf]
    %v1184 = vld [vmem:[%s1178 + $0x14] sm:$0xf]
    %v1185 = vld [vmem:[%s1178 + $0x18] sm:$0xf]
    %v1186 = vld [vmem:[%s1178 + $0x1c] sm:$0xf]
    %v1195 = vunpack.c.l.b16 %v1179
    %v1196 = vunpack.c.l.b16 %v1180
    %v1197 = vunpack.c.l.b16 %v1181
    %v1198 = vunpack.c.l.b16 %v1182
    %v1199 = vunpack.c.l.b16 %v1183
    %v1200 = vunpack.c.l.b16 %v1184
    %v1201 = vunpack.c.l.b16 %v1185
    %v1202 = vunpack.c.l.b16 %v1186
    %v1203 = vpack.c.b16 %v1196, %v1195
    %v1204 = vpack.c.b16 %v1198, %v1197
    %v1205 = vpack.c.b16 %v1200, %v1199
    %v1206 = vpack.c.b16 %v1202, %v1201
    %vm1211 = vcmask 523264
    %v1213 = vsel %vm1211, %v1141, 0
    %v1216 = vsel %vm1211, %v1164, 0
    %v1219 = vsel %vm1211, %v1165, 0
    %v1222 = vsel %vm1211, %v1166, 0
    %v1225 = vsel %vm1211, %v1167, 0
    %v1228 = vsel %vm1211, %v1168, 0
    %v1231 = vsel %vm1211, %v1169, 0
    %v1234 = vsel %vm1211, %v1170, 0
    %v1237 = vsel %vm1211, %v1171, 0
    %v1240 = vsel %vm1211, %v1172, 0
    %v1243 = vsel %vm1211, %v1173, 0
    %v1246 = vsel %vm1211, %v1174, 0
    %v1249 = vsel %vm1211, %v1175, 0
    %v1252 = vsel %vm1211, %v1176, 0
    %v1255 = vsel %vm1211, %v1177, 0
    %1257 = vmatprep.subr.bf16.mxu0 0
    %1258 = vmatpush1.bf16.msra.mxu0 0
    %1259 = vmatprep.subr.bf16.mxu0 0
    %1260 = vmatpush1.bf16.msra.mxu0 0
    %1261 = vmatprep.subr.bf16.mxu0 0
    %1262 = vmatpush1.bf16.msra.mxu0 0
    %1263 = vmatprep.subr.bf16.mxu0 0
    %1264 = vmatpush1.bf16.msra.mxu0 0
    %1265 = vmatprep.subr.bf16.mxu0 0
    %1266 = vmatpush1.bf16.msra.mxu0 %v1206
    %1267 = vmatprep.subr.bf16.mxu0 0
    %1268 = vmatpush1.bf16.msra.mxu0 %v1205
    %1269 = vmatprep.subr.bf16.mxu0 0
    %1270 = vmatpush1.bf16.msra.mxu0 %v1204
    %1271 = vmatprep.subr.bf16.mxu0 0
    %1272 = vmatpush1.bf16.msra.mxu0 %v1203
    %1273 = vmatprep.subr.bf16.mxu0 0
    %1274 = vmatpush2.bf16.msra.mxu0 0
    %1275 = vmatprep.subr.bf16.mxu0 0
    %1276 = vmatpush2.bf16.msra.mxu0 0
    %1277 = vmatprep.subr.bf16.mxu0 0
    %1278 = vmatpush2.bf16.msra.mxu0 0
    %1279 = vmatprep.subr.bf16.mxu0 0
    %1280 = vmatpush2.bf16.msra.mxu0 0
    %1281 = vmatprep.subr.bf16.mxu0 0
    %1282 = vmatpush2.bf16.msra.mxu0 0
    %1283 = vmatprep.subr.bf16.mxu0 0
    %1284 = vmatpush2.bf16.msra.mxu0 0
    %1285 = vmatprep.subr.bf16.mxu0 0
    %1286 = vmatpush2.bf16.msra.mxu0 0
    %1287 = vmatprep.subr.bf16.mxu0 0
    %1288 = vmatpush2.bf16.msra.mxu0 0
    %1289 = vmatprep.mubr.bf16.mxu0 0
    %1290 = vmatmul.mubr.bf16.gmra.mxu0 %v1213
    %v1291 = vpop.f32.mrf.mxu0
    %v1292 = vadd.f32 0.0, %v1291
    %v1293 = vpop.f32.mrf.mxu0
    %v1294 = vpop.f32.mrf.mxu0
    %v1295 = vadd.f32 0.0, %v1294
    %v1296 = vpop.f32.mrf.mxu0
    %1297 = vmatprep.mubr.bf16.mxu0 0
    %1298 = vmatmul.mubr.bf16.gmra.mxu0 %v1213
    %v1299 = vpop.f32.mrf.mxu0
    %v1300 = vadd.f32 0.0, %v1299
    %v1301 = vpop.f32.mrf.mxu0
    %v1302 = vpop.f32.mrf.mxu0
    %v1303 = vadd.f32 0.0, %v1302
    %v1304 = vpop.f32.mrf.mxu0
    %1305 = vmatprep.mubr.bf16.mxu0 0
    %1306 = vmatmul.mubr.bf16.gmra.mxu0 %v1213
    %v1307 = vpop.f32.mrf.mxu0
    %v1308 = vadd.f32 0.0, %v1307
    %v1309 = vpop.f32.mrf.mxu0
    %v1310 = vpop.f32.mrf.mxu0
    %v1311 = vadd.f32 0.0, %v1310
    %v1312 = vpop.f32.mrf.mxu0
    %1313 = vmatprep.mubr.bf16.mxu0 0
    %1314 = vmatmul.mubr.bf16.gmra.mxu0 %v1213
    %v1315 = vpop.f32.mrf.mxu0
    %v1316 = vadd.f32 0.0, %v1315
    %v1317 = vpop.f32.mrf.mxu0
    %v1318 = vpop.f32.mrf.mxu0
    %v1319 = vadd.f32 0.0, %v1318
    %v1320 = vpop.f32.mrf.mxu0
    %1321 = vmatprep.mubr.bf16.mxu0 0
    %1322 = vmatmul.mubr.bf16.gmra.mxu0 %v1213
    %v1323 = vpop.f32.mrf.mxu0
    %v1324 = vadd.f32 0.0, %v1323
    %v1325 = vpop.f32.mrf.mxu0
    %v1326 = vpop.f32.mrf.mxu0
    %v1327 = vadd.f32 0.0, %v1326
    %v1328 = vpop.f32.mrf.mxu0
    %1329 = vmatprep.mubr.bf16.mxu0 0
    %1330 = vmatmul.mubr.bf16.gmra.mxu0 %v1213
    %v1331 = vpop.f32.mrf.mxu0
    %v1332 = vadd.f32 0.0, %v1331
    %v1333 = vpop.f32.mrf.mxu0
    %v1334 = vpop.f32.mrf.mxu0
    %v1335 = vadd.f32 0.0, %v1334
    %v1336 = vpop.f32.mrf.mxu0
    %1337 = vmatprep.mubr.bf16.mxu0 0
    %1338 = vmatmul.mubr.bf16.gmra.mxu0 %v1213
    %v1339 = vpop.f32.mrf.mxu0
    %v1340 = vadd.f32 0.0, %v1339
    %v1341 = vpop.f32.mrf.mxu0
    %v1342 = vpop.f32.mrf.mxu0
    %v1343 = vadd.f32 0.0, %v1342
    %v1344 = vpop.f32.mrf.mxu0
    %1345 = vmatprep.mubr.bf16.mxu0 0
    %1346 = vmatmul.mubr.bf16.gmra.mxu0 %v1216
    %v1347 = vpop.f32.mrf.mxu0
    %v1348 = vadd.f32 0.0, %v1347
    %v1349 = vpop.f32.mrf.mxu0
    %v1350 = vpop.f32.mrf.mxu0
    %v1351 = vadd.f32 0.0, %v1350
    %v1352 = vpop.f32.mrf.mxu0
    %1353 = vmatprep.mubr.bf16.mxu0 0
    %1354 = vmatmul.mubr.bf16.gmra.mxu0 %v1219
    %v1355 = vpop.f32.mrf.mxu0
    %v1356 = vadd.f32 0.0, %v1355
    %v1357 = vpop.f32.mrf.mxu0
    %v1358 = vpop.f32.mrf.mxu0
    %v1359 = vadd.f32 0.0, %v1358
    %v1360 = vpop.f32.mrf.mxu0
    %1361 = vmatprep.mubr.bf16.mxu0 0
    %1362 = vmatmul.mubr.bf16.gmra.mxu0 %v1222
    %v1363 = vpop.f32.mrf.mxu0
    %v1364 = vadd.f32 0.0, %v1363
    %v1365 = vpop.f32.mrf.mxu0
    %v1366 = vpop.f32.mrf.mxu0
    %v1367 = vadd.f32 0.0, %v1366
    %v1368 = vpop.f32.mrf.mxu0
    %1369 = vmatprep.mubr.bf16.mxu0 0
    %1370 = vmatmul.mubr.bf16.gmra.mxu0 %v1225
    %v1371 = vpop.f32.mrf.mxu0
    %v1372 = vadd.f32 0.0, %v1371
    %v1373 = vpop.f32.mrf.mxu0
    %v1374 = vpop.f32.mrf.mxu0
    %v1375 = vadd.f32 0.0, %v1374
    %v1376 = vpop.f32.mrf.mxu0
    %1377 = vmatprep.mubr.bf16.mxu0 0
    %1378 = vmatmul.mubr.bf16.gmra.mxu0 %v1228
    %v1379 = vpop.f32.mrf.mxu0
    %v1380 = vadd.f32 0.0, %v1379
    %v1381 = vpop.f32.mrf.mxu0
    %v1382 = vpop.f32.mrf.mxu0
    %v1383 = vadd.f32 0.0, %v1382
    %v1384 = vpop.f32.mrf.mxu0
    %1385 = vmatprep.mubr.bf16.mxu0 0
    %1386 = vmatmul.mubr.bf16.gmra.mxu0 %v1231
    %v1387 = vpop.f32.mrf.mxu0
    %v1388 = vadd.f32 0.0, %v1387
    %v1389 = vpop.f32.mrf.mxu0
    %v1390 = vpop.f32.mrf.mxu0
    %v1391 = vadd.f32 0.0, %v1390
    %v1392 = vpop.f32.mrf.mxu0
    %1393 = vmatprep.mubr.bf16.mxu0 0
    %1394 = vmatmul.mubr.bf16.gmra.mxu0 %v1234
    %v1395 = vpop.f32.mrf.mxu0
    %v1396 = vadd.f32 0.0, %v1395
    %v1397 = vpop.f32.mrf.mxu0
    %v1398 = vpop.f32.mrf.mxu0
    %v1399 = vadd.f32 0.0, %v1398
    %v1400 = vpop.f32.mrf.mxu0
    %1401 = vmatprep.mubr.bf16.mxu0 0
    %1402 = vmatmul.mubr.bf16.gmra.mxu0 %v1237
    %v1403 = vpop.f32.mrf.mxu0
    %v1404 = vadd.f32 0.0, %v1403
    %v1405 = vpop.f32.mrf.mxu0
    %v1406 = vpop.f32.mrf.mxu0
    %v1407 = vadd.f32 0.0, %v1406
    %v1408 = vpop.f32.mrf.mxu0
    %1409 = vmatprep.mubr.bf16.mxu0 0
    %1410 = vmatmul.mubr.bf16.gmra.mxu0 %v1240
    %v1411 = vpop.f32.mrf.mxu0
    %v1412 = vadd.f32 0.0, %v1411
    %v1413 = vpop.f32.mrf.mxu0
    %v1414 = vpop.f32.mrf.mxu0
    %v1415 = vadd.f32 0.0, %v1414
    %v1416 = vpop.f32.mrf.mxu0
    %1417 = vmatprep.mubr.bf16.mxu0 0
    %1418 = vmatmul.mubr.bf16.gmra.mxu0 %v1243
    %v1419 = vpop.f32.mrf.mxu0
    %v1420 = vadd.f32 0.0, %v1419
    %v1421 = vpop.f32.mrf.mxu0
    %v1422 = vpop.f32.mrf.mxu0
    %v1423 = vadd.f32 0.0, %v1422
    %v1424 = vpop.f32.mrf.mxu0
    %1425 = vmatprep.mubr.bf16.mxu0 0
    %1426 = vmatmul.mubr.bf16.gmra.mxu0 %v1246
    %v1427 = vpop.f32.mrf.mxu0
    %v1428 = vadd.f32 0.0, %v1427
    %v1429 = vpop.f32.mrf.mxu0
    %v1430 = vpop.f32.mrf.mxu0
    %v1431 = vadd.f32 0.0, %v1430
    %v1432 = vpop.f32.mrf.mxu0
    %1433 = vmatprep.mubr.bf16.mxu0 0
    %1434 = vmatmul.mubr.bf16.gmra.mxu0 %v1249
    %v1435 = vpop.f32.mrf.mxu0
    %v1436 = vadd.f32 0.0, %v1435
    %v1437 = vpop.f32.mrf.mxu0
    %v1438 = vpop.f32.mrf.mxu0
    %v1439 = vadd.f32 0.0, %v1438
    %v1440 = vpop.f32.mrf.mxu0
    %1441 = vmatprep.mubr.bf16.mxu0 0
    %1442 = vmatmul.mubr.bf16.gmra.mxu0 %v1252
    %v1443 = vpop.f32.mrf.mxu0
    %v1444 = vadd.f32 0.0, %v1443
    %v1445 = vpop.f32.mrf.mxu0
    %v1446 = vpop.f32.mrf.mxu0
    %v1447 = vadd.f32 0.0, %v1446
    %v1448 = vpop.f32.mrf.mxu0
    %1449 = vmatprep.mubr.bf16.mxu0 0
    %1450 = vmatmul.mubr.bf16.gmra.mxu0 %v1255
    %v1451 = vpop.f32.mrf.mxu0
    %v1452 = vadd.f32 0.0, %v1451
    %v1453 = vpop.f32.mrf.mxu0
    %v1454 = vpop.f32.mrf.mxu0
    %v1455 = vadd.f32 0.0, %v1454
    %v1456 = vpop.f32.mrf.mxu0
    %1457 = vmatprep.mubr.bf16.mxu0 0
    %1458 = vmatmul.mubr.bf16.gmra.mxu0 %v1213
    %v1459 = vpop.f32.mrf.mxu0
    %v1460 = vadd.f32 0.0, %v1459
    %v1461 = vpop.f32.mrf.mxu0
    %v1462 = vpop.f32.mrf.mxu0
    %v1463 = vadd.f32 0.0, %v1462
    %v1464 = vpop.f32.mrf.mxu0
    %1465 = vmatprep.mubr.bf16.mxu0 0
    %1466 = vmatmul.mubr.bf16.gmra.mxu0 %v1213
    %v1467 = vpop.f32.mrf.mxu0
    %v1468 = vadd.f32 0.0, %v1467
    %v1469 = vpop.f32.mrf.mxu0
    %v1470 = vpop.f32.mrf.mxu0
    %v1471 = vadd.f32 0.0, %v1470
    %v1472 = vpop.f32.mrf.mxu0
    %1473 = vmatprep.mubr.bf16.mxu0 0
    %1474 = vmatmul.mubr.bf16.gmra.mxu0 %v1213
    %v1475 = vpop.f32.mrf.mxu0
    %v1476 = vadd.f32 0.0, %v1475
    %v1477 = vpop.f32.mrf.mxu0
    %v1478 = vpop.f32.mrf.mxu0
    %v1479 = vadd.f32 0.0, %v1478
    %v1480 = vpop.f32.mrf.mxu0
    %1481 = vmatprep.mubr.bf16.mxu0 0
    %1482 = vmatmul.mubr.bf16.gmra.mxu0 %v1213
    %v1483 = vpop.f32.mrf.mxu0
    %v1484 = vadd.f32 0.0, %v1483
    %v1485 = vpop.f32.mrf.mxu0
    %v1486 = vpop.f32.mrf.mxu0
    %v1487 = vadd.f32 0.0, %v1486
    %v1488 = vpop.f32.mrf.mxu0
    %1489 = vmatprep.mubr.bf16.mxu0 0
    %1490 = vmatmul.mubr.bf16.gmra.mxu0 %v1213
    %v1491 = vpop.f32.mrf.mxu0
    %v1492 = vadd.f32 0.0, %v1491
    %v1493 = vpop.f32.mrf.mxu0
    %v1494 = vpop.f32.mrf.mxu0
    %v1495 = vadd.f32 0.0, %v1494
    %v1496 = vpop.f32.mrf.mxu0
    %1497 = vmatprep.mubr.bf16.mxu0 0
    %1498 = vmatmul.mubr.bf16.gmra.mxu0 %v1213
    %v1499 = vpop.f32.mrf.mxu0
    %v1500 = vadd.f32 0.0, %v1499
    %v1501 = vpop.f32.mrf.mxu0
    %v1502 = vpop.f32.mrf.mxu0
    %v1503 = vadd.f32 0.0, %v1502
    %v1504 = vpop.f32.mrf.mxu0
    %1505 = vmatprep.mubr.bf16.mxu0 0
    %1506 = vmatmul.mubr.bf16.gmra.mxu0 %v1213
    %v1507 = vpop.f32.mrf.mxu0
    %v1508 = vadd.f32 0.0, %v1507
    %v1509 = vpop.f32.mrf.mxu0
    %v1510 = vpop.f32.mrf.mxu0
    %v1511 = vadd.f32 0.0, %v1510
    %v1512 = vpop.f32.mrf.mxu0
    %1513 = vdwg.mxu0
    %v1522 = vunpack.c.l.b16 %v1156
    %v1523 = vunpack.c.l.b16 %v1157
    %v1524 = vunpack.c.l.b16 %v1158
    %v1525 = vunpack.c.l.b16 %v1159
    %v1526 = vunpack.c.l.b16 %v1160
    %v1527 = vunpack.c.l.b16 %v1161
    %v1528 = vunpack.c.l.b16 %v1162
    %v1529 = vunpack.c.l.b16 %v1163
    %v1530 = vpack.c.b16 %v1523, %v1522
    %v1531 = vpack.c.b16 %v1525, %v1524
    %v1532 = vpack.c.b16 %v1527, %v1526
    %v1533 = vpack.c.b16 %v1529, %v1528
    %v1539 = vsel %vm1211, %v1142, 0
    %v1542 = vsel %vm1211, %v1143, 0
    %v1545 = vsel %vm1211, %v1144, 0
    %v1548 = vsel %vm1211, %v1145, 0
    %v1551 = vsel %vm1211, %v1146, 0
    %v1554 = vsel %vm1211, %v1147, 0
    %v1557 = vsel %vm1211, %v1148, 0
    %v1560 = vsel %vm1211, %v1149, 0
    %v1563 = vsel %vm1211, %v1150, 0
    %v1566 = vsel %vm1211, %v1151, 0
    %v1569 = vsel %vm1211, %v1152, 0
    %v1572 = vsel %vm1211, %v1153, 0
    %v1575 = vsel %vm1211, %v1154, 0
    %v1578 = vsel %vm1211, %v1155, 0
    %1580 = vmatprep.subr.bf16.mxu0 0
    %1581 = vmatpush1.bf16.msra.mxu0 0
    %1582 = vmatprep.subr.bf16.mxu0 0
    %1583 = vmatpush1.bf16.msra.mxu0 0
    %1584 = vmatprep.subr.bf16.mxu0 0
    %1585 = vmatpush1.bf16.msra.mxu0 0
    %1586 = vmatprep.subr.bf16.mxu0 0
    %1587 = vmatpush1.bf16.msra.mxu0 0
    %1588 = vmatprep.subr.bf16.mxu0 0
    %1589 = vmatpush1.bf16.msra.mxu0 %v1533
    %1590 = vmatprep.subr.bf16.mxu0 0
    %1591 = vmatpush1.bf16.msra.mxu0 %v1532
    %1592 = vmatprep.subr.bf16.mxu0 0
    %1593 = vmatpush1.bf16.msra.mxu0 %v1531
    %1594 = vmatprep.subr.bf16.mxu0 0
    %1595 = vmatpush1.bf16.msra.mxu0 %v1530
    %1596 = vmatprep.subr.bf16.mxu0 0
    %1597 = vmatpush2.bf16.msra.mxu0 0
    %1598 = vmatprep.subr.bf16.mxu0 0
    %1599 = vmatpush2.bf16.msra.mxu0 0
    %1600 = vmatprep.subr.bf16.mxu0 0
    %1601 = vmatpush2.bf16.msra.mxu0 0
    %1602 = vmatprep.subr.bf16.mxu0 0
    %1603 = vmatpush2.bf16.msra.mxu0 0
    %1604 = vmatprep.subr.bf16.mxu0 0
    %1605 = vmatpush2.bf16.msra.mxu0 0
    %1606 = vmatprep.subr.bf16.mxu0 0
    %1607 = vmatpush2.bf16.msra.mxu0 0
    %1608 = vmatprep.subr.bf16.mxu0 0
    %1609 = vmatpush2.bf16.msra.mxu0 0
    %1610 = vmatprep.subr.bf16.mxu0 0
    %1611 = vmatpush2.bf16.msra.mxu0 0
    %1612 = vmatprep.mubr.bf16.mxu0 0
    %1613 = vmatmul.mubr.bf16.gmra.mxu0 %v1213
    %v1614 = vpop.f32.mrf.mxu0
    %v1615 = vadd.f32 %v1292, %v1614
    %v1616 = vpop.f32.mrf.mxu0
    %v1617 = vpop.f32.mrf.mxu0
    %v1618 = vadd.f32 %v1295, %v1617
    %v1619 = vpop.f32.mrf.mxu0
    %1620 = vmatprep.mubr.bf16.mxu0 0
    %1621 = vmatmul.mubr.bf16.gmra.mxu0 %v1213
    %v1622 = vpop.f32.mrf.mxu0
    %v1623 = vadd.f32 %v1300, %v1622
    %v1624 = vpop.f32.mrf.mxu0
    %v1625 = vpop.f32.mrf.mxu0
    %v1626 = vadd.f32 %v1303, %v1625
    %v1627 = vpop.f32.mrf.mxu0
    %1628 = vmatprep.mubr.bf16.mxu0 0
    %1629 = vmatmul.mubr.bf16.gmra.mxu0 %v1213
    %v1630 = vpop.f32.mrf.mxu0
    %v1631 = vadd.f32 %v1308, %v1630
    %v1632 = vpop.f32.mrf.mxu0
    %v1633 = vpop.f32.mrf.mxu0
    %v1634 = vadd.f32 %v1311, %v1633
    %v1635 = vpop.f32.mrf.mxu0
    %1636 = vmatprep.mubr.bf16.mxu0 0
    %1637 = vmatmul.mubr.bf16.gmra.mxu0 %v1213
    %v1638 = vpop.f32.mrf.mxu0
    %v1639 = vadd.f32 %v1316, %v1638
    %v1640 = vpop.f32.mrf.mxu0
    %v1641 = vpop.f32.mrf.mxu0
    %v1642 = vadd.f32 %v1319, %v1641
    %v1643 = vpop.f32.mrf.mxu0
    %1644 = vmatprep.mubr.bf16.mxu0 0
    %1645 = vmatmul.mubr.bf16.gmra.mxu0 %v1213
    %v1646 = vpop.f32.mrf.mxu0
    %v1647 = vadd.f32 %v1324, %v1646
    %v1648 = vpop.f32.mrf.mxu0
    %v1649 = vpop.f32.mrf.mxu0
    %v1650 = vadd.f32 %v1327, %v1649
    %v1651 = vpop.f32.mrf.mxu0
    %1652 = vmatprep.mubr.bf16.mxu0 0
    %1653 = vmatmul.mubr.bf16.gmra.mxu0 %v1213
    %v1654 = vpop.f32.mrf.mxu0
    %v1655 = vadd.f32 %v1332, %v1654
    %v1656 = vpop.f32.mrf.mxu0
    %v1657 = vpop.f32.mrf.mxu0
    %v1658 = vadd.f32 %v1335, %v1657
    %v1659 = vpop.f32.mrf.mxu0
    %1660 = vmatprep.mubr.bf16.mxu0 0
    %1661 = vmatmul.mubr.bf16.gmra.mxu0 %v1213
    %v1662 = vpop.f32.mrf.mxu0
    %v1663 = vadd.f32 %v1340, %v1662
    %v1664 = vpop.f32.mrf.mxu0
    %v1665 = vpop.f32.mrf.mxu0
    %v1666 = vadd.f32 %v1343, %v1665
    %v1667 = vpop.f32.mrf.mxu0
    %1668 = vmatprep.mubr.bf16.mxu0 0
    %1669 = vmatmul.mubr.bf16.gmra.mxu0 %v1539
    %v1670 = vpop.f32.mrf.mxu0
    %v1671 = vadd.f32 %v1348, %v1670
    %v1672 = vpop.f32.mrf.mxu0
    %v1673 = vpop.f32.mrf.mxu0
    %v1674 = vadd.f32 %v1351, %v1673
    %v1675 = vpop.f32.mrf.mxu0
    %1676 = vmatprep.mubr.bf16.mxu0 0
    %1677 = vmatmul.mubr.bf16.gmra.mxu0 %v1542
    %v1678 = vpop.f32.mrf.mxu0
    %v1679 = vadd.f32 %v1356, %v1678
    %v1680 = vpop.f32.mrf.mxu0
    %v1681 = vpop.f32.mrf.mxu0
    %v1682 = vadd.f32 %v1359, %v1681
    %v1683 = vpop.f32.mrf.mxu0
    %1684 = vmatprep.mubr.bf16.mxu0 0
    %1685 = vmatmul.mubr.bf16.gmra.mxu0 %v1545
    %v1686 = vpop.f32.mrf.mxu0
    %v1687 = vadd.f32 %v1364, %v1686
    %v1688 = vpop.f32.mrf.mxu0
    %v1689 = vpop.f32.mrf.mxu0
    %v1690 = vadd.f32 %v1367, %v1689
    %v1691 = vpop.f32.mrf.mxu0
    %1692 = vmatprep.mubr.bf16.mxu0 0
    %1693 = vmatmul.mubr.bf16.gmra.mxu0 %v1548
    %v1694 = vpop.f32.mrf.mxu0
    %v1695 = vadd.f32 %v1372, %v1694
    %v1696 = vpop.f32.mrf.mxu0
    %v1697 = vpop.f32.mrf.mxu0
    %v1698 = vadd.f32 %v1375, %v1697
    %v1699 = vpop.f32.mrf.mxu0
    %1700 = vmatprep.mubr.bf16.mxu0 0
    %1701 = vmatmul.mubr.bf16.gmra.mxu0 %v1551
    %v1702 = vpop.f32.mrf.mxu0
    %v1703 = vadd.f32 %v1380, %v1702
    %v1704 = vpop.f32.mrf.mxu0
    %v1705 = vpop.f32.mrf.mxu0
    %v1706 = vadd.f32 %v1383, %v1705
    %v1707 = vpop.f32.mrf.mxu0
    %1708 = vmatprep.mubr.bf16.mxu0 0
    %1709 = vmatmul.mubr.bf16.gmra.mxu0 %v1554
    %v1710 = vpop.f32.mrf.mxu0
    %v1711 = vadd.f32 %v1388, %v1710
    %v1712 = vpop.f32.mrf.mxu0
    %v1713 = vpop.f32.mrf.mxu0
    %v1714 = vadd.f32 %v1391, %v1713
    %v1715 = vpop.f32.mrf.mxu0
    %1716 = vmatprep.mubr.bf16.mxu0 0
    %1717 = vmatmul.mubr.bf16.gmra.mxu0 %v1557
    %v1718 = vpop.f32.mrf.mxu0
    %v1719 = vadd.f32 %v1396, %v1718
    %v1720 = vpop.f32.mrf.mxu0
    %v1721 = vpop.f32.mrf.mxu0
    %v1722 = vadd.f32 %v1399, %v1721
    %v1723 = vpop.f32.mrf.mxu0
    %1724 = vmatprep.mubr.bf16.mxu0 0
    %1725 = vmatmul.mubr.bf16.gmra.mxu0 %v1560
    %v1726 = vpop.f32.mrf.mxu0
    %v1727 = vadd.f32 %v1404, %v1726
    %v1728 = vpop.f32.mrf.mxu0
    %v1729 = vpop.f32.mrf.mxu0
    %v1730 = vadd.f32 %v1407, %v1729
    %v1731 = vpop.f32.mrf.mxu0
    %1732 = vmatprep.mubr.bf16.mxu0 0
    %1733 = vmatmul.mubr.bf16.gmra.mxu0 %v1563
    %v1734 = vpop.f32.mrf.mxu0
    %v1735 = vadd.f32 %v1412, %v1734
    %v1736 = vpop.f32.mrf.mxu0
    %v1737 = vpop.f32.mrf.mxu0
    %v1738 = vadd.f32 %v1415, %v1737
    %v1739 = vpop.f32.mrf.mxu0
    %1740 = vmatprep.mubr.bf16.mxu0 0
    %1741 = vmatmul.mubr.bf16.gmra.mxu0 %v1566
    %v1742 = vpop.f32.mrf.mxu0
    %v1743 = vadd.f32 %v1420, %v1742
    %v1744 = vpop.f32.mrf.mxu0
    %v1745 = vpop.f32.mrf.mxu0
    %v1746 = vadd.f32 %v1423, %v1745
    %v1747 = vpop.f32.mrf.mxu0
    %1748 = vmatprep.mubr.bf16.mxu0 0
    %1749 = vmatmul.mubr.bf16.gmra.mxu0 %v1569
    %v1750 = vpop.f32.mrf.mxu0
    %v1751 = vadd.f32 %v1428, %v1750
    %v1752 = vpop.f32.mrf.mxu0
    %v1753 = vpop.f32.mrf.mxu0
    %v1754 = vadd.f32 %v1431, %v1753
    %v1755 = vpop.f32.mrf.mxu0
    %1756 = vmatprep.mubr.bf16.mxu0 0
    %1757 = vmatmul.mubr.bf16.gmra.mxu0 %v1572
    %v1758 = vpop.f32.mrf.mxu0
    %v1759 = vadd.f32 %v1436, %v1758
    %v1760 = vpop.f32.mrf.mxu0
    %v1761 = vpop.f32.mrf.mxu0
    %v1762 = vadd.f32 %v1439, %v1761
    %v1763 = vpop.f32.mrf.mxu0
    %1764 = vmatprep.mubr.bf16.mxu0 0
    %1765 = vmatmul.mubr.bf16.gmra.mxu0 %v1575
    %v1766 = vpop.f32.mrf.mxu0
    %v1767 = vadd.f32 %v1444, %v1766
    %v1768 = vpop.f32.mrf.mxu0
    %v1769 = vpop.f32.mrf.mxu0
    %v1770 = vadd.f32 %v1447, %v1769
    %v1771 = vpop.f32.mrf.mxu0
    %1772 = vmatprep.mubr.bf16.mxu0 0
    %1773 = vmatmul.mubr.bf16.gmra.mxu0 %v1578
    %v1774 = vpop.f32.mrf.mxu0
    %v1775 = vadd.f32 %v1452, %v1774
    %v1776 = vpop.f32.mrf.mxu0
    %v1777 = vpop.f32.mrf.mxu0
    %v1778 = vadd.f32 %v1455, %v1777
    %v1779 = vpop.f32.mrf.mxu0
    %1780 = vmatprep.mubr.bf16.mxu0 0
    %1781 = vmatmul.mubr.bf16.gmra.mxu0 %v1213
    %v1782 = vpop.f32.mrf.mxu0
    %v1783 = vadd.f32 %v1460, %v1782
    %v1784 = vpop.f32.mrf.mxu0
    %v1785 = vpop.f32.mrf.mxu0
    %v1786 = vadd.f32 %v1463, %v1785
    %v1787 = vpop.f32.mrf.mxu0
    %1788 = vmatprep.mubr.bf16.mxu0 0
    %1789 = vmatmul.mubr.bf16.gmra.mxu0 %v1213
    %v1790 = vpop.f32.mrf.mxu0
    %v1791 = vadd.f32 %v1468, %v1790
    %v1792 = vpop.f32.mrf.mxu0
    %v1793 = vpop.f32.mrf.mxu0
    %v1794 = vadd.f32 %v1471, %v1793
    %v1795 = vpop.f32.mrf.mxu0
    %1796 = vmatprep.mubr.bf16.mxu0 0
    %1797 = vmatmul.mubr.bf16.gmra.mxu0 %v1213
    %v1798 = vpop.f32.mrf.mxu0
    %v1799 = vadd.f32 %v1476, %v1798
    %v1800 = vpop.f32.mrf.mxu0
    %v1801 = vpop.f32.mrf.mxu0
    %v1802 = vadd.f32 %v1479, %v1801
    %v1803 = vpop.f32.mrf.mxu0
    %1804 = vmatprep.mubr.bf16.mxu0 0
    %1805 = vmatmul.mubr.bf16.gmra.mxu0 %v1213
    %v1806 = vpop.f32.mrf.mxu0
    %v1807 = vadd.f32 %v1484, %v1806
    %v1808 = vpop.f32.mrf.mxu0
    %v1809 = vpop.f32.mrf.mxu0
    %v1810 = vadd.f32 %v1487, %v1809
    %v1811 = vpop.f32.mrf.mxu0
    %1812 = vmatprep.mubr.bf16.mxu0 0
    %1813 = vmatmul.mubr.bf16.gmra.mxu0 %v1213
    %v1814 = vpop.f32.mrf.mxu0
    %v1815 = vadd.f32 %v1492, %v1814
    %v1816 = vpop.f32.mrf.mxu0
    %v1817 = vpop.f32.mrf.mxu0
    %v1818 = vadd.f32 %v1495, %v1817
    %v1819 = vpop.f32.mrf.mxu0
    %1820 = vmatprep.mubr.bf16.mxu0 0
    %1821 = vmatmul.mubr.bf16.gmra.mxu0 %v1213
    %v1822 = vpop.f32.mrf.mxu0
    %v1823 = vadd.f32 %v1500, %v1822
    %v1824 = vpop.f32.mrf.mxu0
    %v1825 = vpop.f32.mrf.mxu0
    %v1826 = vadd.f32 %v1503, %v1825
    %v1827 = vpop.f32.mrf.mxu0
    %1828 = vmatprep.mubr.bf16.mxu0 0
    %1829 = vmatmul.mubr.bf16.gmra.mxu0 %v1213
    %v1830 = vpop.f32.mrf.mxu0
    %v1831 = vadd.f32 %v1508, %v1830
    %v1832 = vpop.f32.mrf.mxu0
    %v1833 = vpop.f32.mrf.mxu0
    %v1834 = vadd.f32 %v1511, %v1833
    %v1835 = vpop.f32.mrf.mxu0
    %1836 = vdwg.mxu0
    %v1837 = vpack.c.bf16 0.0, %v1139
    %v1838 = vpack.c.bf16 0.0, %v1140
    %s1839 = scalar_lea.vmem %s3, 64
    %v1840 = vld [vmem:[%s1839] sm:$0xf]
    %v1841 = vld [vmem:[%s1839 + $0x4] sm:$0xf]
    %v1842 = vld [vmem:[%s1839 + $0x8] sm:$0xf]
    %v1843 = vld [vmem:[%s1839 + $0xc] sm:$0xf]
    %v1844 = vld [vmem:[%s1839 + $0x10] sm:$0xf]
    %v1845 = vld [vmem:[%s1839 + $0x14] sm:$0xf]
    %v1846 = vld [vmem:[%s1839 + $0x18] sm:$0xf]
    %v1847 = vld [vmem:[%s1839 + $0x1c] sm:$0xf]
    %v1856 = vunpack.c.l.b16 %v1840
    %v1857 = vunpack.c.l.b16 %v1841
    %v1858 = vunpack.c.l.b16 %v1842
    %v1859 = vunpack.c.l.b16 %v1843
    %v1860 = vunpack.c.l.b16 %v1844
    %v1861 = vunpack.c.l.b16 %v1845
    %v1862 = vunpack.c.l.b16 %v1846
    %v1863 = vunpack.c.l.b16 %v1847
    %v1864 = vpack.c.b16 %v1857, %v1856
    %v1865 = vpack.c.b16 %v1859, %v1858
    %v1866 = vpack.c.b16 %v1861, %v1860
    %v1867 = vpack.c.b16 %v1863, %v1862
    %v1873 = vsel %vm1211, %v1837, 0
    %v1876 = vsel %vm1211, %v1838, 0
    %1878 = vmatprep.subr.bf16.mxu0 0
    %1879 = vmatpush1.bf16.msra.mxu0 0
    %1880 = vmatprep.subr.bf16.mxu0 0
    %1881 = vmatpush1.bf16.msra.mxu0 0
    %1882 = vmatprep.subr.bf16.mxu0 0
    %1883 = vmatpush1.bf16.msra.mxu0 0
    %1884 = vmatprep.subr.bf16.mxu0 0
    %1885 = vmatpush1.bf16.msra.mxu0 0
    %1886 = vmatprep.subr.bf16.mxu0 0
    %1887 = vmatpush1.bf16.msra.mxu0 %v1867
    %1888 = vmatprep.subr.bf16.mxu0 0
    %1889 = vmatpush1.bf16.msra.mxu0 %v1866
    %1890 = vmatprep.subr.bf16.mxu0 0
    %1891 = vmatpush1.bf16.msra.mxu0 %v1865
    %1892 = vmatprep.subr.bf16.mxu0 0
    %1893 = vmatpush1.bf16.msra.mxu0 %v1864
    %1894 = vmatprep.subr.bf16.mxu0 0
    %1895 = vmatpush2.bf16.msra.mxu0 0
    %1896 = vmatprep.subr.bf16.mxu0 0
    %1897 = vmatpush2.bf16.msra.mxu0 0
    %1898 = vmatprep.subr.bf16.mxu0 0
    %1899 = vmatpush2.bf16.msra.mxu0 0
    %1900 = vmatprep.subr.bf16.mxu0 0
    %1901 = vmatpush2.bf16.msra.mxu0 0
    %1902 = vmatprep.subr.bf16.mxu0 0
    %1903 = vmatpush2.bf16.msra.mxu0 0
    %1904 = vmatprep.subr.bf16.mxu0 0
    %1905 = vmatpush2.bf16.msra.mxu0 0
    %1906 = vmatprep.subr.bf16.mxu0 0
    %1907 = vmatpush2.bf16.msra.mxu0 0
    %1908 = vmatprep.subr.bf16.mxu0 0
    %1909 = vmatpush2.bf16.msra.mxu0 0
    %1910 = vmatprep.mubr.bf16.mxu0 0
    %1911 = vmatmul.mubr.bf16.gmra.mxu0 %v1213
    %v1912 = vpop.f32.mrf.mxu0
    %v1913 = vadd.f32 0.0, %v1912
    %v1914 = vpop.f32.mrf.mxu0
    %v1915 = vpop.f32.mrf.mxu0
    %v1916 = vadd.f32 0.0, %v1915
    %v1917 = vpop.f32.mrf.mxu0
    %1918 = vmatprep.mubr.bf16.mxu0 0
    %1919 = vmatmul.mubr.bf16.gmra.mxu0 %v1213
    %v1920 = vpop.f32.mrf.mxu0
    %v1921 = vadd.f32 0.0, %v1920
    %v1922 = vpop.f32.mrf.mxu0
    %v1923 = vpop.f32.mrf.mxu0
    %v1924 = vadd.f32 0.0, %v1923
    %v1925 = vpop.f32.mrf.mxu0
    %1926 = vmatprep.mubr.bf16.mxu0 0
    %1927 = vmatmul.mubr.bf16.gmra.mxu0 %v1213
    %v1928 = vpop.f32.mrf.mxu0
    %v1929 = vadd.f32 0.0, %v1928
    %v1930 = vpop.f32.mrf.mxu0
    %v1931 = vpop.f32.mrf.mxu0
    %v1932 = vadd.f32 0.0, %v1931
    %v1933 = vpop.f32.mrf.mxu0
    %1934 = vmatprep.mubr.bf16.mxu0 0
    %1935 = vmatmul.mubr.bf16.gmra.mxu0 %v1213
    %v1936 = vpop.f32.mrf.mxu0
    %v1937 = vadd.f32 0.0, %v1936
    %v1938 = vpop.f32.mrf.mxu0
    %v1939 = vpop.f32.mrf.mxu0
    %v1940 = vadd.f32 0.0, %v1939
    %v1941 = vpop.f32.mrf.mxu0
    %1942 = vmatprep.mubr.bf16.mxu0 0
    %1943 = vmatmul.mubr.bf16.gmra.mxu0 %v1213
    %v1944 = vpop.f32.mrf.mxu0
    %v1945 = vadd.f32 0.0, %v1944
    %v1946 = vpop.f32.mrf.mxu0
    %v1947 = vpop.f32.mrf.mxu0
    %v1948 = vadd.f32 0.0, %v1947
    %v1949 = vpop.f32.mrf.mxu0
    %1950 = vmatprep.mubr.bf16.mxu0 0
    %1951 = vmatmul.mubr.bf16.gmra.mxu0 %v1213
    %v1952 = vpop.f32.mrf.mxu0
    %v1953 = vadd.f32 0.0, %v1952
    %v1954 = vpop.f32.mrf.mxu0
    %v1955 = vpop.f32.mrf.mxu0
    %v1956 = vadd.f32 0.0, %v1955
    %v1957 = vpop.f32.mrf.mxu0
    %1958 = vmatprep.mubr.bf16.mxu0 0
    %1959 = vmatmul.mubr.bf16.gmra.mxu0 %v1213
    %v1960 = vpop.f32.mrf.mxu0
    %v1961 = vadd.f32 0.0, %v1960
    %v1962 = vpop.f32.mrf.mxu0
    %v1963 = vpop.f32.mrf.mxu0
    %v1964 = vadd.f32 0.0, %v1963
    %v1965 = vpop.f32.mrf.mxu0
    %1966 = vmatprep.mubr.bf16.mxu0 0
    %1967 = vmatmul.mubr.bf16.gmra.mxu0 %v1542
    %v1968 = vpop.f32.mrf.mxu0
    %v1969 = vadd.f32 0.0, %v1968
    %v1970 = vpop.f32.mrf.mxu0
    %v1971 = vpop.f32.mrf.mxu0
    %v1972 = vadd.f32 0.0, %v1971
    %v1973 = vpop.f32.mrf.mxu0
    %1974 = vmatprep.mubr.bf16.mxu0 0
    %1975 = vmatmul.mubr.bf16.gmra.mxu0 %v1545
    %v1976 = vpop.f32.mrf.mxu0
    %v1977 = vadd.f32 0.0, %v1976
    %v1978 = vpop.f32.mrf.mxu0
    %v1979 = vpop.f32.mrf.mxu0
    %v1980 = vadd.f32 0.0, %v1979
    %v1981 = vpop.f32.mrf.mxu0
    %1982 = vmatprep.mubr.bf16.mxu0 0
    %1983 = vmatmul.mubr.bf16.gmra.mxu0 %v1548
    %v1984 = vpop.f32.mrf.mxu0
    %v1985 = vadd.f32 0.0, %v1984
    %v1986 = vpop.f32.mrf.mxu0
    %v1987 = vpop.f32.mrf.mxu0
    %v1988 = vadd.f32 0.0, %v1987
    %v1989 = vpop.f32.mrf.mxu0
    %1990 = vmatprep.mubr.bf16.mxu0 0
    %1991 = vmatmul.mubr.bf16.gmra.mxu0 %v1551
    %v1992 = vpop.f32.mrf.mxu0
    %v1993 = vadd.f32 0.0, %v1992
    %v1994 = vpop.f32.mrf.mxu0
    %v1995 = vpop.f32.mrf.mxu0
    %v1996 = vadd.f32 0.0, %v1995
    %v1997 = vpop.f32.mrf.mxu0
    %1998 = vmatprep.mubr.bf16.mxu0 0
    %1999 = vmatmul.mubr.bf16.gmra.mxu0 %v1554
    %v2000 = vpop.f32.mrf.mxu0
    %v2001 = vadd.f32 0.0, %v2000
    %v2002 = vpop.f32.mrf.mxu0
    %v2003 = vpop.f32.mrf.mxu0
    %v2004 = vadd.f32 0.0, %v2003
    %v2005 = vpop.f32.mrf.mxu0
    %2006 = vmatprep.mubr.bf16.mxu0 0
    %2007 = vmatmul.mubr.bf16.gmra.mxu0 %v1557
    %v2008 = vpop.f32.mrf.mxu0
    %v2009 = vadd.f32 0.0, %v2008
    %v2010 = vpop.f32.mrf.mxu0
    %v2011 = vpop.f32.mrf.mxu0
    %v2012 = vadd.f32 0.0, %v2011
    %v2013 = vpop.f32.mrf.mxu0
    %2014 = vmatprep.mubr.bf16.mxu0 0
    %2015 = vmatmul.mubr.bf16.gmra.mxu0 %v1873
    %v2016 = vpop.f32.mrf.mxu0
    %v2017 = vadd.f32 0.0, %v2016
    %v2018 = vpop.f32.mrf.mxu0
    %v2019 = vpop.f32.mrf.mxu0
    %v2020 = vadd.f32 0.0, %v2019
    %v2021 = vpop.f32.mrf.mxu0
    %2022 = vmatprep.mubr.bf16.mxu0 0
    %2023 = vmatmul.mubr.bf16.gmra.mxu0 %v1563
    %v2024 = vpop.f32.mrf.mxu0
    %v2025 = vadd.f32 0.0, %v2024
    %v2026 = vpop.f32.mrf.mxu0
    %v2027 = vpop.f32.mrf.mxu0
    %v2028 = vadd.f32 0.0, %v2027
    %v2029 = vpop.f32.mrf.mxu0
    %2030 = vmatprep.mubr.bf16.mxu0 0
    %2031 = vmatmul.mubr.bf16.gmra.mxu0 %v1566
    %v2032 = vpop.f32.mrf.mxu0
    %v2033 = vadd.f32 0.0, %v2032
    %v2034 = vpop.f32.mrf.mxu0
    %v2035 = vpop.f32.mrf.mxu0
    %v2036 = vadd.f32 0.0, %v2035
    %v2037 = vpop.f32.mrf.mxu0
    %2038 = vmatprep.mubr.bf16.mxu0 0
    %2039 = vmatmul.mubr.bf16.gmra.mxu0 %v1569
    %v2040 = vpop.f32.mrf.mxu0
    %v2041 = vadd.f32 0.0, %v2040
    %v2042 = vpop.f32.mrf.mxu0
    %v2043 = vpop.f32.mrf.mxu0
    %v2044 = vadd.f32 0.0, %v2043
    %v2045 = vpop.f32.mrf.mxu0
    %2046 = vmatprep.mubr.bf16.mxu0 0
    %2047 = vmatmul.mubr.bf16.gmra.mxu0 %v1572
    %v2048 = vpop.f32.mrf.mxu0
    %v2049 = vadd.f32 0.0, %v2048
    %v2050 = vpop.f32.mrf.mxu0
    %v2051 = vpop.f32.mrf.mxu0
    %v2052 = vadd.f32 0.0, %v2051
    %v2053 = vpop.f32.mrf.mxu0
    %2054 = vmatprep.mubr.bf16.mxu0 0
    %2055 = vmatmul.mubr.bf16.gmra.mxu0 %v1575
    %v2056 = vpop.f32.mrf.mxu0
    %v2057 = vadd.f32 0.0, %v2056
    %v2058 = vpop.f32.mrf.mxu0
    %v2059 = vpop.f32.mrf.mxu0
    %v2060 = vadd.f32 0.0, %v2059
    %v2061 = vpop.f32.mrf.mxu0
    %2062 = vmatprep.mubr.bf16.mxu0 0
    %2063 = vmatmul.mubr.bf16.gmra.mxu0 %v1578
    %v2064 = vpop.f32.mrf.mxu0
    %v2065 = vadd.f32 0.0, %v2064
    %v2066 = vpop.f32.mrf.mxu0
    %v2067 = vpop.f32.mrf.mxu0
    %v2068 = vadd.f32 0.0, %v2067
    %v2069 = vpop.f32.mrf.mxu0
    %2070 = vmatprep.mubr.bf16.mxu0 0
    %2071 = vmatmul.mubr.bf16.gmra.mxu0 %v1876
    %v2072 = vpop.f32.mrf.mxu0
    %v2073 = vadd.f32 0.0, %v2072
    %v2074 = vpop.f32.mrf.mxu0
    %v2075 = vpop.f32.mrf.mxu0
    %v2076 = vadd.f32 0.0, %v2075
    %v2077 = vpop.f32.mrf.mxu0
    %2078 = vmatprep.mubr.bf16.mxu0 0
    %2079 = vmatmul.mubr.bf16.gmra.mxu0 %v1213
    %v2080 = vpop.f32.mrf.mxu0
    %v2081 = vadd.f32 0.0, %v2080
    %v2082 = vpop.f32.mrf.mxu0
    %v2083 = vpop.f32.mrf.mxu0
    %v2084 = vadd.f32 0.0, %v2083
    %v2085 = vpop.f32.mrf.mxu0
    %2086 = vmatprep.mubr.bf16.mxu0 0
    %2087 = vmatmul.mubr.bf16.gmra.mxu0 %v1213
    %v2088 = vpop.f32.mrf.mxu0
    %v2089 = vadd.f32 0.0, %v2088
    %v2090 = vpop.f32.mrf.mxu0
    %v2091 = vpop.f32.mrf.mxu0
    %v2092 = vadd.f32 0.0, %v2091
    %v2093 = vpop.f32.mrf.mxu0
    %2094 = vmatprep.mubr.bf16.mxu0 0
    %2095 = vmatmul.mubr.bf16.gmra.mxu0 %v1213
    %v2096 = vpop.f32.mrf.mxu0
    %v2097 = vadd.f32 0.0, %v2096
    %v2098 = vpop.f32.mrf.mxu0
    %v2099 = vpop.f32.mrf.mxu0
    %v2100 = vadd.f32 0.0, %v2099
    %v2101 = vpop.f32.mrf.mxu0
    %2102 = vmatprep.mubr.bf16.mxu0 0
    %2103 = vmatmul.mubr.bf16.gmra.mxu0 %v1213
    %v2104 = vpop.f32.mrf.mxu0
    %v2105 = vadd.f32 0.0, %v2104
    %v2106 = vpop.f32.mrf.mxu0
    %v2107 = vpop.f32.mrf.mxu0
    %v2108 = vadd.f32 0.0, %v2107
    %v2109 = vpop.f32.mrf.mxu0
    %2110 = vmatprep.mubr.bf16.mxu0 0
    %2111 = vmatmul.mubr.bf16.gmra.mxu0 %v1213
    %v2112 = vpop.f32.mrf.mxu0
    %v2113 = vadd.f32 0.0, %v2112
    %v2114 = vpop.f32.mrf.mxu0
    %v2115 = vpop.f32.mrf.mxu0
    %v2116 = vadd.f32 0.0, %v2115
    %v2117 = vpop.f32.mrf.mxu0
    %2118 = vmatprep.mubr.bf16.mxu0 0
    %2119 = vmatmul.mubr.bf16.gmra.mxu0 %v1213
    %v2120 = vpop.f32.mrf.mxu0
    %v2121 = vadd.f32 0.0, %v2120
    %v2122 = vpop.f32.mrf.mxu0
    %v2123 = vpop.f32.mrf.mxu0
    %v2124 = vadd.f32 0.0, %v2123
    %v2125 = vpop.f32.mrf.mxu0
    %2126 = vmatprep.mubr.bf16.mxu0 0
    %2127 = vmatmul.mubr.bf16.gmra.mxu0 %v1213
    %v2128 = vpop.f32.mrf.mxu0
    %v2129 = vadd.f32 0.0, %v2128
    %v2130 = vpop.f32.mrf.mxu0
    %v2131 = vpop.f32.mrf.mxu0
    %v2132 = vadd.f32 0.0, %v2131
    %v2133 = vpop.f32.mrf.mxu0
    %2134 = vdwg.mxu0
    %v2135 = vadd.f32 %v1615, %v1913
    %v2136 = vadd.f32 %v1618, %v1916
    %v2137 = vadd.f32 %v1623, %v1921
    %v2138 = vadd.f32 %v1626, %v1924
    %v2139 = vadd.f32 %v1631, %v1929
    %v2140 = vadd.f32 %v1634, %v1932
    %v2141 = vadd.f32 %v1639, %v1937
    %v2142 = vadd.f32 %v1642, %v1940
    %v2143 = vadd.f32 %v1647, %v1945
    %v2144 = vadd.f32 %v1650, %v1948
    %v2145 = vadd.f32 %v1655, %v1953
    %v2146 = vadd.f32 %v1658, %v1956
    %v2147 = vadd.f32 %v1663, %v1961
    %v2148 = vadd.f32 %v1666, %v1964
    %v2149 = vadd.f32 %v1671, %v1969
    %v2150 = vadd.f32 %v1674, %v1972
    %v2151 = vadd.f32 %v1679, %v1977
    %v2152 = vadd.f32 %v1682, %v1980
    %v2153 = vadd.f32 %v1687, %v1985
    %v2154 = vadd.f32 %v1690, %v1988
    %v2155 = vadd.f32 %v1695, %v1993
    %v2156 = vadd.f32 %v1698, %v1996
    %v2157 = vadd.f32 %v1703, %v2001
    %v2158 = vadd.f32 %v1706, %v2004
    %v2159 = vadd.f32 %v1711, %v2009
    %v2160 = vadd.f32 %v1714, %v2012
    %v2161 = vadd.f32 %v1719, %v2017
    %v2162 = vadd.f32 %v1722, %v2020
    %v2163 = vadd.f32 %v1727, %v2025
    %v2164 = vadd.f32 %v1730, %v2028
    %v2165 = vadd.f32 %v1735, %v2033
    %v2166 = vadd.f32 %v1738, %v2036
    %v2167 = vadd.f32 %v1743, %v2041
    %v2168 = vadd.f32 %v1746, %v2044
    %v2169 = vadd.f32 %v1751, %v2049
    %v2170 = vadd.f32 %v1754, %v2052
    %v2171 = vadd.f32 %v1759, %v2057
    %v2172 = vadd.f32 %v1762, %v2060
    %v2173 = vadd.f32 %v1767, %v2065
    %v2174 = vadd.f32 %v1770, %v2068
    %v2175 = vadd.f32 %v1775, %v2073
    %v2176 = vadd.f32 %v1778, %v2076
    %v2177 = vadd.f32 %v1783, %v2081
    %v2178 = vadd.f32 %v1786, %v2084
    %v2179 = vadd.f32 %v1791, %v2089
    %v2180 = vadd.f32 %v1794, %v2092
    %v2181 = vadd.f32 %v1799, %v2097
    %v2182 = vadd.f32 %v1802, %v2100
    %v2183 = vadd.f32 %v1807, %v2105
    %v2184 = vadd.f32 %v1810, %v2108
    %v2185 = vadd.f32 %v1815, %v2113
    %v2186 = vadd.f32 %v1818, %v2116
    %v2187 = vadd.f32 %v1823, %v2121
    %v2188 = vadd.f32 %v1826, %v2124
    %v2189 = vadd.f32 %v1831, %v2129
    %v2190 = vadd.f32 %v1834, %v2132
    %v2191 = vld [vmem:[%s4] sm:$0x1]
    %v2193 = vlaneseq
    %v2194 = vshrl.u32 %v2193, 7
    %v2195 = vsub.s32 0, %v2194
    %v2196 = vrot.slane %v2191, %v2195
    %v2198 = vadd.f32 %v2135, %v2196
    %v2199 = vadd.f32 %v2136, %v2196
    %v2200 = vadd.f32 %v2137, %v2196
    %v2201 = vadd.f32 %v2138, %v2196
    %v2202 = vadd.f32 %v2139, %v2196
    %v2203 = vadd.f32 %v2140, %v2196
    %v2204 = vadd.f32 %v2141, %v2196
    %v2205 = vadd.f32 %v2142, %v2196
    %v2206 = vadd.f32 %v2143, %v2196
    %v2207 = vadd.f32 %v2144, %v2196
    %v2208 = vadd.f32 %v2145, %v2196
    %v2209 = vadd.f32 %v2146, %v2196
    %v2210 = vadd.f32 %v2147, %v2196
    %v2211 = vadd.f32 %v2148, %v2196
    %v2212 = vadd.f32 %v2149, %v2196
    %v2213 = vadd.f32 %v2150, %v2196
    %v2214 = vadd.f32 %v2151, %v2196
    %v2215 = vadd.f32 %v2152, %v2196
    %v2216 = vadd.f32 %v2153, %v2196
    %v2217 = vadd.f32 %v2154, %v2196
    %v2218 = vadd.f32 %v2155, %v2196
    %v2219 = vadd.f32 %v2156, %v2196
    %v2220 = vadd.f32 %v2157, %v2196
    %v2221 = vadd.f32 %v2158, %v2196
    %v2222 = vadd.f32 %v2159, %v2196
    %v2223 = vadd.f32 %v2160, %v2196
    %v2224 = vadd.f32 %v2161, %v2196
    %v2225 = vadd.f32 %v2162, %v2196
    %v2226 = vadd.f32 %v2163, %v2196
    %v2227 = vadd.f32 %v2164, %v2196
    %v2228 = vadd.f32 %v2165, %v2196
    %v2229 = vadd.f32 %v2166, %v2196
    %v2230 = vadd.f32 %v2167, %v2196
    %v2231 = vadd.f32 %v2168, %v2196
    %v2232 = vadd.f32 %v2169, %v2196
    %v2233 = vadd.f32 %v2170, %v2196
    %v2234 = vadd.f32 %v2171, %v2196
    %v2235 = vadd.f32 %v2172, %v2196
    %v2236 = vadd.f32 %v2173, %v2196
    %v2237 = vadd.f32 %v2174, %v2196
    %v2238 = vadd.f32 %v2175, %v2196
    %v2239 = vadd.f32 %v2176, %v2196
    %v2240 = vadd.f32 %v2177, %v2196
    %v2241 = vadd.f32 %v2178, %v2196
    %v2242 = vadd.f32 %v2179, %v2196
    %v2243 = vadd.f32 %v2180, %v2196
    %v2244 = vadd.f32 %v2181, %v2196
    %v2245 = vadd.f32 %v2182, %v2196
    %v2246 = vadd.f32 %v2183, %v2196
    %v2247 = vadd.f32 %v2184, %v2196
    %v2248 = vadd.f32 %v2185, %v2196
    %v2249 = vadd.f32 %v2186, %v2196
    %v2250 = vadd.f32 %v2187, %v2196
    %v2251 = vadd.f32 %v2188, %v2196
    %v2252 = vadd.f32 %v2189, %v2196
    %v2253 = vadd.f32 %v2190, %v2196
    %v2254 = vmax.f32 %v2198, 0.0
    %v2255 = vmax.f32 %v2199, 0.0
    %v2256 = vmax.f32 %v2200, 0.0
    %v2257 = vmax.f32 %v2201, 0.0
    %v2258 = vmax.f32 %v2202, 0.0
    %v2259 = vmax.f32 %v2203, 0.0
    %v2260 = vmax.f32 %v2204, 0.0
    %v2261 = vmax.f32 %v2205, 0.0
    %v2262 = vmax.f32 %v2206, 0.0
    %v2263 = vmax.f32 %v2207, 0.0
    %v2264 = vmax.f32 %v2208, 0.0
    %v2265 = vmax.f32 %v2209, 0.0
    %v2266 = vmax.f32 %v2210, 0.0
    %v2267 = vmax.f32 %v2211, 0.0
    %v2268 = vmax.f32 %v2212, 0.0
    %v2269 = vmax.f32 %v2213, 0.0
    %v2270 = vmax.f32 %v2214, 0.0
    %v2271 = vmax.f32 %v2215, 0.0
    %v2272 = vmax.f32 %v2216, 0.0
    %v2273 = vmax.f32 %v2217, 0.0
    %v2274 = vmax.f32 %v2218, 0.0
    %v2275 = vmax.f32 %v2219, 0.0
    %v2276 = vmax.f32 %v2220, 0.0
    %v2277 = vmax.f32 %v2221, 0.0
    %v2278 = vmax.f32 %v2222, 0.0
    %v2279 = vmax.f32 %v2223, 0.0
    %v2280 = vmax.f32 %v2224, 0.0
    %v2281 = vmax.f32 %v2225, 0.0
    %v2282 = vmax.f32 %v2226, 0.0
    %v2283 = vmax.f32 %v2227, 0.0
    %v2284 = vmax.f32 %v2228, 0.0
    %v2285 = vmax.f32 %v2229, 0.0
    %v2286 = vmax.f32 %v2230, 0.0
    %v2287 = vmax.f32 %v2231, 0.0
    %v2288 = vmax.f32 %v2232, 0.0
    %v2289 = vmax.f32 %v2233, 0.0
    %v2290 = vmax.f32 %v2234, 0.0
    %v2291 = vmax.f32 %v2235, 0.0
    %v2292 = vmax.f32 %v2236, 0.0
    %v2293 = vmax.f32 %v2237, 0.0
    %v2294 = vmax.f32 %v2238, 0.0
    %v2295 = vmax.f32 %v2239, 0.0
    %v2296 = vmax.f32 %v2240, 0.0
    %v2297 = vmax.f32 %v2241, 0.0
    %v2298 = vmax.f32 %v2242, 0.0
    %v2299 = vmax.f32 %v2243, 0.0
    %v2300 = vmax.f32 %v2244, 0.0
    %v2301 = vmax.f32 %v2245, 0.0
    %v2302 = vmax.f32 %v2246, 0.0
    %v2303 = vmax.f32 %v2247, 0.0
    %v2304 = vmax.f32 %v2248, 0.0
    %v2305 = vmax.f32 %v2249, 0.0
    %v2306 = vmax.f32 %v2250, 0.0
    %v2307 = vmax.f32 %v2251, 0.0
    %v2308 = vmax.f32 %v2252, 0.0
    %v2309 = vmax.f32 %v2253, 0.0
    %v2310 = vmax.f32 %v2254, %v2255
    %v2311 = vmax.f32 %v2268, %v2269
    %v2312 = vmax.f32 %v2282, %v2283
    %v2313 = vmax.f32 %v2296, %v2297
    %v2314 = vmax.f32 %v2256, %v2257
    %v2315 = vmax.f32 %v2270, %v2271
    %v2316 = vmax.f32 %v2284, %v2285
    %v2317 = vmax.f32 %v2298, %v2299
    %v2318 = vmax.f32 %v2258, %v2259
    %v2319 = vmax.f32 %v2272, %v2273
    %v2320 = vmax.f32 %v2286, %v2287
    %v2321 = vmax.f32 %v2300, %v2301
    %v2322 = vmax.f32 %v2260, %v2261
    %v2323 = vmax.f32 %v2274, %v2275
    %v2324 = vmax.f32 %v2288, %v2289
    %v2325 = vmax.f32 %v2302, %v2303
    %v2326 = vmax.f32 %v2262, %v2263
    %v2327 = vmax.f32 %v2276, %v2277
    %v2328 = vmax.f32 %v2290, %v2291
    %v2329 = vmax.f32 %v2304, %v2305
    %v2330 = vmax.f32 %v2264, %v2265
    %v2331 = vmax.f32 %v2278, %v2279
    %v2332 = vmax.f32 %v2292, %v2293
    %v2333 = vmax.f32 %v2306, %v2307
    %v2334 = vmax.f32 %v2266, %v2267
    %v2335 = vmax.f32 %v2280, %v2281
    %v2336 = vmax.f32 %v2294, %v2295
    %v2337 = vmax.f32 %v2308, %v2309
    %v2338 = vpack.c.bf16 %v2310, 0.0
    %v2339 = vpack.c.bf16 %v2318, %v2314
    %v2340 = vpack.c.bf16 %v2326, %v2322
    %v2341 = vpack.c.bf16 %v2334, %v2330
    %v2342 = vpack.c.bf16 %v2311, 0.0
    %v2343 = vpack.c.bf16 %v2319, %v2315
    %v2344 = vpack.c.bf16 %v2327, %v2323
    %v2345 = vpack.c.bf16 %v2335, %v2331
    %v2346 = vpack.c.bf16 %v2312, 0.0
    %v2347 = vpack.c.bf16 %v2320, %v2316
    %v2348 = vpack.c.bf16 %v2328, %v2324
    %v2349 = vpack.c.bf16 %v2336, %v2332
    %v2350 = vpack.c.bf16 %v2313, 0.0
    %v2351 = vpack.c.bf16 %v2321, %v2317
    %v2352 = vpack.c.bf16 %v2329, %v2325
    %v2353 = vpack.c.bf16 %v2337, %v2333
    %v2354 = vld [vmem:[%s5] sm:$0xff]
    %v2355 = vld [vmem:[%s5 + $0x8] sm:$0xff]
    %v2356 = vld [vmem:[%s5 + $0x10] sm:$0xff]
    %v2357 = vld [vmem:[%s5 + $0x18] sm:$0xff]
    %v2358 = vld [vmem:[%s5 + $0x20] sm:$0xff]
    %v2359 = vld [vmem:[%s5 + $0x28] sm:$0xff]
    %v2360 = vld [vmem:[%s5 + $0x30] sm:$0xff]
    %v2361 = vld [vmem:[%s5 + $0x38] sm:$0xff]
    %v2362 = vld [vmem:[%s5 + $0x40] sm:$0xff]
    %v2363 = vld [vmem:[%s5 + $0x48] sm:$0xff]
    %v2364 = vld [vmem:[%s5 + $0x50] sm:$0xff]
    %v2365 = vld [vmem:[%s5 + $0x58] sm:$0xff]
    %v2366 = vld [vmem:[%s5 + $0x60] sm:$0xff]
    %v2367 = vld [vmem:[%s5 + $0x68] sm:$0xff]
    %v2368 = vld [vmem:[%s5 + $0x70] sm:$0xff]
    %v2369 = vld [vmem:[%s5 + $0x78] sm:$0xff]
    %v2370 = vpack.c.bf16 %v2314, %v2310
    %v2371 = vpack.c.bf16 %v2322, %v2318
    %v2372 = vpack.c.bf16 %v2330, %v2326
    %v2373 = vpack.c.bf16 0.0, %v2334
    %v2374 = vpack.c.bf16 %v2315, %v2311
    %v2375 = vpack.c.bf16 %v2323, %v2319
    %v2376 = vpack.c.bf16 %v2331, %v2327
    %v2377 = vpack.c.bf16 0.0, %v2335
    %v2378 = vpack.c.bf16 %v2316, %v2312
    %v2379 = vpack.c.bf16 %v2324, %v2320
    %v2380 = vpack.c.bf16 %v2332, %v2328
    %v2381 = vpack.c.bf16 0.0, %v2336
    %v2382 = vpack.c.bf16 %v2317, %v2313
    %v2383 = vpack.c.bf16 %v2325, %v2321
    %v2384 = vpack.c.bf16 %v2333, %v2329
    %v2385 = vpack.c.bf16 0.0, %v2337
    %s2386 = scalar_lea.vmem %s5, 128
    %v2387 = vld [vmem:[%s2386] sm:$0xff]
    %v2388 = vld [vmem:[%s2386 + $0x8] sm:$0xff]
    %v2389 = vld [vmem:[%s2386 + $0x10] sm:$0xff]
    %v2390 = vld [vmem:[%s2386 + $0x18] sm:$0xff]
    %v2391 = vld [vmem:[%s2386 + $0x20] sm:$0xff]
    %v2392 = vld [vmem:[%s2386 + $0x28] sm:$0xff]
    %v2393 = vld [vmem:[%s2386 + $0x30] sm:$0xff]
    %v2394 = vld [vmem:[%s2386 + $0x38] sm:$0xff]
    %v2395 = vld [vmem:[%s2386 + $0x40] sm:$0xff]
    %v2396 = vld [vmem:[%s2386 + $0x48] sm:$0xff]
    %v2397 = vld [vmem:[%s2386 + $0x50] sm:$0xff]
    %v2398 = vld [vmem:[%s2386 + $0x58] sm:$0xff]
    %v2399 = vld [vmem:[%s2386 + $0x60] sm:$0xff]
    %v2400 = vld [vmem:[%s2386 + $0x68] sm:$0xff]
    %v2401 = vld [vmem:[%s2386 + $0x70] sm:$0xff]
    %v2402 = vld [vmem:[%s2386 + $0x78] sm:$0xff]
    %v2419 = vunpack.c.l.b16 %v2387
    %v2420 = vunpack.c.h.b16 %v2387
    %v2421 = vunpack.c.l.b16 %v2388
    %v2422 = vunpack.c.h.b16 %v2388
    %v2423 = vunpack.c.l.b16 %v2389
    %v2424 = vunpack.c.h.b16 %v2389
    %v2425 = vunpack.c.l.b16 %v2390
    %v2426 = vunpack.c.h.b16 %v2390
    %v2427 = vunpack.c.l.b16 %v2391
    %v2428 = vunpack.c.h.b16 %v2391
    %v2429 = vunpack.c.l.b16 %v2392
    %v2430 = vunpack.c.h.b16 %v2392
    %v2431 = vunpack.c.l.b16 %v2393
    %v2432 = vunpack.c.h.b16 %v2393
    %v2433 = vunpack.c.l.b16 %v2394
    %v2434 = vunpack.c.h.b16 %v2394
    %v2435 = vunpack.c.l.b16 %v2395
    %v2436 = vunpack.c.h.b16 %v2395
    %v2437 = vunpack.c.l.b16 %v2396
    %v2438 = vunpack.c.h.b16 %v2396
    %v2439 = vunpack.c.l.b16 %v2397
    %v2440 = vunpack.c.h.b16 %v2397
    %v2441 = vunpack.c.l.b16 %v2398
    %v2442 = vunpack.c.h.b16 %v2398
    %v2443 = vunpack.c.l.b16 %v2399
    %v2444 = vunpack.c.h.b16 %v2399
    %v2445 = vunpack.c.l.b16 %v2400
    %v2446 = vunpack.c.h.b16 %v2400
    %v2447 = vunpack.c.l.b16 %v2401
    %v2448 = vunpack.c.h.b16 %v2401
    %v2449 = vunpack.c.l.b16 %v2402
    %v2450 = vunpack.c.h.b16 %v2402
    %v2451 = vpack.c.b16 %v2421, %v2419
    %v2452 = vpack.c.b16 %v2422, %v2420
    %v2453 = vpack.c.b16 %v2425, %v2423
    %v2454 = vpack.c.b16 %v2426, %v2424
    %v2455 = vpack.c.b16 %v2429, %v2427
    %v2456 = vpack.c.b16 %v2430, %v2428
    %v2457 = vpack.c.b16 %v2433, %v2431
    %v2458 = vpack.c.b16 %v2434, %v2432
    %v2459 = vpack.c.b16 %v2437, %v2435
    %v2460 = vpack.c.b16 %v2438, %v2436
    %v2461 = vpack.c.b16 %v2441, %v2439
    %v2462 = vpack.c.b16 %v2442, %v2440
    %v2463 = vpack.c.b16 %v2445, %v2443
    %v2464 = vpack.c.b16 %v2446, %v2444
    %v2465 = vpack.c.b16 %v2449, %v2447
    %v2466 = vpack.c.b16 %v2450, %v2448
    %2483 = vmatprep.subr.bf16.mxu0 %v2466
    %2484 = vmatpush1.bf16.msra.mxu0 %v2465
    %2485 = vmatprep.subr.bf16.mxu0 %v2464
    %2486 = vmatpush1.bf16.msra.mxu0 %v2463
    %2487 = vmatprep.subr.bf16.mxu0 %v2462
    %2488 = vmatpush1.bf16.msra.mxu0 %v2461
    %2489 = vmatprep.subr.bf16.mxu0 %v2460
    %2490 = vmatpush1.bf16.msra.mxu0 %v2459
    %2491 = vmatprep.subr.bf16.mxu0 %v2458
    %2492 = vmatpush1.bf16.msra.mxu0 %v2457
    %2493 = vmatprep.subr.bf16.mxu0 %v2456
    %2494 = vmatpush1.bf16.msra.mxu0 %v2455
    %2495 = vmatprep.subr.bf16.mxu0 %v2454
    %2496 = vmatpush1.bf16.msra.mxu0 %v2453
    %2497 = vmatprep.subr.bf16.mxu0 %v2452
    %2498 = vmatpush1.bf16.msra.mxu0 %v2451
    %2499 = vmatprep.subr.bf16.mxu0 0
    %2500 = vmatpush2.bf16.msra.mxu0 0
    %2501 = vmatprep.subr.bf16.mxu0 0
    %2502 = vmatpush2.bf16.msra.mxu0 0
    %2503 = vmatprep.subr.bf16.mxu0 0
    %2504 = vmatpush2.bf16.msra.mxu0 0
    %2505 = vmatprep.subr.bf16.mxu0 0
    %2506 = vmatpush2.bf16.msra.mxu0 0
    %2507 = vmatprep.subr.bf16.mxu0 0
    %2508 = vmatpush2.bf16.msra.mxu0 0
    %2509 = vmatprep.subr.bf16.mxu0 0
    %2510 = vmatpush2.bf16.msra.mxu0 0
    %2511 = vmatprep.subr.bf16.mxu0 0
    %2512 = vmatpush2.bf16.msra.mxu0 0
    %2513 = vmatprep.subr.bf16.mxu0 0
    %2514 = vmatpush2.bf16.msra.mxu0 0
    %2515 = vmatprep.mubr.bf16.mxu0 0
    %2516 = vmatmul.mubr.bf16.gmra.mxu0 %v1141
    %v2517 = vpop.f32.mrf.mxu0
    %v2518 = vadd.f32 0.0, %v2517
    %v2519 = vpop.f32.mrf.mxu0
    %v2520 = vadd.f32 0.0, %v2519
    %v2521 = vpop.f32.mrf.mxu0
    %v2522 = vadd.f32 0.0, %v2521
    %v2523 = vpop.f32.mrf.mxu0
    %v2524 = vadd.f32 0.0, %v2523
    %2525 = vmatprep.mubr.bf16.mxu0 0
    %2526 = vmatmul.mubr.bf16.gmra.mxu0 %v1141
    %v2527 = vpop.f32.mrf.mxu0
    %v2528 = vadd.f32 0.0, %v2527
    %v2529 = vpop.f32.mrf.mxu0
    %v2530 = vadd.f32 0.0, %v2529
    %v2531 = vpop.f32.mrf.mxu0
    %v2532 = vadd.f32 0.0, %v2531
    %v2533 = vpop.f32.mrf.mxu0
    %v2534 = vadd.f32 0.0, %v2533
    %2535 = vmatprep.mubr.bf16.mxu0 0
    %2536 = vmatmul.mubr.bf16.gmra.mxu0 %v1141
    %v2537 = vpop.f32.mrf.mxu0
    %v2538 = vadd.f32 0.0, %v2537
    %v2539 = vpop.f32.mrf.mxu0
    %v2540 = vadd.f32 0.0, %v2539
    %v2541 = vpop.f32.mrf.mxu0
    %v2542 = vadd.f32 0.0, %v2541
    %v2543 = vpop.f32.mrf.mxu0
    %v2544 = vadd.f32 0.0, %v2543
    %2545 = vmatprep.mubr.bf16.mxu0 0
    %2546 = vmatmul.mubr.bf16.gmra.mxu0 %v1141
    %v2547 = vpop.f32.mrf.mxu0
    %v2548 = vadd.f32 0.0, %v2547
    %v2549 = vpop.f32.mrf.mxu0
    %v2550 = vadd.f32 0.0, %v2549
    %v2551 = vpop.f32.mrf.mxu0
    %v2552 = vadd.f32 0.0, %v2551
    %v2553 = vpop.f32.mrf.mxu0
    %v2554 = vadd.f32 0.0, %v2553
    %2555 = vmatprep.mubr.bf16.mxu0 0
    %2556 = vmatmul.mubr.bf16.gmra.mxu0 %v2370
    %v2557 = vpop.f32.mrf.mxu0
    %v2558 = vadd.f32 0.0, %v2557
    %v2559 = vpop.f32.mrf.mxu0
    %v2560 = vadd.f32 0.0, %v2559
    %v2561 = vpop.f32.mrf.mxu0
    %v2562 = vadd.f32 0.0, %v2561
    %v2563 = vpop.f32.mrf.mxu0
    %v2564 = vadd.f32 0.0, %v2563
    %2565 = vmatprep.mubr.bf16.mxu0 0
    %2566 = vmatmul.mubr.bf16.gmra.mxu0 %v2371
    %v2567 = vpop.f32.mrf.mxu0
    %v2568 = vadd.f32 0.0, %v2567
    %v2569 = vpop.f32.mrf.mxu0
    %v2570 = vadd.f32 0.0, %v2569
    %v2571 = vpop.f32.mrf.mxu0
    %v2572 = vadd.f32 0.0, %v2571
    %v2573 = vpop.f32.mrf.mxu0
    %v2574 = vadd.f32 0.0, %v2573
    %2575 = vmatprep.mubr.bf16.mxu0 0
    %2576 = vmatmul.mubr.bf16.gmra.mxu0 %v2372
    %v2577 = vpop.f32.mrf.mxu0
    %v2578 = vadd.f32 0.0, %v2577
    %v2579 = vpop.f32.mrf.mxu0
    %v2580 = vadd.f32 0.0, %v2579
    %v2581 = vpop.f32.mrf.mxu0
    %v2582 = vadd.f32 0.0, %v2581
    %v2583 = vpop.f32.mrf.mxu0
    %v2584 = vadd.f32 0.0, %v2583
    %2585 = vmatprep.mubr.bf16.mxu0 0
    %2586 = vmatmul.mubr.bf16.gmra.mxu0 %v2373
    %v2587 = vpop.f32.mrf.mxu0
    %v2588 = vadd.f32 0.0, %v2587
    %v2589 = vpop.f32.mrf.mxu0
    %v2590 = vadd.f32 0.0, %v2589
    %v2591 = vpop.f32.mrf.mxu0
    %v2592 = vadd.f32 0.0, %v2591
    %v2593 = vpop.f32.mrf.mxu0
    %v2594 = vadd.f32 0.0, %v2593
    %2595 = vmatprep.mubr.bf16.mxu0 0
    %2596 = vmatmul.mubr.bf16.gmra.mxu0 %v2374
    %v2597 = vpop.f32.mrf.mxu0
    %v2598 = vadd.f32 0.0, %v2597
    %v2599 = vpop.f32.mrf.mxu0
    %v2600 = vadd.f32 0.0, %v2599
    %v2601 = vpop.f32.mrf.mxu0
    %v2602 = vadd.f32 0.0, %v2601
    %v2603 = vpop.f32.mrf.mxu0
    %v2604 = vadd.f32 0.0, %v2603
    %2605 = vmatprep.mubr.bf16.mxu0 0
    %2606 = vmatmul.mubr.bf16.gmra.mxu0 %v2375
    %v2607 = vpop.f32.mrf.mxu0
    %v2608 = vadd.f32 0.0, %v2607
    %v2609 = vpop.f32.mrf.mxu0
    %v2610 = vadd.f32 0.0, %v2609
    %v2611 = vpop.f32.mrf.mxu0
    %v2612 = vadd.f32 0.0, %v2611
    %v2613 = vpop.f32.mrf.mxu0
    %v2614 = vadd.f32 0.0, %v2613
    %2615 = vmatprep.mubr.bf16.mxu0 0
    %2616 = vmatmul.mubr.bf16.gmra.mxu0 %v2376
    %v2617 = vpop.f32.mrf.mxu0
    %v2618 = vadd.f32 0.0, %v2617
    %v2619 = vpop.f32.mrf.mxu0
    %v2620 = vadd.f32 0.0, %v2619
    %v2621 = vpop.f32.mrf.mxu0
    %v2622 = vadd.f32 0.0, %v2621
    %v2623 = vpop.f32.mrf.mxu0
    %v2624 = vadd.f32 0.0, %v2623
    %2625 = vmatprep.mubr.bf16.mxu0 0
    %2626 = vmatmul.mubr.bf16.gmra.mxu0 %v2377
    %v2627 = vpop.f32.mrf.mxu0
    %v2628 = vadd.f32 0.0, %v2627
    %v2629 = vpop.f32.mrf.mxu0
    %v2630 = vadd.f32 0.0, %v2629
    %v2631 = vpop.f32.mrf.mxu0
    %v2632 = vadd.f32 0.0, %v2631
    %v2633 = vpop.f32.mrf.mxu0
    %v2634 = vadd.f32 0.0, %v2633
    %2635 = vmatprep.mubr.bf16.mxu0 0
    %2636 = vmatmul.mubr.bf16.gmra.mxu0 %v2378
    %v2637 = vpop.f32.mrf.mxu0
    %v2638 = vadd.f32 0.0, %v2637
    %v2639 = vpop.f32.mrf.mxu0
    %v2640 = vadd.f32 0.0, %v2639
    %v2641 = vpop.f32.mrf.mxu0
    %v2642 = vadd.f32 0.0, %v2641
    %v2643 = vpop.f32.mrf.mxu0
    %v2644 = vadd.f32 0.0, %v2643
    %2645 = vmatprep.mubr.bf16.mxu0 0
    %2646 = vmatmul.mubr.bf16.gmra.mxu0 %v2379
    %v2647 = vpop.f32.mrf.mxu0
    %v2648 = vadd.f32 0.0, %v2647
    %v2649 = vpop.f32.mrf.mxu0
    %v2650 = vadd.f32 0.0, %v2649
    %v2651 = vpop.f32.mrf.mxu0
    %v2652 = vadd.f32 0.0, %v2651
    %v2653 = vpop.f32.mrf.mxu0
    %v2654 = vadd.f32 0.0, %v2653
    %2655 = vmatprep.mubr.bf16.mxu0 0
    %2656 = vmatmul.mubr.bf16.gmra.mxu0 %v2380
    %v2657 = vpop.f32.mrf.mxu0
    %v2658 = vadd.f32 0.0, %v2657
    %v2659 = vpop.f32.mrf.mxu0
    %v2660 = vadd.f32 0.0, %v2659
    %v2661 = vpop.f32.mrf.mxu0
    %v2662 = vadd.f32 0.0, %v2661
    %v2663 = vpop.f32.mrf.mxu0
    %v2664 = vadd.f32 0.0, %v2663
    %2665 = vmatprep.mubr.bf16.mxu0 0
    %2666 = vmatmul.mubr.bf16.gmra.mxu0 %v2381
    %v2667 = vpop.f32.mrf.mxu0
    %v2668 = vadd.f32 0.0, %v2667
    %v2669 = vpop.f32.mrf.mxu0
    %v2670 = vadd.f32 0.0, %v2669
    %v2671 = vpop.f32.mrf.mxu0
    %v2672 = vadd.f32 0.0, %v2671
    %v2673 = vpop.f32.mrf.mxu0
    %v2674 = vadd.f32 0.0, %v2673
    %2675 = vmatprep.mubr.bf16.mxu0 0
    %2676 = vmatmul.mubr.bf16.gmra.mxu0 %v2382
    %v2677 = vpop.f32.mrf.mxu0
    %v2678 = vpop.f32.mrf.mxu0
    %v2679 = vpop.f32.mrf.mxu0
    %v2680 = vpop.f32.mrf.mxu0
    %2681 = vmatprep.mubr.bf16.mxu0 0
    %2682 = vmatmul.mubr.bf16.gmra.mxu0 %v2383
    %v2683 = vpop.f32.mrf.mxu0
    %v2684 = vpop.f32.mrf.mxu0
    %v2685 = vpop.f32.mrf.mxu0
    %v2686 = vpop.f32.mrf.mxu0
    %2687 = vmatprep.mubr.bf16.mxu0 0
    %2688 = vmatmul.mubr.bf16.gmra.mxu0 %v2384
    %v2689 = vpop.f32.mrf.mxu0
    %v2690 = vpop.f32.mrf.mxu0
    %v2691 = vpop.f32.mrf.mxu0
    %v2692 = vpop.f32.mrf.mxu0
    %2693 = vmatprep.mubr.bf16.mxu0 0
    %2694 = vmatmul.mubr.bf16.gmra.mxu0 %v2385
    %v2695 = vpop.f32.mrf.mxu0
    %v2696 = vpop.f32.mrf.mxu0
    %v2697 = vpop.f32.mrf.mxu0
    %v2698 = vpop.f32.mrf.mxu0
    %2699 = vdwg.mxu0
    %v2716 = vunpack.c.l.b16 %v2354
    %v2717 = vunpack.c.h.b16 %v2354
    %v2718 = vunpack.c.l.b16 %v2355
    %v2719 = vunpack.c.h.b16 %v2355
    %v2720 = vunpack.c.l.b16 %v2356
    %v2721 = vunpack.c.h.b16 %v2356
    %v2722 = vunpack.c.l.b16 %v2357
    %v2723 = vunpack.c.h.b16 %v2357
    %v2724 = vunpack.c.l.b16 %v2358
    %v2725 = vunpack.c.h.b16 %v2358
    %v2726 = vunpack.c.l.b16 %v2359
    %v2727 = vunpack.c.h.b16 %v2359
    %v2728 = vunpack.c.l.b16 %v2360
    %v2729 = vunpack.c.h.b16 %v2360
    %v2730 = vunpack.c.l.b16 %v2361
    %v2731 = vunpack.c.h.b16 %v2361
    %v2732 = vunpack.c.l.b16 %v2362
    %v2733 = vunpack.c.h.b16 %v2362
    %v2734 = vunpack.c.l.b16 %v2363
    %v2735 = vunpack.c.h.b16 %v2363
    %v2736 = vunpack.c.l.b16 %v2364
    %v2737 = vunpack.c.h.b16 %v2364
    %v2738 = vunpack.c.l.b16 %v2365
    %v2739 = vunpack.c.h.b16 %v2365
    %v2740 = vunpack.c.l.b16 %v2366
    %v2741 = vunpack.c.h.b16 %v2366
    %v2742 = vunpack.c.l.b16 %v2367
    %v2743 = vunpack.c.h.b16 %v2367
    %v2744 = vunpack.c.l.b16 %v2368
    %v2745 = vunpack.c.h.b16 %v2368
    %v2746 = vunpack.c.l.b16 %v2369
    %v2747 = vunpack.c.h.b16 %v2369
    %v2748 = vpack.c.b16 %v2718, %v2716
    %v2749 = vpack.c.b16 %v2719, %v2717
    %v2750 = vpack.c.b16 %v2722, %v2720
    %v2751 = vpack.c.b16 %v2723, %v2721
    %v2752 = vpack.c.b16 %v2726, %v2724
    %v2753 = vpack.c.b16 %v2727, %v2725
    %v2754 = vpack.c.b16 %v2730, %v2728
    %v2755 = vpack.c.b16 %v2731, %v2729
    %v2756 = vpack.c.b16 %v2734, %v2732
    %v2757 = vpack.c.b16 %v2735, %v2733
    %v2758 = vpack.c.b16 %v2738, %v2736
    %v2759 = vpack.c.b16 %v2739, %v2737
    %v2760 = vpack.c.b16 %v2742, %v2740
    %v2761 = vpack.c.b16 %v2743, %v2741
    %v2762 = vpack.c.b16 %v2746, %v2744
    %v2763 = vpack.c.b16 %v2747, %v2745
    %2780 = vmatprep.subr.bf16.mxu0 %v2763
    %2781 = vmatpush1.bf16.msra.mxu0 %v2762
    %2782 = vmatprep.subr.bf16.mxu0 %v2761
    %2783 = vmatpush1.bf16.msra.mxu0 %v2760
    %2784 = vmatprep.subr.bf16.mxu0 %v2759
    %2785 = vmatpush1.bf16.msra.mxu0 %v2758
    %2786 = vmatprep.subr.bf16.mxu0 %v2757
    %2787 = vmatpush1.bf16.msra.mxu0 %v2756
    %2788 = vmatprep.subr.bf16.mxu0 %v2755
    %2789 = vmatpush1.bf16.msra.mxu0 %v2754
    %2790 = vmatprep.subr.bf16.mxu0 %v2753
    %2791 = vmatpush1.bf16.msra.mxu0 %v2752
    %2792 = vmatprep.subr.bf16.mxu0 %v2751
    %2793 = vmatpush1.bf16.msra.mxu0 %v2750
    %2794 = vmatprep.subr.bf16.mxu0 %v2749
    %2795 = vmatpush1.bf16.msra.mxu0 %v2748
    %2796 = vmatprep.subr.bf16.mxu0 0
    %2797 = vmatpush2.bf16.msra.mxu0 0
    %2798 = vmatprep.subr.bf16.mxu0 0
    %2799 = vmatpush2.bf16.msra.mxu0 0
    %2800 = vmatprep.subr.bf16.mxu0 0
    %2801 = vmatpush2.bf16.msra.mxu0 0
    %2802 = vmatprep.subr.bf16.mxu0 0
    %2803 = vmatpush2.bf16.msra.mxu0 0
    %2804 = vmatprep.subr.bf16.mxu0 0
    %2805 = vmatpush2.bf16.msra.mxu0 0
    %2806 = vmatprep.subr.bf16.mxu0 0
    %2807 = vmatpush2.bf16.msra.mxu0 0
    %2808 = vmatprep.subr.bf16.mxu0 0
    %2809 = vmatpush2.bf16.msra.mxu0 0
    %2810 = vmatprep.subr.bf16.mxu0 0
    %2811 = vmatpush2.bf16.msra.mxu0 0
    %2812 = vmatprep.mubr.bf16.mxu0 0
    %2813 = vmatmul.mubr.bf16.gmra.mxu0 %v1141
    %v2814 = vpop.f32.mrf.mxu0
    %v2815 = vadd.f32 %v2518, %v2814
    %v2816 = vpop.f32.mrf.mxu0
    %v2817 = vadd.f32 %v2520, %v2816
    %v2818 = vpop.f32.mrf.mxu0
    %v2819 = vadd.f32 %v2522, %v2818
    %v2820 = vpop.f32.mrf.mxu0
    %v2821 = vadd.f32 %v2524, %v2820
    %2822 = vmatprep.mubr.bf16.mxu0 0
    %2823 = vmatmul.mubr.bf16.gmra.mxu0 %v1141
    %v2824 = vpop.f32.mrf.mxu0
    %v2825 = vadd.f32 %v2528, %v2824
    %v2826 = vpop.f32.mrf.mxu0
    %v2827 = vadd.f32 %v2530, %v2826
    %v2828 = vpop.f32.mrf.mxu0
    %v2829 = vadd.f32 %v2532, %v2828
    %v2830 = vpop.f32.mrf.mxu0
    %v2831 = vadd.f32 %v2534, %v2830
    %2832 = vmatprep.mubr.bf16.mxu0 0
    %2833 = vmatmul.mubr.bf16.gmra.mxu0 %v1141
    %v2834 = vpop.f32.mrf.mxu0
    %v2835 = vadd.f32 %v2538, %v2834
    %v2836 = vpop.f32.mrf.mxu0
    %v2837 = vadd.f32 %v2540, %v2836
    %v2838 = vpop.f32.mrf.mxu0
    %v2839 = vadd.f32 %v2542, %v2838
    %v2840 = vpop.f32.mrf.mxu0
    %v2841 = vadd.f32 %v2544, %v2840
    %2842 = vmatprep.mubr.bf16.mxu0 0
    %2843 = vmatmul.mubr.bf16.gmra.mxu0 %v1141
    %v2844 = vpop.f32.mrf.mxu0
    %v2845 = vadd.f32 %v2548, %v2844
    %v2846 = vpop.f32.mrf.mxu0
    %v2847 = vadd.f32 %v2550, %v2846
    %v2848 = vpop.f32.mrf.mxu0
    %v2849 = vadd.f32 %v2552, %v2848
    %v2850 = vpop.f32.mrf.mxu0
    %v2851 = vadd.f32 %v2554, %v2850
    %2852 = vmatprep.mubr.bf16.mxu0 0
    %2853 = vmatmul.mubr.bf16.gmra.mxu0 %v2338
    %v2854 = vpop.f32.mrf.mxu0
    %v2855 = vadd.f32 %v2558, %v2854
    %v2856 = vpop.f32.mrf.mxu0
    %v2857 = vadd.f32 %v2560, %v2856
    %v2858 = vpop.f32.mrf.mxu0
    %v2859 = vadd.f32 %v2562, %v2858
    %v2860 = vpop.f32.mrf.mxu0
    %v2861 = vadd.f32 %v2564, %v2860
    %2862 = vmatprep.mubr.bf16.mxu0 0
    %2863 = vmatmul.mubr.bf16.gmra.mxu0 %v2339
    %v2864 = vpop.f32.mrf.mxu0
    %v2865 = vadd.f32 %v2568, %v2864
    %v2866 = vpop.f32.mrf.mxu0
    %v2867 = vadd.f32 %v2570, %v2866
    %v2868 = vpop.f32.mrf.mxu0
    %v2869 = vadd.f32 %v2572, %v2868
    %v2870 = vpop.f32.mrf.mxu0
    %v2871 = vadd.f32 %v2574, %v2870
    %2872 = vmatprep.mubr.bf16.mxu0 0
    %2873 = vmatmul.mubr.bf16.gmra.mxu0 %v2340
    %v2874 = vpop.f32.mrf.mxu0
    %v2875 = vadd.f32 %v2578, %v2874
    %v2876 = vpop.f32.mrf.mxu0
    %v2877 = vadd.f32 %v2580, %v2876
    %v2878 = vpop.f32.mrf.mxu0
    %v2879 = vadd.f32 %v2582, %v2878
    %v2880 = vpop.f32.mrf.mxu0
    %v2881 = vadd.f32 %v2584, %v2880
    %2882 = vmatprep.mubr.bf16.mxu0 0
    %2883 = vmatmul.mubr.bf16.gmra.mxu0 %v2341
    %v2884 = vpop.f32.mrf.mxu0
    %v2885 = vadd.f32 %v2588, %v2884
    %v2886 = vpop.f32.mrf.mxu0
    %v2887 = vadd.f32 %v2590, %v2886
    %v2888 = vpop.f32.mrf.mxu0
    %v2889 = vadd.f32 %v2592, %v2888
    %v2890 = vpop.f32.mrf.mxu0
    %v2891 = vadd.f32 %v2594, %v2890
    %2892 = vmatprep.mubr.bf16.mxu0 0
    %2893 = vmatmul.mubr.bf16.gmra.mxu0 %v2342
    %v2894 = vpop.f32.mrf.mxu0
    %v2895 = vadd.f32 %v2598, %v2894
    %v2896 = vpop.f32.mrf.mxu0
    %v2897 = vadd.f32 %v2600, %v2896
    %v2898 = vpop.f32.mrf.mxu0
    %v2899 = vadd.f32 %v2602, %v2898
    %v2900 = vpop.f32.mrf.mxu0
    %v2901 = vadd.f32 %v2604, %v2900
    %2902 = vmatprep.mubr.bf16.mxu0 0
    %2903 = vmatmul.mubr.bf16.gmra.mxu0 %v2343
    %v2904 = vpop.f32.mrf.mxu0
    %v2905 = vadd.f32 %v2608, %v2904
    %v2906 = vpop.f32.mrf.mxu0
    %v2907 = vadd.f32 %v2610, %v2906
    %v2908 = vpop.f32.mrf.mxu0
    %v2909 = vadd.f32 %v2612, %v2908
    %v2910 = vpop.f32.mrf.mxu0
    %v2911 = vadd.f32 %v2614, %v2910
    %2912 = vmatprep.mubr.bf16.mxu0 0
    %2913 = vmatmul.mubr.bf16.gmra.mxu0 %v2344
    %v2914 = vpop.f32.mrf.mxu0
    %v2915 = vadd.f32 %v2618, %v2914
    %v2916 = vpop.f32.mrf.mxu0
    %v2917 = vadd.f32 %v2620, %v2916
    %v2918 = vpop.f32.mrf.mxu0
    %v2919 = vadd.f32 %v2622, %v2918
    %v2920 = vpop.f32.mrf.mxu0
    %v2921 = vadd.f32 %v2624, %v2920
    %2922 = vmatprep.mubr.bf16.mxu0 0
    %2923 = vmatmul.mubr.bf16.gmra.mxu0 %v2345
    %v2924 = vpop.f32.mrf.mxu0
    %v2925 = vadd.f32 %v2628, %v2924
    %v2926 = vpop.f32.mrf.mxu0
    %v2927 = vadd.f32 %v2630, %v2926
    %v2928 = vpop.f32.mrf.mxu0
    %v2929 = vadd.f32 %v2632, %v2928
    %v2930 = vpop.f32.mrf.mxu0
    %v2931 = vadd.f32 %v2634, %v2930
    %2932 = vmatprep.mubr.bf16.mxu0 0
    %2933 = vmatmul.mubr.bf16.gmra.mxu0 %v2346
    %v2934 = vpop.f32.mrf.mxu0
    %v2935 = vadd.f32 %v2638, %v2934
    %v2936 = vpop.f32.mrf.mxu0
    %v2937 = vadd.f32 %v2640, %v2936
    %v2938 = vpop.f32.mrf.mxu0
    %v2939 = vadd.f32 %v2642, %v2938
    %v2940 = vpop.f32.mrf.mxu0
    %v2941 = vadd.f32 %v2644, %v2940
    %2942 = vmatprep.mubr.bf16.mxu0 0
    %2943 = vmatmul.mubr.bf16.gmra.mxu0 %v2347
    %v2944 = vpop.f32.mrf.mxu0
    %v2945 = vadd.f32 %v2648, %v2944
    %v2946 = vpop.f32.mrf.mxu0
    %v2947 = vadd.f32 %v2650, %v2946
    %v2948 = vpop.f32.mrf.mxu0
    %v2949 = vadd.f32 %v2652, %v2948
    %v2950 = vpop.f32.mrf.mxu0
    %v2951 = vadd.f32 %v2654, %v2950
    %2952 = vmatprep.mubr.bf16.mxu0 0
    %2953 = vmatmul.mubr.bf16.gmra.mxu0 %v2348
    %v2954 = vpop.f32.mrf.mxu0
    %v2955 = vadd.f32 %v2658, %v2954
    %v2956 = vpop.f32.mrf.mxu0
    %v2957 = vadd.f32 %v2660, %v2956
    %v2958 = vpop.f32.mrf.mxu0
    %v2959 = vadd.f32 %v2662, %v2958
    %v2960 = vpop.f32.mrf.mxu0
    %v2961 = vadd.f32 %v2664, %v2960
    %2962 = vmatprep.mubr.bf16.mxu0 0
    %2963 = vmatmul.mubr.bf16.gmra.mxu0 %v2349
    %v2964 = vpop.f32.mrf.mxu0
    %v2965 = vadd.f32 %v2668, %v2964
    %v2966 = vpop.f32.mrf.mxu0
    %v2967 = vadd.f32 %v2670, %v2966
    %v2968 = vpop.f32.mrf.mxu0
    %v2969 = vadd.f32 %v2672, %v2968
    %v2970 = vpop.f32.mrf.mxu0
    %v2971 = vadd.f32 %v2674, %v2970
    %2972 = vmatprep.mubr.bf16.mxu0 0
    %2973 = vmatmul.mubr.bf16.gmra.mxu0 %v2350
    %v2974 = vpop.f32.mrf.mxu0
    %v2975 = vpop.f32.mrf.mxu0
    %v2976 = vpop.f32.mrf.mxu0
    %v2977 = vpop.f32.mrf.mxu0
    %2978 = vmatprep.mubr.bf16.mxu0 0
    %2979 = vmatmul.mubr.bf16.gmra.mxu0 %v2351
    %v2980 = vpop.f32.mrf.mxu0
    %v2981 = vpop.f32.mrf.mxu0
    %v2982 = vpop.f32.mrf.mxu0
    %v2983 = vpop.f32.mrf.mxu0
    %2984 = vmatprep.mubr.bf16.mxu0 0
    %2985 = vmatmul.mubr.bf16.gmra.mxu0 %v2352
    %v2986 = vpop.f32.mrf.mxu0
    %v2987 = vpop.f32.mrf.mxu0
    %v2988 = vpop.f32.mrf.mxu0
    %v2989 = vpop.f32.mrf.mxu0
    %2990 = vmatprep.mubr.bf16.mxu0 0
    %2991 = vmatmul.mubr.bf16.gmra.mxu0 %v2353
    %v2992 = vpop.f32.mrf.mxu0
    %v2993 = vpop.f32.mrf.mxu0
    %v2994 = vpop.f32.mrf.mxu0
    %v2995 = vpop.f32.mrf.mxu0
    %2996 = vdwg.mxu0
    %s2997 = scalar_lea.vmem %s5, 256
    %v2998 = vld [vmem:[%s2997] sm:$0xff]
    %v2999 = vld [vmem:[%s2997 + $0x8] sm:$0xff]
    %v3000 = vld [vmem:[%s2997 + $0x10] sm:$0xff]
    %v3001 = vld [vmem:[%s2997 + $0x18] sm:$0xff]
    %v3002 = vld [vmem:[%s2997 + $0x20] sm:$0xff]
    %v3003 = vld [vmem:[%s2997 + $0x28] sm:$0xff]
    %v3004 = vld [vmem:[%s2997 + $0x30] sm:$0xff]
    %v3005 = vld [vmem:[%s2997 + $0x38] sm:$0xff]
    %v3006 = vld [vmem:[%s2997 + $0x40] sm:$0xff]
    %v3007 = vld [vmem:[%s2997 + $0x48] sm:$0xff]
    %v3008 = vld [vmem:[%s2997 + $0x50] sm:$0xff]
    %v3009 = vld [vmem:[%s2997 + $0x58] sm:$0xff]
    %v3010 = vld [vmem:[%s2997 + $0x60] sm:$0xff]
    %v3011 = vld [vmem:[%s2997 + $0x68] sm:$0xff]
    %v3012 = vld [vmem:[%s2997 + $0x70] sm:$0xff]
    %v3013 = vld [vmem:[%s2997 + $0x78] sm:$0xff]
    %v3030 = vunpack.c.l.b16 %v2998
    %v3031 = vunpack.c.h.b16 %v2998
    %v3032 = vunpack.c.l.b16 %v2999
    %v3033 = vunpack.c.h.b16 %v2999
    %v3034 = vunpack.c.l.b16 %v3000
    %v3035 = vunpack.c.h.b16 %v3000
    %v3036 = vunpack.c.l.b16 %v3001
    %v3037 = vunpack.c.h.b16 %v3001
    %v3038 = vunpack.c.l.b16 %v3002
    %v3039 = vunpack.c.h.b16 %v3002
    %v3040 = vunpack.c.l.b16 %v3003
    %v3041 = vunpack.c.h.b16 %v3003
    %v3042 = vunpack.c.l.b16 %v3004
    %v3043 = vunpack.c.h.b16 %v3004
    %v3044 = vunpack.c.l.b16 %v3005
    %v3045 = vunpack.c.h.b16 %v3005
    %v3046 = vunpack.c.l.b16 %v3006
    %v3047 = vunpack.c.h.b16 %v3006
    %v3048 = vunpack.c.l.b16 %v3007
    %v3049 = vunpack.c.h.b16 %v3007
    %v3050 = vunpack.c.l.b16 %v3008
    %v3051 = vunpack.c.h.b16 %v3008
    %v3052 = vunpack.c.l.b16 %v3009
    %v3053 = vunpack.c.h.b16 %v3009
    %v3054 = vunpack.c.l.b16 %v3010
    %v3055 = vunpack.c.h.b16 %v3010
    %v3056 = vunpack.c.l.b16 %v3011
    %v3057 = vunpack.c.h.b16 %v3011
    %v3058 = vunpack.c.l.b16 %v3012
    %v3059 = vunpack.c.h.b16 %v3012
    %v3060 = vunpack.c.l.b16 %v3013
    %v3061 = vunpack.c.h.b16 %v3013
    %v3062 = vpack.c.b16 %v3032, %v3030
    %v3063 = vpack.c.b16 %v3033, %v3031
    %v3064 = vpack.c.b16 %v3036, %v3034
    %v3065 = vpack.c.b16 %v3037, %v3035
    %v3066 = vpack.c.b16 %v3040, %v3038
    %v3067 = vpack.c.b16 %v3041, %v3039
    %v3068 = vpack.c.b16 %v3044, %v3042
    %v3069 = vpack.c.b16 %v3045, %v3043
    %v3070 = vpack.c.b16 %v3048, %v3046
    %v3071 = vpack.c.b16 %v3049, %v3047
    %v3072 = vpack.c.b16 %v3052, %v3050
    %v3073 = vpack.c.b16 %v3053, %v3051
    %v3074 = vpack.c.b16 %v3056, %v3054
    %v3075 = vpack.c.b16 %v3057, %v3055
    %v3076 = vpack.c.b16 %v3060, %v3058
    %v3077 = vpack.c.b16 %v3061, %v3059
    %3094 = vmatprep.subr.bf16.mxu0 %v3077
    %3095 = vmatpush1.bf16.msra.mxu0 %v3076
    %3096 = vmatprep.subr.bf16.mxu0 %v3075
    %3097 = vmatpush1.bf16.msra.mxu0 %v3074
    %3098 = vmatprep.subr.bf16.mxu0 %v3073
    %3099 = vmatpush1.bf16.msra.mxu0 %v3072
    %3100 = vmatprep.subr.bf16.mxu0 %v3071
    %3101 = vmatpush1.bf16.msra.mxu0 %v3070
    %3102 = vmatprep.subr.bf16.mxu0 %v3069
    %3103 = vmatpush1.bf16.msra.mxu0 %v3068
    %3104 = vmatprep.subr.bf16.mxu0 %v3067
    %3105 = vmatpush1.bf16.msra.mxu0 %v3066
    %3106 = vmatprep.subr.bf16.mxu0 %v3065
    %3107 = vmatpush1.bf16.msra.mxu0 %v3064
    %3108 = vmatprep.subr.bf16.mxu0 %v3063
    %3109 = vmatpush1.bf16.msra.mxu0 %v3062
    %3110 = vmatprep.subr.bf16.mxu0 0
    %3111 = vmatpush2.bf16.msra.mxu0 0
    %3112 = vmatprep.subr.bf16.mxu0 0
    %3113 = vmatpush2.bf16.msra.mxu0 0
    %3114 = vmatprep.subr.bf16.mxu0 0
    %3115 = vmatpush2.bf16.msra.mxu0 0
    %3116 = vmatprep.subr.bf16.mxu0 0
    %3117 = vmatpush2.bf16.msra.mxu0 0
    %3118 = vmatprep.subr.bf16.mxu0 0
    %3119 = vmatpush2.bf16.msra.mxu0 0
    %3120 = vmatprep.subr.bf16.mxu0 0
    %3121 = vmatpush2.bf16.msra.mxu0 0
    %3122 = vmatprep.subr.bf16.mxu0 0
    %3123 = vmatpush2.bf16.msra.mxu0 0
    %3124 = vmatprep.subr.bf16.mxu0 0
    %3125 = vmatpush2.bf16.msra.mxu0 0
    %3126 = vmatprep.mubr.bf16.mxu0 0
    %3127 = vmatmul.mubr.bf16.gmra.mxu0 %v2338
    %v3128 = vpop.f32.mrf.mxu0
    %v3129 = vadd.f32 0.0, %v3128
    %v3130 = vpop.f32.mrf.mxu0
    %v3131 = vadd.f32 0.0, %v3130
    %v3132 = vpop.f32.mrf.mxu0
    %v3133 = vadd.f32 0.0, %v3132
    %v3134 = vpop.f32.mrf.mxu0
    %v3135 = vadd.f32 0.0, %v3134
    %3136 = vmatprep.mubr.bf16.mxu0 0
    %3137 = vmatmul.mubr.bf16.gmra.mxu0 %v2339
    %v3138 = vpop.f32.mrf.mxu0
    %v3139 = vadd.f32 0.0, %v3138
    %v3140 = vpop.f32.mrf.mxu0
    %v3141 = vadd.f32 0.0, %v3140
    %v3142 = vpop.f32.mrf.mxu0
    %v3143 = vadd.f32 0.0, %v3142
    %v3144 = vpop.f32.mrf.mxu0
    %v3145 = vadd.f32 0.0, %v3144
    %3146 = vmatprep.mubr.bf16.mxu0 0
    %3147 = vmatmul.mubr.bf16.gmra.mxu0 %v2340
    %v3148 = vpop.f32.mrf.mxu0
    %v3149 = vadd.f32 0.0, %v3148
    %v3150 = vpop.f32.mrf.mxu0
    %v3151 = vadd.f32 0.0, %v3150
    %v3152 = vpop.f32.mrf.mxu0
    %v3153 = vadd.f32 0.0, %v3152
    %v3154 = vpop.f32.mrf.mxu0
    %v3155 = vadd.f32 0.0, %v3154
    %3156 = vmatprep.mubr.bf16.mxu0 0
    %3157 = vmatmul.mubr.bf16.gmra.mxu0 %v2341
    %v3158 = vpop.f32.mrf.mxu0
    %v3159 = vadd.f32 0.0, %v3158
    %v3160 = vpop.f32.mrf.mxu0
    %v3161 = vadd.f32 0.0, %v3160
    %v3162 = vpop.f32.mrf.mxu0
    %v3163 = vadd.f32 0.0, %v3162
    %v3164 = vpop.f32.mrf.mxu0
    %v3165 = vadd.f32 0.0, %v3164
    %3166 = vmatprep.mubr.bf16.mxu0 0
    %3167 = vmatmul.mubr.bf16.gmra.mxu0 %v2342
    %v3168 = vpop.f32.mrf.mxu0
    %v3169 = vadd.f32 0.0, %v3168
    %v3170 = vpop.f32.mrf.mxu0
    %v3171 = vadd.f32 0.0, %v3170
    %v3172 = vpop.f32.mrf.mxu0
    %v3173 = vadd.f32 0.0, %v3172
    %v3174 = vpop.f32.mrf.mxu0
    %v3175 = vadd.f32 0.0, %v3174
    %3176 = vmatprep.mubr.bf16.mxu0 0
    %3177 = vmatmul.mubr.bf16.gmra.mxu0 %v2343
    %v3178 = vpop.f32.mrf.mxu0
    %v3179 = vadd.f32 0.0, %v3178
    %v3180 = vpop.f32.mrf.mxu0
    %v3181 = vadd.f32 0.0, %v3180
    %v3182 = vpop.f32.mrf.mxu0
    %v3183 = vadd.f32 0.0, %v3182
    %v3184 = vpop.f32.mrf.mxu0
    %v3185 = vadd.f32 0.0, %v3184
    %3186 = vmatprep.mubr.bf16.mxu0 0
    %3187 = vmatmul.mubr.bf16.gmra.mxu0 %v2344
    %v3188 = vpop.f32.mrf.mxu0
    %v3189 = vadd.f32 0.0, %v3188
    %v3190 = vpop.f32.mrf.mxu0
    %v3191 = vadd.f32 0.0, %v3190
    %v3192 = vpop.f32.mrf.mxu0
    %v3193 = vadd.f32 0.0, %v3192
    %v3194 = vpop.f32.mrf.mxu0
    %v3195 = vadd.f32 0.0, %v3194
    %3196 = vmatprep.mubr.bf16.mxu0 0
    %3197 = vmatmul.mubr.bf16.gmra.mxu0 %v2345
    %v3198 = vpop.f32.mrf.mxu0
    %v3199 = vadd.f32 0.0, %v3198
    %v3200 = vpop.f32.mrf.mxu0
    %v3201 = vadd.f32 0.0, %v3200
    %v3202 = vpop.f32.mrf.mxu0
    %v3203 = vadd.f32 0.0, %v3202
    %v3204 = vpop.f32.mrf.mxu0
    %v3205 = vadd.f32 0.0, %v3204
    %3206 = vmatprep.mubr.bf16.mxu0 0
    %3207 = vmatmul.mubr.bf16.gmra.mxu0 %v2346
    %v3208 = vpop.f32.mrf.mxu0
    %v3209 = vadd.f32 0.0, %v3208
    %v3210 = vpop.f32.mrf.mxu0
    %v3211 = vadd.f32 0.0, %v3210
    %v3212 = vpop.f32.mrf.mxu0
    %v3213 = vadd.f32 0.0, %v3212
    %v3214 = vpop.f32.mrf.mxu0
    %v3215 = vadd.f32 0.0, %v3214
    %3216 = vmatprep.mubr.bf16.mxu0 0
    %3217 = vmatmul.mubr.bf16.gmra.mxu0 %v2347
    %v3218 = vpop.f32.mrf.mxu0
    %v3219 = vadd.f32 0.0, %v3218
    %v3220 = vpop.f32.mrf.mxu0
    %v3221 = vadd.f32 0.0, %v3220
    %v3222 = vpop.f32.mrf.mxu0
    %v3223 = vadd.f32 0.0, %v3222
    %v3224 = vpop.f32.mrf.mxu0
    %v3225 = vadd.f32 0.0, %v3224
    %3226 = vmatprep.mubr.bf16.mxu0 0
    %3227 = vmatmul.mubr.bf16.gmra.mxu0 %v2348
    %v3228 = vpop.f32.mrf.mxu0
    %v3229 = vadd.f32 0.0, %v3228
    %v3230 = vpop.f32.mrf.mxu0
    %v3231 = vadd.f32 0.0, %v3230
    %v3232 = vpop.f32.mrf.mxu0
    %v3233 = vadd.f32 0.0, %v3232
    %v3234 = vpop.f32.mrf.mxu0
    %v3235 = vadd.f32 0.0, %v3234
    %3236 = vmatprep.mubr.bf16.mxu0 0
    %3237 = vmatmul.mubr.bf16.gmra.mxu0 %v2349
    %v3238 = vpop.f32.mrf.mxu0
    %v3239 = vadd.f32 0.0, %v3238
    %v3240 = vpop.f32.mrf.mxu0
    %v3241 = vadd.f32 0.0, %v3240
    %v3242 = vpop.f32.mrf.mxu0
    %v3243 = vadd.f32 0.0, %v3242
    %v3244 = vpop.f32.mrf.mxu0
    %v3245 = vadd.f32 0.0, %v3244
    %3246 = vmatprep.mubr.bf16.mxu0 0
    %3247 = vmatmul.mubr.bf16.gmra.mxu0 %v2350
    %v3248 = vpop.f32.mrf.mxu0
    %v3249 = vadd.f32 0.0, %v3248
    %v3250 = vpop.f32.mrf.mxu0
    %v3251 = vadd.f32 0.0, %v3250
    %v3252 = vpop.f32.mrf.mxu0
    %v3253 = vadd.f32 0.0, %v3252
    %v3254 = vpop.f32.mrf.mxu0
    %v3255 = vadd.f32 0.0, %v3254
    %3256 = vmatprep.mubr.bf16.mxu0 0
    %3257 = vmatmul.mubr.bf16.gmra.mxu0 %v2351
    %v3258 = vpop.f32.mrf.mxu0
    %v3259 = vadd.f32 0.0, %v3258
    %v3260 = vpop.f32.mrf.mxu0
    %v3261 = vadd.f32 0.0, %v3260
    %v3262 = vpop.f32.mrf.mxu0
    %v3263 = vadd.f32 0.0, %v3262
    %v3264 = vpop.f32.mrf.mxu0
    %v3265 = vadd.f32 0.0, %v3264
    %3266 = vmatprep.mubr.bf16.mxu0 0
    %3267 = vmatmul.mubr.bf16.gmra.mxu0 %v2352
    %v3268 = vpop.f32.mrf.mxu0
    %v3269 = vadd.f32 0.0, %v3268
    %v3270 = vpop.f32.mrf.mxu0
    %v3271 = vadd.f32 0.0, %v3270
    %v3272 = vpop.f32.mrf.mxu0
    %v3273 = vadd.f32 0.0, %v3272
    %v3274 = vpop.f32.mrf.mxu0
    %v3275 = vadd.f32 0.0, %v3274
    %3276 = vmatprep.mubr.bf16.mxu0 0
    %3277 = vmatmul.mubr.bf16.gmra.mxu0 %v2353
    %v3278 = vpop.f32.mrf.mxu0
    %v3279 = vadd.f32 0.0, %v3278
    %v3280 = vpop.f32.mrf.mxu0
    %v3281 = vadd.f32 0.0, %v3280
    %v3282 = vpop.f32.mrf.mxu0
    %v3283 = vadd.f32 0.0, %v3282
    %v3284 = vpop.f32.mrf.mxu0
    %v3285 = vadd.f32 0.0, %v3284
    %3286 = vmatprep.mubr.bf16.mxu0 0
    %3287 = vmatmul.mubr.bf16.gmra.mxu0 %v1141
    %v3288 = vpop.f32.mrf.mxu0
    %v3289 = vpop.f32.mrf.mxu0
    %v3290 = vpop.f32.mrf.mxu0
    %v3291 = vpop.f32.mrf.mxu0
    %3292 = vmatprep.mubr.bf16.mxu0 0
    %3293 = vmatmul.mubr.bf16.gmra.mxu0 %v1141
    %v3294 = vpop.f32.mrf.mxu0
    %v3295 = vpop.f32.mrf.mxu0
    %v3296 = vpop.f32.mrf.mxu0
    %v3297 = vpop.f32.mrf.mxu0
    %3298 = vmatprep.mubr.bf16.mxu0 0
    %3299 = vmatmul.mubr.bf16.gmra.mxu0 %v1141
    %v3300 = vpop.f32.mrf.mxu0
    %v3301 = vpop.f32.mrf.mxu0
    %v3302 = vpop.f32.mrf.mxu0
    %v3303 = vpop.f32.mrf.mxu0
    %3304 = vmatprep.mubr.bf16.mxu0 0
    %3305 = vmatmul.mubr.bf16.gmra.mxu0 %v1141
    %v3306 = vpop.f32.mrf.mxu0
    %v3307 = vpop.f32.mrf.mxu0
    %v3308 = vpop.f32.mrf.mxu0
    %v3309 = vpop.f32.mrf.mxu0
    %3310 = vdwg.mxu0
    %v3311 = vadd.f32 %v2815, %v3129
    %v3312 = vadd.f32 %v2817, %v3131
    %v3313 = vadd.f32 %v2819, %v3133
    %v3314 = vadd.f32 %v2821, %v3135
    %v3315 = vadd.f32 %v2825, %v3139
    %v3316 = vadd.f32 %v2827, %v3141
    %v3317 = vadd.f32 %v2829, %v3143
    %v3318 = vadd.f32 %v2831, %v3145
    %v3319 = vadd.f32 %v2835, %v3149
    %v3320 = vadd.f32 %v2837, %v3151
    %v3321 = vadd.f32 %v2839, %v3153
    %v3322 = vadd.f32 %v2841, %v3155
    %v3323 = vadd.f32 %v2845, %v3159
    %v3324 = vadd.f32 %v2847, %v3161
    %v3325 = vadd.f32 %v2849, %v3163
    %v3326 = vadd.f32 %v2851, %v3165
    %v3327 = vadd.f32 %v2855, %v3169
    %v3328 = vadd.f32 %v2857, %v3171
    %v3329 = vadd.f32 %v2859, %v3173
    %v3330 = vadd.f32 %v2861, %v3175
    %v3331 = vadd.f32 %v2865, %v3179
    %v3332 = vadd.f32 %v2867, %v3181
    %v3333 = vadd.f32 %v2869, %v3183
    %v3334 = vadd.f32 %v2871, %v3185
    %v3335 = vadd.f32 %v2875, %v3189
    %v3336 = vadd.f32 %v2877, %v3191
    %v3337 = vadd.f32 %v2879, %v3193
    %v3338 = vadd.f32 %v2881, %v3195
    %v3339 = vadd.f32 %v2885, %v3199
    %v3340 = vadd.f32 %v2887, %v3201
    %v3341 = vadd.f32 %v2889, %v3203
    %v3342 = vadd.f32 %v2891, %v3205
    %v3343 = vadd.f32 %v2895, %v3209
    %v3344 = vadd.f32 %v2897, %v3211
    %v3345 = vadd.f32 %v2899, %v3213
    %v3346 = vadd.f32 %v2901, %v3215
    %v3347 = vadd.f32 %v2905, %v3219
    %v3348 = vadd.f32 %v2907, %v3221
    %v3349 = vadd.f32 %v2909, %v3223
    %v3350 = vadd.f32 %v2911, %v3225
    %v3351 = vadd.f32 %v2915, %v3229
    %v3352 = vadd.f32 %v2917, %v3231
    %v3353 = vadd.f32 %v2919, %v3233
    %v3354 = vadd.f32 %v2921, %v3235
    %v3355 = vadd.f32 %v2925, %v3239
    %v3356 = vadd.f32 %v2927, %v3241
    %v3357 = vadd.f32 %v2929, %v3243
    %v3358 = vadd.f32 %v2931, %v3245
    %v3359 = vadd.f32 %v2935, %v3249
    %v3360 = vadd.f32 %v2937, %v3251
    %v3361 = vadd.f32 %v2939, %v3253
    %v3362 = vadd.f32 %v2941, %v3255
    %v3363 = vadd.f32 %v2945, %v3259
    %v3364 = vadd.f32 %v2947, %v3261
    %v3365 = vadd.f32 %v2949, %v3263
    %v3366 = vadd.f32 %v2951, %v3265
    %v3367 = vadd.f32 %v2955, %v3269
    %v3368 = vadd.f32 %v2957, %v3271
    %v3369 = vadd.f32 %v2959, %v3273
    %v3370 = vadd.f32 %v2961, %v3275
    %v3371 = vadd.f32 %v2965, %v3279
    %v3372 = vadd.f32 %v2967, %v3281
    %v3373 = vadd.f32 %v2969, %v3283
    %v3374 = vadd.f32 %v2971, %v3285
    %s3375 = scalar_lea.vmem %s5, 384
    %v3376 = vld [vmem:[%s3375] sm:$0xff]
    %v3377 = vld [vmem:[%s3375 + $0x8] sm:$0xff]
    %v3378 = vld [vmem:[%s3375 + $0x10] sm:$0xff]
    %v3379 = vld [vmem:[%s3375 + $0x18] sm:$0xff]
    %v3380 = vld [vmem:[%s3375 + $0x20] sm:$0xff]
    %v3381 = vld [vmem:[%s3375 + $0x28] sm:$0xff]
    %v3382 = vld [vmem:[%s3375 + $0x30] sm:$0xff]
    %v3383 = vld [vmem:[%s3375 + $0x38] sm:$0xff]
    %v3384 = vld [vmem:[%s3375 + $0x40] sm:$0xff]
    %v3385 = vld [vmem:[%s3375 + $0x48] sm:$0xff]
    %v3386 = vld [vmem:[%s3375 + $0x50] sm:$0xff]
    %v3387 = vld [vmem:[%s3375 + $0x58] sm:$0xff]
    %v3388 = vld [vmem:[%s3375 + $0x60] sm:$0xff]
    %v3389 = vld [vmem:[%s3375 + $0x68] sm:$0xff]
    %v3390 = vld [vmem:[%s3375 + $0x70] sm:$0xff]
    %v3391 = vld [vmem:[%s3375 + $0x78] sm:$0xff]
    %v3408 = vunpack.c.l.b16 %v3376
    %v3409 = vunpack.c.h.b16 %v3376
    %v3410 = vunpack.c.l.b16 %v3377
    %v3411 = vunpack.c.h.b16 %v3377
    %v3412 = vunpack.c.l.b16 %v3378
    %v3413 = vunpack.c.h.b16 %v3378
    %v3414 = vunpack.c.l.b16 %v3379
    %v3415 = vunpack.c.h.b16 %v3379
    %v3416 = vunpack.c.l.b16 %v3380
    %v3417 = vunpack.c.h.b16 %v3380
    %v3418 = vunpack.c.l.b16 %v3381
    %v3419 = vunpack.c.h.b16 %v3381
    %v3420 = vunpack.c.l.b16 %v3382
    %v3421 = vunpack.c.h.b16 %v3382
    %v3422 = vunpack.c.l.b16 %v3383
    %v3423 = vunpack.c.h.b16 %v3383
    %v3424 = vunpack.c.l.b16 %v3384
    %v3425 = vunpack.c.h.b16 %v3384
    %v3426 = vunpack.c.l.b16 %v3385
    %v3427 = vunpack.c.h.b16 %v3385
    %v3428 = vunpack.c.l.b16 %v3386
    %v3429 = vunpack.c.h.b16 %v3386
    %v3430 = vunpack.c.l.b16 %v3387
    %v3431 = vunpack.c.h.b16 %v3387
    %v3432 = vunpack.c.l.b16 %v3388
    %v3433 = vunpack.c.h.b16 %v3388
    %v3434 = vunpack.c.l.b16 %v3389
    %v3435 = vunpack.c.h.b16 %v3389
    %v3436 = vunpack.c.l.b16 %v3390
    %v3437 = vunpack.c.h.b16 %v3390
    %v3438 = vunpack.c.l.b16 %v3391
    %v3439 = vunpack.c.h.b16 %v3391
    %v3440 = vpack.c.b16 %v3410, %v3408
    %v3441 = vpack.c.b16 %v3411, %v3409
    %v3442 = vpack.c.b16 %v3414, %v3412
    %v3443 = vpack.c.b16 %v3415, %v3413
    %v3444 = vpack.c.b16 %v3418, %v3416
    %v3445 = vpack.c.b16 %v3419, %v3417
    %v3446 = vpack.c.b16 %v3422, %v3420
    %v3447 = vpack.c.b16 %v3423, %v3421
    %v3448 = vpack.c.b16 %v3426, %v3424
    %v3449 = vpack.c.b16 %v3427, %v3425
    %v3450 = vpack.c.b16 %v3430, %v3428
    %v3451 = vpack.c.b16 %v3431, %v3429
    %v3452 = vpack.c.b16 %v3434, %v3432
    %v3453 = vpack.c.b16 %v3435, %v3433
    %v3454 = vpack.c.b16 %v3438, %v3436
    %v3455 = vpack.c.b16 %v3439, %v3437
    %3472 = vmatprep.subr.bf16.mxu0 %v3455
    %3473 = vmatpush1.bf16.msra.mxu0 %v3454
    %3474 = vmatprep.subr.bf16.mxu0 %v3453
    %3475 = vmatpush1.bf16.msra.mxu0 %v3452
    %3476 = vmatprep.subr.bf16.mxu0 %v3451
    %3477 = vmatpush1.bf16.msra.mxu0 %v3450
    %3478 = vmatprep.subr.bf16.mxu0 %v3449
    %3479 = vmatpush1.bf16.msra.mxu0 %v3448
    %3480 = vmatprep.subr.bf16.mxu0 %v3447
    %3481 = vmatpush1.bf16.msra.mxu0 %v3446
    %3482 = vmatprep.subr.bf16.mxu0 %v3445
    %3483 = vmatpush1.bf16.msra.mxu0 %v3444
    %3484 = vmatprep.subr.bf16.mxu0 %v3443
    %3485 = vmatpush1.bf16.msra.mxu0 %v3442
    %3486 = vmatprep.subr.bf16.mxu0 %v3441
    %3487 = vmatpush1.bf16.msra.mxu0 %v3440
    %3488 = vmatprep.subr.bf16.mxu0 0
    %3489 = vmatpush2.bf16.msra.mxu0 0
    %3490 = vmatprep.subr.bf16.mxu0 0
    %3491 = vmatpush2.bf16.msra.mxu0 0
    %3492 = vmatprep.subr.bf16.mxu0 0
    %3493 = vmatpush2.bf16.msra.mxu0 0
    %3494 = vmatprep.subr.bf16.mxu0 0
    %3495 = vmatpush2.bf16.msra.mxu0 0
    %3496 = vmatprep.subr.bf16.mxu0 0
    %3497 = vmatpush2.bf16.msra.mxu0 0
    %3498 = vmatprep.subr.bf16.mxu0 0
    %3499 = vmatpush2.bf16.msra.mxu0 0
    %3500 = vmatprep.subr.bf16.mxu0 0
    %3501 = vmatpush2.bf16.msra.mxu0 0
    %3502 = vmatprep.subr.bf16.mxu0 0
    %3503 = vmatpush2.bf16.msra.mxu0 0
    %3504 = vmatprep.mubr.bf16.mxu0 0
    %3505 = vmatmul.mubr.bf16.gmra.mxu0 %v2370
    %v3506 = vpop.f32.mrf.mxu0
    %v3507 = vadd.f32 0.0, %v3506
    %v3508 = vpop.f32.mrf.mxu0
    %v3509 = vadd.f32 0.0, %v3508
    %v3510 = vpop.f32.mrf.mxu0
    %v3511 = vadd.f32 0.0, %v3510
    %v3512 = vpop.f32.mrf.mxu0
    %v3513 = vadd.f32 0.0, %v3512
    %3514 = vmatprep.mubr.bf16.mxu0 0
    %3515 = vmatmul.mubr.bf16.gmra.mxu0 %v2371
    %v3516 = vpop.f32.mrf.mxu0
    %v3517 = vadd.f32 0.0, %v3516
    %v3518 = vpop.f32.mrf.mxu0
    %v3519 = vadd.f32 0.0, %v3518
    %v3520 = vpop.f32.mrf.mxu0
    %v3521 = vadd.f32 0.0, %v3520
    %v3522 = vpop.f32.mrf.mxu0
    %v3523 = vadd.f32 0.0, %v3522
    %3524 = vmatprep.mubr.bf16.mxu0 0
    %3525 = vmatmul.mubr.bf16.gmra.mxu0 %v2372
    %v3526 = vpop.f32.mrf.mxu0
    %v3527 = vadd.f32 0.0, %v3526
    %v3528 = vpop.f32.mrf.mxu0
    %v3529 = vadd.f32 0.0, %v3528
    %v3530 = vpop.f32.mrf.mxu0
    %v3531 = vadd.f32 0.0, %v3530
    %v3532 = vpop.f32.mrf.mxu0
    %v3533 = vadd.f32 0.0, %v3532
    %3534 = vmatprep.mubr.bf16.mxu0 0
    %3535 = vmatmul.mubr.bf16.gmra.mxu0 %v2373
    %v3536 = vpop.f32.mrf.mxu0
    %v3537 = vadd.f32 0.0, %v3536
    %v3538 = vpop.f32.mrf.mxu0
    %v3539 = vadd.f32 0.0, %v3538
    %v3540 = vpop.f32.mrf.mxu0
    %v3541 = vadd.f32 0.0, %v3540
    %v3542 = vpop.f32.mrf.mxu0
    %v3543 = vadd.f32 0.0, %v3542
    %3544 = vmatprep.mubr.bf16.mxu0 0
    %3545 = vmatmul.mubr.bf16.gmra.mxu0 %v2374
    %v3546 = vpop.f32.mrf.mxu0
    %v3547 = vadd.f32 0.0, %v3546
    %v3548 = vpop.f32.mrf.mxu0
    %v3549 = vadd.f32 0.0, %v3548
    %v3550 = vpop.f32.mrf.mxu0
    %v3551 = vadd.f32 0.0, %v3550
    %v3552 = vpop.f32.mrf.mxu0
    %v3553 = vadd.f32 0.0, %v3552
    %3554 = vmatprep.mubr.bf16.mxu0 0
    %3555 = vmatmul.mubr.bf16.gmra.mxu0 %v2375
    %v3556 = vpop.f32.mrf.mxu0
    %v3557 = vadd.f32 0.0, %v3556
    %v3558 = vpop.f32.mrf.mxu0
    %v3559 = vadd.f32 0.0, %v3558
    %v3560 = vpop.f32.mrf.mxu0
    %v3561 = vadd.f32 0.0, %v3560
    %v3562 = vpop.f32.mrf.mxu0
    %v3563 = vadd.f32 0.0, %v3562
    %3564 = vmatprep.mubr.bf16.mxu0 0
    %3565 = vmatmul.mubr.bf16.gmra.mxu0 %v2376
    %v3566 = vpop.f32.mrf.mxu0
    %v3567 = vadd.f32 0.0, %v3566
    %v3568 = vpop.f32.mrf.mxu0
    %v3569 = vadd.f32 0.0, %v3568
    %v3570 = vpop.f32.mrf.mxu0
    %v3571 = vadd.f32 0.0, %v3570
    %v3572 = vpop.f32.mrf.mxu0
    %v3573 = vadd.f32 0.0, %v3572
    %3574 = vmatprep.mubr.bf16.mxu0 0
    %3575 = vmatmul.mubr.bf16.gmra.mxu0 %v2377
    %v3576 = vpop.f32.mrf.mxu0
    %v3577 = vadd.f32 0.0, %v3576
    %v3578 = vpop.f32.mrf.mxu0
    %v3579 = vadd.f32 0.0, %v3578
    %v3580 = vpop.f32.mrf.mxu0
    %v3581 = vadd.f32 0.0, %v3580
    %v3582 = vpop.f32.mrf.mxu0
    %v3583 = vadd.f32 0.0, %v3582
    %3584 = vmatprep.mubr.bf16.mxu0 0
    %3585 = vmatmul.mubr.bf16.gmra.mxu0 %v2378
    %v3586 = vpop.f32.mrf.mxu0
    %v3587 = vadd.f32 0.0, %v3586
    %v3588 = vpop.f32.mrf.mxu0
    %v3589 = vadd.f32 0.0, %v3588
    %v3590 = vpop.f32.mrf.mxu0
    %v3591 = vadd.f32 0.0, %v3590
    %v3592 = vpop.f32.mrf.mxu0
    %v3593 = vadd.f32 0.0, %v3592
    %3594 = vmatprep.mubr.bf16.mxu0 0
    %3595 = vmatmul.mubr.bf16.gmra.mxu0 %v2379
    %v3596 = vpop.f32.mrf.mxu0
    %v3597 = vadd.f32 0.0, %v3596
    %v3598 = vpop.f32.mrf.mxu0
    %v3599 = vadd.f32 0.0, %v3598
    %v3600 = vpop.f32.mrf.mxu0
    %v3601 = vadd.f32 0.0, %v3600
    %v3602 = vpop.f32.mrf.mxu0
    %v3603 = vadd.f32 0.0, %v3602
    %3604 = vmatprep.mubr.bf16.mxu0 0
    %3605 = vmatmul.mubr.bf16.gmra.mxu0 %v2380
    %v3606 = vpop.f32.mrf.mxu0
    %v3607 = vadd.f32 0.0, %v3606
    %v3608 = vpop.f32.mrf.mxu0
    %v3609 = vadd.f32 0.0, %v3608
    %v3610 = vpop.f32.mrf.mxu0
    %v3611 = vadd.f32 0.0, %v3610
    %v3612 = vpop.f32.mrf.mxu0
    %v3613 = vadd.f32 0.0, %v3612
    %3614 = vmatprep.mubr.bf16.mxu0 0
    %3615 = vmatmul.mubr.bf16.gmra.mxu0 %v2381
    %v3616 = vpop.f32.mrf.mxu0
    %v3617 = vadd.f32 0.0, %v3616
    %v3618 = vpop.f32.mrf.mxu0
    %v3619 = vadd.f32 0.0, %v3618
    %v3620 = vpop.f32.mrf.mxu0
    %v3621 = vadd.f32 0.0, %v3620
    %v3622 = vpop.f32.mrf.mxu0
    %v3623 = vadd.f32 0.0, %v3622
    %3624 = vmatprep.mubr.bf16.mxu0 0
    %3625 = vmatmul.mubr.bf16.gmra.mxu0 %v2382
    %v3626 = vpop.f32.mrf.mxu0
    %v3627 = vadd.f32 0.0, %v3626
    %v3628 = vpop.f32.mrf.mxu0
    %v3629 = vadd.f32 0.0, %v3628
    %v3630 = vpop.f32.mrf.mxu0
    %v3631 = vadd.f32 0.0, %v3630
    %v3632 = vpop.f32.mrf.mxu0
    %v3633 = vadd.f32 0.0, %v3632
    %3634 = vmatprep.mubr.bf16.mxu0 0
    %3635 = vmatmul.mubr.bf16.gmra.mxu0 %v2383
    %v3636 = vpop.f32.mrf.mxu0
    %v3637 = vadd.f32 0.0, %v3636
    %v3638 = vpop.f32.mrf.mxu0
    %v3639 = vadd.f32 0.0, %v3638
    %v3640 = vpop.f32.mrf.mxu0
    %v3641 = vadd.f32 0.0, %v3640
    %v3642 = vpop.f32.mrf.mxu0
    %v3643 = vadd.f32 0.0, %v3642
    %3644 = vmatprep.mubr.bf16.mxu0 0
    %3645 = vmatmul.mubr.bf16.gmra.mxu0 %v2384
    %v3646 = vpop.f32.mrf.mxu0
    %v3647 = vadd.f32 0.0, %v3646
    %v3648 = vpop.f32.mrf.mxu0
    %v3649 = vadd.f32 0.0, %v3648
    %v3650 = vpop.f32.mrf.mxu0
    %v3651 = vadd.f32 0.0, %v3650
    %v3652 = vpop.f32.mrf.mxu0
    %v3653 = vadd.f32 0.0, %v3652
    %3654 = vmatprep.mubr.bf16.mxu0 0
    %3655 = vmatmul.mubr.bf16.gmra.mxu0 %v2385
    %v3656 = vpop.f32.mrf.mxu0
    %v3657 = vadd.f32 0.0, %v3656
    %v3658 = vpop.f32.mrf.mxu0
    %v3659 = vadd.f32 0.0, %v3658
    %v3660 = vpop.f32.mrf.mxu0
    %v3661 = vadd.f32 0.0, %v3660
    %v3662 = vpop.f32.mrf.mxu0
    %v3663 = vadd.f32 0.0, %v3662
    %3664 = vmatprep.mubr.bf16.mxu0 0
    %3665 = vmatmul.mubr.bf16.gmra.mxu0 %v1141
    %v3666 = vpop.f32.mrf.mxu0
    %v3667 = vpop.f32.mrf.mxu0
    %v3668 = vpop.f32.mrf.mxu0
    %v3669 = vpop.f32.mrf.mxu0
    %3670 = vmatprep.mubr.bf16.mxu0 0
    %3671 = vmatmul.mubr.bf16.gmra.mxu0 %v1141
    %v3672 = vpop.f32.mrf.mxu0
    %v3673 = vpop.f32.mrf.mxu0
    %v3674 = vpop.f32.mrf.mxu0
    %v3675 = vpop.f32.mrf.mxu0
    %3676 = vmatprep.mubr.bf16.mxu0 0
    %3677 = vmatmul.mubr.bf16.gmra.mxu0 %v1141
    %v3678 = vpop.f32.mrf.mxu0
    %v3679 = vpop.f32.mrf.mxu0
    %v3680 = vpop.f32.mrf.mxu0
    %v3681 = vpop.f32.mrf.mxu0
    %3682 = vmatprep.mubr.bf16.mxu0 0
    %3683 = vmatmul.mubr.bf16.gmra.mxu0 %v1141
    %v3684 = vpop.f32.mrf.mxu0
    %v3685 = vpop.f32.mrf.mxu0
    %v3686 = vpop.f32.mrf.mxu0
    %v3687 = vpop.f32.mrf.mxu0
    %3688 = vdwg.mxu0
    %v3689 = vadd.f32 %v3311, %v3507
    %v3690 = vadd.f32 %v3312, %v3509
    %v3691 = vadd.f32 %v3313, %v3511
    %v3692 = vadd.f32 %v3314, %v3513
    %v3693 = vadd.f32 %v3315, %v3517
    %v3694 = vadd.f32 %v3316, %v3519
    %v3695 = vadd.f32 %v3317, %v3521
    %v3696 = vadd.f32 %v3318, %v3523
    %v3697 = vadd.f32 %v3319, %v3527
    %v3698 = vadd.f32 %v3320, %v3529
    %v3699 = vadd.f32 %v3321, %v3531
    %v3700 = vadd.f32 %v3322, %v3533
    %v3701 = vadd.f32 %v3323, %v3537
    %v3702 = vadd.f32 %v3324, %v3539
    %v3703 = vadd.f32 %v3325, %v3541
    %v3704 = vadd.f32 %v3326, %v3543
    %v3705 = vadd.f32 %v3327, %v3547
    %v3706 = vadd.f32 %v3328, %v3549
    %v3707 = vadd.f32 %v3329, %v3551
    %v3708 = vadd.f32 %v3330, %v3553
    %v3709 = vadd.f32 %v3331, %v3557
    %v3710 = vadd.f32 %v3332, %v3559
    %v3711 = vadd.f32 %v3333, %v3561
    %v3712 = vadd.f32 %v3334, %v3563
    %v3713 = vadd.f32 %v3335, %v3567
    %v3714 = vadd.f32 %v3336, %v3569
    %v3715 = vadd.f32 %v3337, %v3571
    %v3716 = vadd.f32 %v3338, %v3573
    %v3717 = vadd.f32 %v3339, %v3577
    %v3718 = vadd.f32 %v3340, %v3579
    %v3719 = vadd.f32 %v3341, %v3581
    %v3720 = vadd.f32 %v3342, %v3583
    %v3721 = vadd.f32 %v3343, %v3587
    %v3722 = vadd.f32 %v3344, %v3589
    %v3723 = vadd.f32 %v3345, %v3591
    %v3724 = vadd.f32 %v3346, %v3593
    %v3725 = vadd.f32 %v3347, %v3597
    %v3726 = vadd.f32 %v3348, %v3599
    %v3727 = vadd.f32 %v3349, %v3601
    %v3728 = vadd.f32 %v3350, %v3603
    %v3729 = vadd.f32 %v3351, %v3607
    %v3730 = vadd.f32 %v3352, %v3609
    %v3731 = vadd.f32 %v3353, %v3611
    %v3732 = vadd.f32 %v3354, %v3613
    %v3733 = vadd.f32 %v3355, %v3617
    %v3734 = vadd.f32 %v3356, %v3619
    %v3735 = vadd.f32 %v3357, %v3621
    %v3736 = vadd.f32 %v3358, %v3623
    %v3737 = vadd.f32 %v3359, %v3627
    %v3738 = vadd.f32 %v3360, %v3629
    %v3739 = vadd.f32 %v3361, %v3631
    %v3740 = vadd.f32 %v3362, %v3633
    %v3741 = vadd.f32 %v3363, %v3637
    %v3742 = vadd.f32 %v3364, %v3639
    %v3743 = vadd.f32 %v3365, %v3641
    %v3744 = vadd.f32 %v3366, %v3643
    %v3745 = vadd.f32 %v3367, %v3647
    %v3746 = vadd.f32 %v3368, %v3649
    %v3747 = vadd.f32 %v3369, %v3651
    %v3748 = vadd.f32 %v3370, %v3653
    %v3749 = vadd.f32 %v3371, %v3657
    %v3750 = vadd.f32 %v3372, %v3659
    %v3751 = vadd.f32 %v3373, %v3661
    %v3752 = vadd.f32 %v3374, %v3663
    %v3753 = vld [vmem:[%s6] sm:$0x3]
    %v3755 = vlaneseq
    %v3756 = vshrl.u32 %v3755, 7
    %v3757 = vsub.s32 0, %v3756
    %v3758 = vrot.slane %v3753, %v3757
    %v3759 = vlaneseq
    %v3760 = vshrl.u32 %v3759, 7
    %v3761 = vsub.s32 1, %v3760
    %v3762 = vrot.slane %v3753, %v3761
    %v3765 = vadd.f32 %v3689, %v3758
    %v3766 = vadd.f32 %v3690, %v3762
    %v3767 = vadd.f32 %v3691, %v3758
    %v3768 = vadd.f32 %v3692, %v3762
    %v3769 = vadd.f32 %v3693, %v3758
    %v3770 = vadd.f32 %v3694, %v3762
    %v3771 = vadd.f32 %v3695, %v3758
    %v3772 = vadd.f32 %v3696, %v3762
    %v3773 = vadd.f32 %v3697, %v3758
    %v3774 = vadd.f32 %v3698, %v3762
    %v3775 = vadd.f32 %v3699, %v3758
    %v3776 = vadd.f32 %v3700, %v3762
    %v3777 = vadd.f32 %v3701, %v3758
    %v3778 = vadd.f32 %v3702, %v3762
    %v3779 = vadd.f32 %v3703, %v3758
    %v3780 = vadd.f32 %v3704, %v3762
    %v3781 = vadd.f32 %v3705, %v3758
    %v3782 = vadd.f32 %v3706, %v3762
    %v3783 = vadd.f32 %v3707, %v3758
    %v3784 = vadd.f32 %v3708, %v3762
    %v3785 = vadd.f32 %v3709, %v3758
    %v3786 = vadd.f32 %v3710, %v3762
    %v3787 = vadd.f32 %v3711, %v3758
    %v3788 = vadd.f32 %v3712, %v3762
    %v3789 = vadd.f32 %v3713, %v3758
    %v3790 = vadd.f32 %v3714, %v3762
    %v3791 = vadd.f32 %v3715, %v3758
    %v3792 = vadd.f32 %v3716, %v3762
    %v3793 = vadd.f32 %v3717, %v3758
    %v3794 = vadd.f32 %v3718, %v3762
    %v3795 = vadd.f32 %v3719, %v3758
    %v3796 = vadd.f32 %v3720, %v3762
    %v3797 = vadd.f32 %v3721, %v3758
    %v3798 = vadd.f32 %v3722, %v3762
    %v3799 = vadd.f32 %v3723, %v3758
    %v3800 = vadd.f32 %v3724, %v3762
    %v3801 = vadd.f32 %v3725, %v3758
    %v3802 = vadd.f32 %v3726, %v3762
    %v3803 = vadd.f32 %v3727, %v3758
    %v3804 = vadd.f32 %v3728, %v3762
    %v3805 = vadd.f32 %v3729, %v3758
    %v3806 = vadd.f32 %v3730, %v3762
    %v3807 = vadd.f32 %v3731, %v3758
    %v3808 = vadd.f32 %v3732, %v3762
    %v3809 = vadd.f32 %v3733, %v3758
    %v3810 = vadd.f32 %v3734, %v3762
    %v3811 = vadd.f32 %v3735, %v3758
    %v3812 = vadd.f32 %v3736, %v3762
    %v3813 = vadd.f32 %v3737, %v3758
    %v3814 = vadd.f32 %v3738, %v3762
    %v3815 = vadd.f32 %v3739, %v3758
    %v3816 = vadd.f32 %v3740, %v3762
    %v3817 = vadd.f32 %v3741, %v3758
    %v3818 = vadd.f32 %v3742, %v3762
    %v3819 = vadd.f32 %v3743, %v3758
    %v3820 = vadd.f32 %v3744, %v3762
    %v3821 = vadd.f32 %v3745, %v3758
    %v3822 = vadd.f32 %v3746, %v3762
    %v3823 = vadd.f32 %v3747, %v3758
    %v3824 = vadd.f32 %v3748, %v3762
    %v3825 = vadd.f32 %v3749, %v3758
    %v3826 = vadd.f32 %v3750, %v3762
    %v3827 = vadd.f32 %v3751, %v3758
    %v3828 = vadd.f32 %v3752, %v3762
    %v3829 = vmax.f32 %v3765, 0.0
    %v3830 = vmax.f32 %v3766, 0.0
    %v3831 = vmax.f32 %v3767, 0.0
    %v3832 = vmax.f32 %v3768, 0.0
    %v3833 = vmax.f32 %v3769, 0.0
    %v3834 = vmax.f32 %v3770, 0.0
    %v3835 = vmax.f32 %v3771, 0.0
    %v3836 = vmax.f32 %v3772, 0.0
    %v3837 = vmax.f32 %v3773, 0.0
    %v3838 = vmax.f32 %v3774, 0.0
    %v3839 = vmax.f32 %v3775, 0.0
    %v3840 = vmax.f32 %v3776, 0.0
    %v3841 = vmax.f32 %v3777, 0.0
    %v3842 = vmax.f32 %v3778, 0.0
    %v3843 = vmax.f32 %v3779, 0.0
    %v3844 = vmax.f32 %v3780, 0.0
    %v3845 = vmax.f32 %v3781, 0.0
    %v3846 = vmax.f32 %v3782, 0.0
    %v3847 = vmax.f32 %v3783, 0.0
    %v3848 = vmax.f32 %v3784, 0.0
    %v3849 = vmax.f32 %v3785, 0.0
    %v3850 = vmax.f32 %v3786, 0.0
    %v3851 = vmax.f32 %v3787, 0.0
    %v3852 = vmax.f32 %v3788, 0.0
    %v3853 = vmax.f32 %v3789, 0.0
    %v3854 = vmax.f32 %v3790, 0.0
    %v3855 = vmax.f32 %v3791, 0.0
    %v3856 = vmax.f32 %v3792, 0.0
    %v3857 = vmax.f32 %v3793, 0.0
    %v3858 = vmax.f32 %v3794, 0.0
    %v3859 = vmax.f32 %v3795, 0.0
    %v3860 = vmax.f32 %v3796, 0.0
    %v3861 = vmax.f32 %v3797, 0.0
    %v3862 = vmax.f32 %v3798, 0.0
    %v3863 = vmax.f32 %v3799, 0.0
    %v3864 = vmax.f32 %v3800, 0.0
    %v3865 = vmax.f32 %v3801, 0.0
    %v3866 = vmax.f32 %v3802, 0.0
    %v3867 = vmax.f32 %v3803, 0.0
    %v3868 = vmax.f32 %v3804, 0.0
    %v3869 = vmax.f32 %v3805, 0.0
    %v3870 = vmax.f32 %v3806, 0.0
    %v3871 = vmax.f32 %v3807, 0.0
    %v3872 = vmax.f32 %v3808, 0.0
    %v3873 = vmax.f32 %v3809, 0.0
    %v3874 = vmax.f32 %v3810, 0.0
    %v3875 = vmax.f32 %v3811, 0.0
    %v3876 = vmax.f32 %v3812, 0.0
    %v3877 = vmax.f32 %v3813, 0.0
    %v3878 = vmax.f32 %v3814, 0.0
    %v3879 = vmax.f32 %v3815, 0.0
    %v3880 = vmax.f32 %v3816, 0.0
    %v3881 = vmax.f32 %v3817, 0.0
    %v3882 = vmax.f32 %v3818, 0.0
    %v3883 = vmax.f32 %v3819, 0.0
    %v3884 = vmax.f32 %v3820, 0.0
    %v3885 = vmax.f32 %v3821, 0.0
    %v3886 = vmax.f32 %v3822, 0.0
    %v3887 = vmax.f32 %v3823, 0.0
    %v3888 = vmax.f32 %v3824, 0.0
    %v3889 = vmax.f32 %v3825, 0.0
    %v3890 = vmax.f32 %v3826, 0.0
    %v3891 = vmax.f32 %v3827, 0.0
    %v3892 = vmax.f32 %v3828, 0.0
    %v3893 = vmax.f32 %v3829, %v3845
    %v3894 = vmax.f32 %v3830, %v3846
    %v3895 = vmax.f32 %v3831, %v3847
    %v3896 = vmax.f32 %v3832, %v3848
    %v3897 = vmax.f32 %v3833, %v3849
    %v3898 = vmax.f32 %v3834, %v3850
    %v3899 = vmax.f32 %v3835, %v3851
    %v3900 = vmax.f32 %v3836, %v3852
    %v3901 = vmax.f32 %v3837, %v3853
    %v3902 = vmax.f32 %v3838, %v3854
    %v3903 = vmax.f32 %v3839, %v3855
    %v3904 = vmax.f32 %v3840, %v3856
    %v3905 = vmax.f32 %v3841, %v3857
    %v3906 = vmax.f32 %v3842, %v3858
    %v3907 = vmax.f32 %v3843, %v3859
    %v3908 = vmax.f32 %v3844, %v3860
    %v3909 = vmax.f32 %v3861, %v3877
    %v3910 = vmax.f32 %v3862, %v3878
    %v3911 = vmax.f32 %v3863, %v3879
    %v3912 = vmax.f32 %v3864, %v3880
    %v3913 = vmax.f32 %v3865, %v3881
    %v3914 = vmax.f32 %v3866, %v3882
    %v3915 = vmax.f32 %v3867, %v3883
    %v3916 = vmax.f32 %v3868, %v3884
    %v3917 = vmax.f32 %v3869, %v3885
    %v3918 = vmax.f32 %v3870, %v3886
    %v3919 = vmax.f32 %v3871, %v3887
    %v3920 = vmax.f32 %v3872, %v3888
    %v3921 = vmax.f32 %v3873, %v3889
    %v3922 = vmax.f32 %v3874, %v3890
    %v3923 = vmax.f32 %v3875, %v3891
    %v3924 = vmax.f32 %v3876, %v3892
    %v3925 = vmax.f32 %v3893, %v3895
    %v3926 = vmax.f32 %v3894, %v3896
    %v3927 = vmax.f32 %v3909, %v3911
    %v3928 = vmax.f32 %v3910, %v3912
    %v3929 = vmax.f32 %v3897, %v3899
    %v3930 = vmax.f32 %v3898, %v3900
    %v3931 = vmax.f32 %v3913, %v3915
    %v3932 = vmax.f32 %v3914, %v3916
    %v3933 = vmax.f32 %v3901, %v3903
    %v3934 = vmax.f32 %v3902, %v3904
    %v3935 = vmax.f32 %v3917, %v3919
    %v3936 = vmax.f32 %v3918, %v3920
    %v3937 = vmax.f32 %v3905, %v3907
    %v3938 = vmax.f32 %v3906, %v3908
    %v3939 = vmax.f32 %v3921, %v3923
    %v3940 = vmax.f32 %v3922, %v3924
    %v3941 = vpack.c.bf16 %v3929, %v3925
    %v3942 = vpack.c.bf16 %v3930, %v3926
    %v3943 = vpack.c.bf16 %v3933, %v3933
    %v3944 = vpack.c.bf16 %v3934, %v3934
    %v3945 = vld [vmem:[#allocation2] sm:$0xf]
    %v3946 = vld [vmem:[#allocation2 + $0x4] sm:$0xf]
    %v3947 = vld [vmem:[#allocation2 + $0x8] sm:$0xf]
    %v3948 = vld [vmem:[#allocation2 + $0xc] sm:$0xf]
    %v3949 = vld [vmem:[#allocation2 + $0x10] sm:$0xf]
    %v3950 = vld [vmem:[#allocation2 + $0x14] sm:$0xf]
    %v3951 = vld [vmem:[#allocation2 + $0x18] sm:$0xf]
    %v3952 = vld [vmem:[#allocation2 + $0x1c] sm:$0xf]
    %v3953 = vld [vmem:[#allocation2 + $0x20] sm:$0xf]
    %v3954 = vld [vmem:[#allocation2 + $0x24] sm:$0xf]
    %v3955 = vld [vmem:[#allocation2 + $0x28] sm:$0xf]
    %v3956 = vld [vmem:[#allocation2 + $0x2c] sm:$0xf]
    %v3957 = vld [vmem:[#allocation2 + $0x30] sm:$0xf]
    %v3958 = vld [vmem:[#allocation2 + $0x34] sm:$0xf]
    %v3959 = vld [vmem:[#allocation2 + $0x38] sm:$0xf]
    %v3960 = vld [vmem:[#allocation2 + $0x3c] sm:$0xf]
    %v3961 = vld [vmem:[#allocation2 + $0x40] sm:$0xf]
    %v3962 = vld [vmem:[#allocation2 + $0x44] sm:$0xf]
    %v3963 = vld [vmem:[#allocation2 + $0x48] sm:$0xf]
    %v3964 = vld [vmem:[#allocation2 + $0x4c] sm:$0xf]
    %v3965 = vld [vmem:[#allocation2 + $0x50] sm:$0xf]
    %v3966 = vld [vmem:[#allocation2 + $0x54] sm:$0xf]
    %v3967 = vld [vmem:[#allocation2 + $0x58] sm:$0xf]
    %v3968 = vld [vmem:[#allocation2 + $0x5c] sm:$0xf]
    %v3969 = vld [vmem:[#allocation2 + $0x60] sm:$0xf]
    %v3970 = vld [vmem:[#allocation2 + $0x64] sm:$0xf]
    %v3971 = vld [vmem:[#allocation2 + $0x68] sm:$0xf]
    %v3972 = vld [vmem:[#allocation2 + $0x6c] sm:$0xf]
    %v3973 = vld [vmem:[#allocation2 + $0x70] sm:$0xf]
    %v3974 = vld [vmem:[#allocation2 + $0x74] sm:$0xf]
    %v3975 = vld [vmem:[#allocation2 + $0x78] sm:$0xf]
    %v3976 = vld [vmem:[#allocation2 + $0x7c] sm:$0xf]
    %v3977 = vpack.c.bf16 %v3933, %v3929
    %v3978 = vpack.c.bf16 %v3934, %v3930
    %v3979 = vpack.c.bf16 %v3937, %v3937
    %v3980 = vpack.c.bf16 %v3938, %v3938
    %s3981 = scalar_lea.vmem [#allocation2], 128
    %v3982 = vld [vmem:[%s3981] sm:$0xf]
    %v3983 = vld [vmem:[%s3981 + $0x4] sm:$0xf]
    %v3984 = vld [vmem:[%s3981 + $0x8] sm:$0xf]
    %v3985 = vld [vmem:[%s3981 + $0xc] sm:$0xf]
    %v3986 = vld [vmem:[%s3981 + $0x10] sm:$0xf]
    %v3987 = vld [vmem:[%s3981 + $0x14] sm:$0xf]
    %v3988 = vld [vmem:[%s3981 + $0x18] sm:$0xf]
    %v3989 = vld [vmem:[%s3981 + $0x1c] sm:$0xf]
    %v3990 = vld [vmem:[%s3981 + $0x20] sm:$0xf]
    %v3991 = vld [vmem:[%s3981 + $0x24] sm:$0xf]
    %v3992 = vld [vmem:[%s3981 + $0x28] sm:$0xf]
    %v3993 = vld [vmem:[%s3981 + $0x2c] sm:$0xf]
    %v3994 = vld [vmem:[%s3981 + $0x30] sm:$0xf]
    %v3995 = vld [vmem:[%s3981 + $0x34] sm:$0xf]
    %v3996 = vld [vmem:[%s3981 + $0x38] sm:$0xf]
    %v3997 = vld [vmem:[%s3981 + $0x3c] sm:$0xf]
    %v3998 = vld [vmem:[%s3981 + $0x40] sm:$0xf]
    %v3999 = vld [vmem:[%s3981 + $0x44] sm:$0xf]
    %v4000 = vld [vmem:[%s3981 + $0x48] sm:$0xf]
    %v4001 = vld [vmem:[%s3981 + $0x4c] sm:$0xf]
    %v4002 = vld [vmem:[%s3981 + $0x50] sm:$0xf]
    %v4003 = vld [vmem:[%s3981 + $0x54] sm:$0xf]
    %v4004 = vld [vmem:[%s3981 + $0x58] sm:$0xf]
    %v4005 = vld [vmem:[%s3981 + $0x5c] sm:$0xf]
    %v4006 = vld [vmem:[%s3981 + $0x60] sm:$0xf]
    %v4007 = vld [vmem:[%s3981 + $0x64] sm:$0xf]
    %v4008 = vld [vmem:[%s3981 + $0x68] sm:$0xf]
    %v4009 = vld [vmem:[%s3981 + $0x6c] sm:$0xf]
    %v4010 = vld [vmem:[%s3981 + $0x70] sm:$0xf]
    %v4011 = vld [vmem:[%s3981 + $0x74] sm:$0xf]
    %v4012 = vld [vmem:[%s3981 + $0x78] sm:$0xf]
    %v4013 = vld [vmem:[%s3981 + $0x7c] sm:$0xf]
    %v4046 = vunpack.c.l.b16 %v3982
    %v4047 = vunpack.c.l.b16 %v3983
    %v4048 = vunpack.c.l.b16 %v3984
    %v4049 = vunpack.c.l.b16 %v3985
    %v4050 = vunpack.c.l.b16 %v3986
    %v4051 = vunpack.c.l.b16 %v3987
    %v4052 = vunpack.c.l.b16 %v3988
    %v4053 = vunpack.c.l.b16 %v3989
    %v4054 = vunpack.c.l.b16 %v3990
    %v4055 = vunpack.c.l.b16 %v3991
    %v4056 = vunpack.c.l.b16 %v3992
    %v4057 = vunpack.c.l.b16 %v3993
    %v4058 = vunpack.c.l.b16 %v3994
    %v4059 = vunpack.c.l.b16 %v3995
    %v4060 = vunpack.c.l.b16 %v3996
    %v4061 = vunpack.c.l.b16 %v3997
    %v4062 = vunpack.c.l.b16 %v3998
    %v4063 = vunpack.c.l.b16 %v3999
    %v4064 = vunpack.c.l.b16 %v4000
    %v4065 = vunpack.c.l.b16 %v4001
    %v4066 = vunpack.c.l.b16 %v4002
    %v4067 = vunpack.c.l.b16 %v4003
    %v4068 = vunpack.c.l.b16 %v4004
    %v4069 = vunpack.c.l.b16 %v4005
    %v4070 = vunpack.c.l.b16 %v4006
    %v4071 = vunpack.c.l.b16 %v4007
    %v4072 = vunpack.c.l.b16 %v4008
    %v4073 = vunpack.c.l.b16 %v4009
    %v4074 = vunpack.c.l.b16 %v4010
    %v4075 = vunpack.c.l.b16 %v4011
    %v4076 = vunpack.c.l.b16 %v4012
    %v4077 = vunpack.c.l.b16 %v4013
    %v4078 = vpack.c.b16 %v4047, %v4046
    %v4079 = vpack.c.b16 %v4049, %v4048
    %v4080 = vpack.c.b16 %v4051, %v4050
    %v4081 = vpack.c.b16 %v4053, %v4052
    %v4082 = vpack.c.b16 %v4055, %v4054
    %v4083 = vpack.c.b16 %v4057, %v4056
    %v4084 = vpack.c.b16 %v4059, %v4058
    %v4085 = vpack.c.b16 %v4061, %v4060
    %v4086 = vpack.c.b16 %v4063, %v4062
    %v4087 = vpack.c.b16 %v4065, %v4064
    %v4088 = vpack.c.b16 %v4067, %v4066
    %v4089 = vpack.c.b16 %v4069, %v4068
    %v4090 = vpack.c.b16 %v4071, %v4070
    %v4091 = vpack.c.b16 %v4073, %v4072
    %v4092 = vpack.c.b16 %v4075, %v4074
    %v4093 = vpack.c.b16 %v4077, %v4076
    %4110 = vmatprep.subr.bf16.mxu0 0
    %4111 = vmatpush1.bf16.msra.mxu0 %v4085
    %4112 = vmatprep.subr.bf16.mxu0 0
    %4113 = vmatpush1.bf16.msra.mxu0 %v4084
    %4114 = vmatprep.subr.bf16.mxu0 0
    %4115 = vmatpush1.bf16.msra.mxu0 %v4083
    %4116 = vmatprep.subr.bf16.mxu0 0
    %4117 = vmatpush1.bf16.msra.mxu0 %v4082
    %4118 = vmatprep.subr.bf16.mxu0 0
    %4119 = vmatpush1.bf16.msra.mxu0 %v4081
    %4120 = vmatprep.subr.bf16.mxu0 0
    %4121 = vmatpush1.bf16.msra.mxu0 %v4080
    %4122 = vmatprep.subr.bf16.mxu0 0
    %4123 = vmatpush1.bf16.msra.mxu0 %v4079
    %4124 = vmatprep.subr.bf16.mxu0 0
    %4125 = vmatpush1.bf16.msra.mxu0 %v4078
    %4126 = vmatprep.subr.bf16.mxu0 0
    %4127 = vmatpush2.bf16.msra.mxu0 %v4093
    %4128 = vmatprep.subr.bf16.mxu0 0
    %4129 = vmatpush2.bf16.msra.mxu0 %v4092
    %4130 = vmatprep.subr.bf16.mxu0 0
    %4131 = vmatpush2.bf16.msra.mxu0 %v4091
    %4132 = vmatprep.subr.bf16.mxu0 0
    %4133 = vmatpush2.bf16.msra.mxu0 %v4090
    %4134 = vmatprep.subr.bf16.mxu0 0
    %4135 = vmatpush2.bf16.msra.mxu0 %v4089
    %4136 = vmatprep.subr.bf16.mxu0 0
    %4137 = vmatpush2.bf16.msra.mxu0 %v4088
    %4138 = vmatprep.subr.bf16.mxu0 0
    %4139 = vmatpush2.bf16.msra.mxu0 %v4087
    %4140 = vmatprep.subr.bf16.mxu0 0
    %4141 = vmatpush2.bf16.msra.mxu0 %v4086
    %4142 = vmatprep.mubr.bf16.mxu0 %v3978
    %4143 = vmatmul.mubr.bf16.gmra.mxu0 %v3977
    %v4144 = vpop.f32.mrf.mxu0
    %v4145 = vadd.f32 0.0, %v4144
    %v4146 = vpop.f32.mrf.mxu0
    %v4147 = vpop.f32.mrf.mxu0
    %v4148 = vadd.f32 0.0, %v4147
    %v4149 = vpop.f32.mrf.mxu0
    %4150 = vmatprep.mubr.bf16.mxu0 %v3980
    %4151 = vmatmul.mubr.bf16.gmra.mxu0 %v3979
    %v4152 = vpop.f32.mrf.mxu0
    %v4153 = vpop.f32.mrf.mxu0
    %v4154 = vpop.f32.mrf.mxu0
    %v4155 = vpop.f32.mrf.mxu0
    %4156 = vdwg.mxu0
    %v4189 = vunpack.c.l.b16 %v3945
    %v4190 = vunpack.c.l.b16 %v3946
    %v4191 = vunpack.c.l.b16 %v3947
    %v4192 = vunpack.c.l.b16 %v3948
    %v4193 = vunpack.c.l.b16 %v3949
    %v4194 = vunpack.c.l.b16 %v3950
    %v4195 = vunpack.c.l.b16 %v3951
    %v4196 = vunpack.c.l.b16 %v3952
    %v4197 = vunpack.c.l.b16 %v3953
    %v4198 = vunpack.c.l.b16 %v3954
    %v4199 = vunpack.c.l.b16 %v3955
    %v4200 = vunpack.c.l.b16 %v3956
    %v4201 = vunpack.c.l.b16 %v3957
    %v4202 = vunpack.c.l.b16 %v3958
    %v4203 = vunpack.c.l.b16 %v3959
    %v4204 = vunpack.c.l.b16 %v3960
    %v4205 = vunpack.c.l.b16 %v3961
    %v4206 = vunpack.c.l.b16 %v3962
    %v4207 = vunpack.c.l.b16 %v3963
    %v4208 = vunpack.c.l.b16 %v3964
    %v4209 = vunpack.c.l.b16 %v3965
    %v4210 = vunpack.c.l.b16 %v3966
    %v4211 = vunpack.c.l.b16 %v3967
    %v4212 = vunpack.c.l.b16 %v3968
    %v4213 = vunpack.c.l.b16 %v3969
    %v4214 = vunpack.c.l.b16 %v3970
    %v4215 = vunpack.c.l.b16 %v3971
    %v4216 = vunpack.c.l.b16 %v3972
    %v4217 = vunpack.c.l.b16 %v3973
    %v4218 = vunpack.c.l.b16 %v3974
    %v4219 = vunpack.c.l.b16 %v3975
    %v4220 = vunpack.c.l.b16 %v3976
    %v4221 = vpack.c.b16 %v4190, %v4189
    %v4222 = vpack.c.b16 %v4192, %v4191
    %v4223 = vpack.c.b16 %v4194, %v4193
    %v4224 = vpack.c.b16 %v4196, %v4195
    %v4225 = vpack.c.b16 %v4198, %v4197
    %v4226 = vpack.c.b16 %v4200, %v4199
    %v4227 = vpack.c.b16 %v4202, %v4201
    %v4228 = vpack.c.b16 %v4204, %v4203
    %v4229 = vpack.c.b16 %v4206, %v4205
    %v4230 = vpack.c.b16 %v4208, %v4207
    %v4231 = vpack.c.b16 %v4210, %v4209
    %v4232 = vpack.c.b16 %v4212, %v4211
    %v4233 = vpack.c.b16 %v4214, %v4213
    %v4234 = vpack.c.b16 %v4216, %v4215
    %v4235 = vpack.c.b16 %v4218, %v4217
    %v4236 = vpack.c.b16 %v4220, %v4219
    %4253 = vmatprep.subr.bf16.mxu0 0
    %4254 = vmatpush1.bf16.msra.mxu0 %v4228
    %4255 = vmatprep.subr.bf16.mxu0 0
    %4256 = vmatpush1.bf16.msra.mxu0 %v4227
    %4257 = vmatprep.subr.bf16.mxu0 0
    %4258 = vmatpush1.bf16.msra.mxu0 %v4226
    %4259 = vmatprep.subr.bf16.mxu0 0
    %4260 = vmatpush1.bf16.msra.mxu0 %v4225
    %4261 = vmatprep.subr.bf16.mxu0 0
    %4262 = vmatpush1.bf16.msra.mxu0 %v4224
    %4263 = vmatprep.subr.bf16.mxu0 0
    %4264 = vmatpush1.bf16.msra.mxu0 %v4223
    %4265 = vmatprep.subr.bf16.mxu0 0
    %4266 = vmatpush1.bf16.msra.mxu0 %v4222
    %4267 = vmatprep.subr.bf16.mxu0 0
    %4268 = vmatpush1.bf16.msra.mxu0 %v4221
    %4269 = vmatprep.subr.bf16.mxu0 0
    %4270 = vmatpush2.bf16.msra.mxu0 %v4236
    %4271 = vmatprep.subr.bf16.mxu0 0
    %4272 = vmatpush2.bf16.msra.mxu0 %v4235
    %4273 = vmatprep.subr.bf16.mxu0 0
    %4274 = vmatpush2.bf16.msra.mxu0 %v4234
    %4275 = vmatprep.subr.bf16.mxu0 0
    %4276 = vmatpush2.bf16.msra.mxu0 %v4233
    %4277 = vmatprep.subr.bf16.mxu0 0
    %4278 = vmatpush2.bf16.msra.mxu0 %v4232
    %4279 = vmatprep.subr.bf16.mxu0 0
    %4280 = vmatpush2.bf16.msra.mxu0 %v4231
    %4281 = vmatprep.subr.bf16.mxu0 0
    %4282 = vmatpush2.bf16.msra.mxu0 %v4230
    %4283 = vmatprep.subr.bf16.mxu0 0
    %4284 = vmatpush2.bf16.msra.mxu0 %v4229
    %4285 = vmatprep.mubr.bf16.mxu0 %v3942
    %4286 = vmatmul.mubr.bf16.gmra.mxu0 %v3941
    %v4287 = vpop.f32.mrf.mxu0
    %v4288 = vadd.f32 %v4145, %v4287
    %v4289 = vpop.f32.mrf.mxu0
    %v4290 = vpop.f32.mrf.mxu0
    %v4291 = vadd.f32 %v4148, %v4290
    %v4292 = vpop.f32.mrf.mxu0
    %4293 = vmatprep.mubr.bf16.mxu0 %v3944
    %4294 = vmatmul.mubr.bf16.gmra.mxu0 %v3943
    %v4295 = vpop.f32.mrf.mxu0
    %v4296 = vpop.f32.mrf.mxu0
    %v4297 = vpop.f32.mrf.mxu0
    %v4298 = vpop.f32.mrf.mxu0
    %4299 = vdwg.mxu0
    %v4300 = vpack.c.bf16 %v3931, %v3927
    %v4301 = vpack.c.bf16 %v3932, %v3928
    %v4302 = vpack.c.bf16 %v3935, %v3935
    %v4303 = vpack.c.bf16 %v3936, %v3936
    %s4304 = scalar_lea.vmem [#allocation2], 256
    %v4305 = vld [vmem:[%s4304] sm:$0xf]
    %v4306 = vld [vmem:[%s4304 + $0x4] sm:$0xf]
    %v4307 = vld [vmem:[%s4304 + $0x8] sm:$0xf]
    %v4308 = vld [vmem:[%s4304 + $0xc] sm:$0xf]
    %v4309 = vld [vmem:[%s4304 + $0x10] sm:$0xf]
    %v4310 = vld [vmem:[%s4304 + $0x14] sm:$0xf]
    %v4311 = vld [vmem:[%s4304 + $0x18] sm:$0xf]
    %v4312 = vld [vmem:[%s4304 + $0x1c] sm:$0xf]
    %v4313 = vld [vmem:[%s4304 + $0x20] sm:$0xf]
    %v4314 = vld [vmem:[%s4304 + $0x24] sm:$0xf]
    %v4315 = vld [vmem:[%s4304 + $0x28] sm:$0xf]
    %v4316 = vld [vmem:[%s4304 + $0x2c] sm:$0xf]
    %v4317 = vld [vmem:[%s4304 + $0x30] sm:$0xf]
    %v4318 = vld [vmem:[%s4304 + $0x34] sm:$0xf]
    %v4319 = vld [vmem:[%s4304 + $0x38] sm:$0xf]
    %v4320 = vld [vmem:[%s4304 + $0x3c] sm:$0xf]
    %v4321 = vld [vmem:[%s4304 + $0x40] sm:$0xf]
    %v4322 = vld [vmem:[%s4304 + $0x44] sm:$0xf]
    %v4323 = vld [vmem:[%s4304 + $0x48] sm:$0xf]
    %v4324 = vld [vmem:[%s4304 + $0x4c] sm:$0xf]
    %v4325 = vld [vmem:[%s4304 + $0x50] sm:$0xf]
    %v4326 = vld [vmem:[%s4304 + $0x54] sm:$0xf]
    %v4327 = vld [vmem:[%s4304 + $0x58] sm:$0xf]
    %v4328 = vld [vmem:[%s4304 + $0x5c] sm:$0xf]
    %v4329 = vld [vmem:[%s4304 + $0x60] sm:$0xf]
    %v4330 = vld [vmem:[%s4304 + $0x64] sm:$0xf]
    %v4331 = vld [vmem:[%s4304 + $0x68] sm:$0xf]
    %v4332 = vld [vmem:[%s4304 + $0x6c] sm:$0xf]
    %v4333 = vld [vmem:[%s4304 + $0x70] sm:$0xf]
    %v4334 = vld [vmem:[%s4304 + $0x74] sm:$0xf]
    %v4335 = vld [vmem:[%s4304 + $0x78] sm:$0xf]
    %v4336 = vld [vmem:[%s4304 + $0x7c] sm:$0xf]
    %v4369 = vunpack.c.l.b16 %v4305
    %v4370 = vunpack.c.l.b16 %v4306
    %v4371 = vunpack.c.l.b16 %v4307
    %v4372 = vunpack.c.l.b16 %v4308
    %v4373 = vunpack.c.l.b16 %v4309
    %v4374 = vunpack.c.l.b16 %v4310
    %v4375 = vunpack.c.l.b16 %v4311
    %v4376 = vunpack.c.l.b16 %v4312
    %v4377 = vunpack.c.l.b16 %v4313
    %v4378 = vunpack.c.l.b16 %v4314
    %v4379 = vunpack.c.l.b16 %v4315
    %v4380 = vunpack.c.l.b16 %v4316
    %v4381 = vunpack.c.l.b16 %v4317
    %v4382 = vunpack.c.l.b16 %v4318
    %v4383 = vunpack.c.l.b16 %v4319
    %v4384 = vunpack.c.l.b16 %v4320
    %v4385 = vunpack.c.l.b16 %v4321
    %v4386 = vunpack.c.l.b16 %v4322
    %v4387 = vunpack.c.l.b16 %v4323
    %v4388 = vunpack.c.l.b16 %v4324
    %v4389 = vunpack.c.l.b16 %v4325
    %v4390 = vunpack.c.l.b16 %v4326
    %v4391 = vunpack.c.l.b16 %v4327
    %v4392 = vunpack.c.l.b16 %v4328
    %v4393 = vunpack.c.l.b16 %v4329
    %v4394 = vunpack.c.l.b16 %v4330
    %v4395 = vunpack.c.l.b16 %v4331
    %v4396 = vunpack.c.l.b16 %v4332
    %v4397 = vunpack.c.l.b16 %v4333
    %v4398 = vunpack.c.l.b16 %v4334
    %v4399 = vunpack.c.l.b16 %v4335
    %v4400 = vunpack.c.l.b16 %v4336
    %v4401 = vpack.c.b16 %v4370, %v4369
    %v4402 = vpack.c.b16 %v4372, %v4371
    %v4403 = vpack.c.b16 %v4374, %v4373
    %v4404 = vpack.c.b16 %v4376, %v4375
    %v4405 = vpack.c.b16 %v4378, %v4377
    %v4406 = vpack.c.b16 %v4380, %v4379
    %v4407 = vpack.c.b16 %v4382, %v4381
    %v4408 = vpack.c.b16 %v4384, %v4383
    %v4409 = vpack.c.b16 %v4386, %v4385
    %v4410 = vpack.c.b16 %v4388, %v4387
    %v4411 = vpack.c.b16 %v4390, %v4389
    %v4412 = vpack.c.b16 %v4392, %v4391
    %v4413 = vpack.c.b16 %v4394, %v4393
    %v4414 = vpack.c.b16 %v4396, %v4395
    %v4415 = vpack.c.b16 %v4398, %v4397
    %v4416 = vpack.c.b16 %v4400, %v4399
    %4433 = vmatprep.subr.bf16.mxu0 0
    %4434 = vmatpush1.bf16.msra.mxu0 %v4408
    %4435 = vmatprep.subr.bf16.mxu0 0
    %4436 = vmatpush1.bf16.msra.mxu0 %v4407
    %4437 = vmatprep.subr.bf16.mxu0 0
    %4438 = vmatpush1.bf16.msra.mxu0 %v4406
    %4439 = vmatprep.subr.bf16.mxu0 0
    %4440 = vmatpush1.bf16.msra.mxu0 %v4405
    %4441 = vmatprep.subr.bf16.mxu0 0
    %4442 = vmatpush1.bf16.msra.mxu0 %v4404
    %4443 = vmatprep.subr.bf16.mxu0 0
    %4444 = vmatpush1.bf16.msra.mxu0 %v4403
    %4445 = vmatprep.subr.bf16.mxu0 0
    %4446 = vmatpush1.bf16.msra.mxu0 %v4402
    %4447 = vmatprep.subr.bf16.mxu0 0
    %4448 = vmatpush1.bf16.msra.mxu0 %v4401
    %4449 = vmatprep.subr.bf16.mxu0 0
    %4450 = vmatpush2.bf16.msra.mxu0 %v4416
    %4451 = vmatprep.subr.bf16.mxu0 0
    %4452 = vmatpush2.bf16.msra.mxu0 %v4415
    %4453 = vmatprep.subr.bf16.mxu0 0
    %4454 = vmatpush2.bf16.msra.mxu0 %v4414
    %4455 = vmatprep.subr.bf16.mxu0 0
    %4456 = vmatpush2.bf16.msra.mxu0 %v4413
    %4457 = vmatprep.subr.bf16.mxu0 0
    %4458 = vmatpush2.bf16.msra.mxu0 %v4412
    %4459 = vmatprep.subr.bf16.mxu0 0
    %4460 = vmatpush2.bf16.msra.mxu0 %v4411
    %4461 = vmatprep.subr.bf16.mxu0 0
    %4462 = vmatpush2.bf16.msra.mxu0 %v4410
    %4463 = vmatprep.subr.bf16.mxu0 0
    %4464 = vmatpush2.bf16.msra.mxu0 %v4409
    %4465 = vmatprep.mubr.bf16.mxu0 %v4301
    %4466 = vmatmul.mubr.bf16.gmra.mxu0 %v4300
    %v4467 = vpop.f32.mrf.mxu0
    %v4468 = vadd.f32 0.0, %v4467
    %v4469 = vpop.f32.mrf.mxu0
    %v4470 = vpop.f32.mrf.mxu0
    %v4471 = vadd.f32 0.0, %v4470
    %v4472 = vpop.f32.mrf.mxu0
    %4473 = vmatprep.mubr.bf16.mxu0 %v4303
    %4474 = vmatmul.mubr.bf16.gmra.mxu0 %v4302
    %v4475 = vpop.f32.mrf.mxu0
    %v4476 = vpop.f32.mrf.mxu0
    %v4477 = vpop.f32.mrf.mxu0
    %v4478 = vpop.f32.mrf.mxu0
    %4479 = vdwg.mxu0
    %v4480 = vadd.f32 %v4288, %v4468
    %v4481 = vadd.f32 %v4291, %v4471
    %v4482 = vpack.c.bf16 %v3935, %v3931
    %v4483 = vpack.c.bf16 %v3936, %v3932
    %v4484 = vpack.c.bf16 %v3939, %v3939
    %v4485 = vpack.c.bf16 %v3940, %v3940
    %s4486 = scalar_lea.vmem [#allocation2], 384
    %v4487 = vld [vmem:[%s4486] sm:$0xf]
    %v4488 = vld [vmem:[%s4486 + $0x4] sm:$0xf]
    %v4489 = vld [vmem:[%s4486 + $0x8] sm:$0xf]
    %v4490 = vld [vmem:[%s4486 + $0xc] sm:$0xf]
    %v4491 = vld [vmem:[%s4486 + $0x10] sm:$0xf]
    %v4492 = vld [vmem:[%s4486 + $0x14] sm:$0xf]
    %v4493 = vld [vmem:[%s4486 + $0x18] sm:$0xf]
    %v4494 = vld [vmem:[%s4486 + $0x1c] sm:$0xf]
    %v4495 = vld [vmem:[%s4486 + $0x20] sm:$0xf]
    %v4496 = vld [vmem:[%s4486 + $0x24] sm:$0xf]
    %v4497 = vld [vmem:[%s4486 + $0x28] sm:$0xf]
    %v4498 = vld [vmem:[%s4486 + $0x2c] sm:$0xf]
    %v4499 = vld [vmem:[%s4486 + $0x30] sm:$0xf]
    %v4500 = vld [vmem:[%s4486 + $0x34] sm:$0xf]
    %v4501 = vld [vmem:[%s4486 + $0x38] sm:$0xf]
    %v4502 = vld [vmem:[%s4486 + $0x3c] sm:$0xf]
    %v4503 = vld [vmem:[%s4486 + $0x40] sm:$0xf]
    %v4504 = vld [vmem:[%s4486 + $0x44] sm:$0xf]
    %v4505 = vld [vmem:[%s4486 + $0x48] sm:$0xf]
    %v4506 = vld [vmem:[%s4486 + $0x4c] sm:$0xf]
    %v4507 = vld [vmem:[%s4486 + $0x50] sm:$0xf]
    %v4508 = vld [vmem:[%s4486 + $0x54] sm:$0xf]
    %v4509 = vld [vmem:[%s4486 + $0x58] sm:$0xf]
    %v4510 = vld [vmem:[%s4486 + $0x5c] sm:$0xf]
    %v4511 = vld [vmem:[%s4486 + $0x60] sm:$0xf]
    %v4512 = vld [vmem:[%s4486 + $0x64] sm:$0xf]
    %v4513 = vld [vmem:[%s4486 + $0x68] sm:$0xf]
    %v4514 = vld [vmem:[%s4486 + $0x6c] sm:$0xf]
    %v4515 = vld [vmem:[%s4486 + $0x70] sm:$0xf]
    %v4516 = vld [vmem:[%s4486 + $0x74] sm:$0xf]
    %v4517 = vld [vmem:[%s4486 + $0x78] sm:$0xf]
    %v4518 = vld [vmem:[%s4486 + $0x7c] sm:$0xf]
    %v4551 = vunpack.c.l.b16 %v4487
    %v4552 = vunpack.c.l.b16 %v4488
    %v4553 = vunpack.c.l.b16 %v4489
    %v4554 = vunpack.c.l.b16 %v4490
    %v4555 = vunpack.c.l.b16 %v4491
    %v4556 = vunpack.c.l.b16 %v4492
    %v4557 = vunpack.c.l.b16 %v4493
    %v4558 = vunpack.c.l.b16 %v4494
    %v4559 = vunpack.c.l.b16 %v4495
    %v4560 = vunpack.c.l.b16 %v4496
    %v4561 = vunpack.c.l.b16 %v4497
    %v4562 = vunpack.c.l.b16 %v4498
    %v4563 = vunpack.c.l.b16 %v4499
    %v4564 = vunpack.c.l.b16 %v4500
    %v4565 = vunpack.c.l.b16 %v4501
    %v4566 = vunpack.c.l.b16 %v4502
    %v4567 = vunpack.c.l.b16 %v4503
    %v4568 = vunpack.c.l.b16 %v4504
    %v4569 = vunpack.c.l.b16 %v4505
    %v4570 = vunpack.c.l.b16 %v4506
    %v4571 = vunpack.c.l.b16 %v4507
    %v4572 = vunpack.c.l.b16 %v4508
    %v4573 = vunpack.c.l.b16 %v4509
    %v4574 = vunpack.c.l.b16 %v4510
    %v4575 = vunpack.c.l.b16 %v4511
    %v4576 = vunpack.c.l.b16 %v4512
    %v4577 = vunpack.c.l.b16 %v4513
    %v4578 = vunpack.c.l.b16 %v4514
    %v4579 = vunpack.c.l.b16 %v4515
    %v4580 = vunpack.c.l.b16 %v4516
    %v4581 = vunpack.c.l.b16 %v4517
    %v4582 = vunpack.c.l.b16 %v4518
    %v4583 = vpack.c.b16 %v4552, %v4551
    %v4584 = vpack.c.b16 %v4554, %v4553
    %v4585 = vpack.c.b16 %v4556, %v4555
    %v4586 = vpack.c.b16 %v4558, %v4557
    %v4587 = vpack.c.b16 %v4560, %v4559
    %v4588 = vpack.c.b16 %v4562, %v4561
    %v4589 = vpack.c.b16 %v4564, %v4563
    %v4590 = vpack.c.b16 %v4566, %v4565
    %v4591 = vpack.c.b16 %v4568, %v4567
    %v4592 = vpack.c.b16 %v4570, %v4569
    %v4593 = vpack.c.b16 %v4572, %v4571
    %v4594 = vpack.c.b16 %v4574, %v4573
    %v4595 = vpack.c.b16 %v4576, %v4575
    %v4596 = vpack.c.b16 %v4578, %v4577
    %v4597 = vpack.c.b16 %v4580, %v4579
    %v4598 = vpack.c.b16 %v4582, %v4581
    %4615 = vmatprep.subr.bf16.mxu0 0
    %4616 = vmatpush1.bf16.msra.mxu0 %v4590
    %4617 = vmatprep.subr.bf16.mxu0 0
    %4618 = vmatpush1.bf16.msra.mxu0 %v4589
    %4619 = vmatprep.subr.bf16.mxu0 0
    %4620 = vmatpush1.bf16.msra.mxu0 %v4588
    %4621 = vmatprep.subr.bf16.mxu0 0
    %4622 = vmatpush1.bf16.msra.mxu0 %v4587
    %4623 = vmatprep.subr.bf16.mxu0 0
    %4624 = vmatpush1.bf16.msra.mxu0 %v4586
    %4625 = vmatprep.subr.bf16.mxu0 0
    %4626 = vmatpush1.bf16.msra.mxu0 %v4585
    %4627 = vmatprep.subr.bf16.mxu0 0
    %4628 = vmatpush1.bf16.msra.mxu0 %v4584
    %4629 = vmatprep.subr.bf16.mxu0 0
    %4630 = vmatpush1.bf16.msra.mxu0 %v4583
    %4631 = vmatprep.subr.bf16.mxu0 0
    %4632 = vmatpush2.bf16.msra.mxu0 %v4598
    %4633 = vmatprep.subr.bf16.mxu0 0
    %4634 = vmatpush2.bf16.msra.mxu0 %v4597
    %4635 = vmatprep.subr.bf16.mxu0 0
    %4636 = vmatpush2.bf16.msra.mxu0 %v4596
    %4637 = vmatprep.subr.bf16.mxu0 0
    %4638 = vmatpush2.bf16.msra.mxu0 %v4595
    %4639 = vmatprep.subr.bf16.mxu0 0
    %4640 = vmatpush2.bf16.msra.mxu0 %v4594
    %4641 = vmatprep.subr.bf16.mxu0 0
    %4642 = vmatpush2.bf16.msra.mxu0 %v4593
    %4643 = vmatprep.subr.bf16.mxu0 0
    %4644 = vmatpush2.bf16.msra.mxu0 %v4592
    %4645 = vmatprep.subr.bf16.mxu0 0
    %4646 = vmatpush2.bf16.msra.mxu0 %v4591
    %4647 = vmatprep.mubr.bf16.mxu0 %v4483
    %4648 = vmatmul.mubr.bf16.gmra.mxu0 %v4482
    %v4649 = vpop.f32.mrf.mxu0
    %v4650 = vadd.f32 0.0, %v4649
    %v4651 = vpop.f32.mrf.mxu0
    %v4652 = vpop.f32.mrf.mxu0
    %v4653 = vadd.f32 0.0, %v4652
    %v4654 = vpop.f32.mrf.mxu0
    %4655 = vmatprep.mubr.bf16.mxu0 %v4485
    %4656 = vmatmul.mubr.bf16.gmra.mxu0 %v4484
    %v4657 = vpop.f32.mrf.mxu0
    %v4658 = vpop.f32.mrf.mxu0
    %v4659 = vpop.f32.mrf.mxu0
    %v4660 = vpop.f32.mrf.mxu0
    %4661 = vdwg.mxu0
    %v4662 = vadd.f32 %v4480, %v4650
    %v4663 = vadd.f32 %v4481, %v4653
    %v4664 = vld [vmem:[%s8] sm:$0x1]
    %v4666 = vlaneseq
    %v4667 = vshrl.u32 %v4666, 7
    %v4668 = vsub.s32 0, %v4667
    %v4669 = vrot.slane %v4664, %v4668
    %v4671 = vadd.f32 %v4662, %v4669
    %v4672 = vadd.f32 %v4663, %v4669
    %v4673 = vmax.f32 %v4671, 0.0
    %v4674 = vmax.f32 %v4672, 0.0
    %v4675 = vmax.f32 %v4673, %v4674
    %v4676 = vpack.c.bf16 %v4675, %v4675
    %v4677 = vld [vmem:[%s9] sm:$0xf]
    %v4678 = vld [vmem:[%s9 + $0x4] sm:$0xf]
    %v4679 = vld [vmem:[%s9 + $0x8] sm:$0xf]
    %v4680 = vld [vmem:[%s9 + $0xc] sm:$0xf]
    %v4681 = vld [vmem:[%s9 + $0x10] sm:$0xf]
    %v4682 = vld [vmem:[%s9 + $0x14] sm:$0xf]
    %v4683 = vld [vmem:[%s9 + $0x18] sm:$0xf]
    %v4684 = vld [vmem:[%s9 + $0x1c] sm:$0xf]
    %v4685 = vld [vmem:[%s9 + $0x20] sm:$0xf]
    %v4686 = vld [vmem:[%s9 + $0x24] sm:$0xf]
    %v4687 = vld [vmem:[%s9 + $0x28] sm:$0xf]
    %v4688 = vld [vmem:[%s9 + $0x2c] sm:$0xf]
    %v4689 = vld [vmem:[%s9 + $0x30] sm:$0xf]
    %v4690 = vld [vmem:[%s9 + $0x34] sm:$0xf]
    %v4691 = vld [vmem:[%s9 + $0x38] sm:$0xf]
    %v4692 = vld [vmem:[%s9 + $0x3c] sm:$0xf]
    %v4693 = vld [vmem:[%s10] sm:$0x1]
    %v4695 = vlaneseq
    %v4696 = vshrl.u32 %v4695, 7
    %v4697 = vsub.s32 0, %v4696
    %v4698 = vrot.slane %v4693, %v4697
    %v4716 = vunpack.c.l.b16 %v4677
    %v4717 = vunpack.c.l.b16 %v4678
    %v4718 = vunpack.c.l.b16 %v4679
    %v4719 = vunpack.c.l.b16 %v4680
    %v4720 = vunpack.c.l.b16 %v4681
    %v4721 = vunpack.c.l.b16 %v4682
    %v4722 = vunpack.c.l.b16 %v4683
    %v4723 = vunpack.c.l.b16 %v4684
    %v4724 = vunpack.c.l.b16 %v4685
    %v4725 = vunpack.c.l.b16 %v4686
    %v4726 = vunpack.c.l.b16 %v4687
    %v4727 = vunpack.c.l.b16 %v4688
    %v4728 = vunpack.c.l.b16 %v4689
    %v4729 = vunpack.c.l.b16 %v4690
    %v4730 = vunpack.c.l.b16 %v4691
    %v4731 = vunpack.c.l.b16 %v4692
    %v4732 = vpack.c.b16 %v4717, %v4716
    %v4733 = vpack.c.b16 %v4719, %v4718
    %v4734 = vpack.c.b16 %v4721, %v4720
    %v4735 = vpack.c.b16 %v4723, %v4722
    %v4736 = vpack.c.b16 %v4725, %v4724
    %v4737 = vpack.c.b16 %v4727, %v4726
    %v4738 = vpack.c.b16 %v4729, %v4728
    %v4739 = vpack.c.b16 %v4731, %v4730
    %4748 = vmatprep.subr.bf16.mxu0 0
    %4749 = vmatpush1.bf16.msra.mxu0 %v4739
    %4750 = vmatprep.subr.bf16.mxu0 0
    %4751 = vmatpush1.bf16.msra.mxu0 %v4738
    %4752 = vmatprep.subr.bf16.mxu0 0
    %4753 = vmatpush1.bf16.msra.mxu0 %v4737
    %4754 = vmatprep.subr.bf16.mxu0 0
    %4755 = vmatpush1.bf16.msra.mxu0 %v4736
    %4756 = vmatprep.subr.bf16.mxu0 0
    %4757 = vmatpush1.bf16.msra.mxu0 %v4735
    %4758 = vmatprep.subr.bf16.mxu0 0
    %4759 = vmatpush1.bf16.msra.mxu0 %v4734
    %4760 = vmatprep.subr.bf16.mxu0 0
    %4761 = vmatpush1.bf16.msra.mxu0 %v4733
    %4762 = vmatprep.subr.bf16.mxu0 0
    %4763 = vmatpush1.bf16.msra.mxu0 %v4732
    %4764 = vmatprep.subr.bf16.mxu0 0
    %4765 = vmatpush2.bf16.msra.mxu0 0
    %4766 = vmatprep.subr.bf16.mxu0 0
    %4767 = vmatpush2.bf16.msra.mxu0 0
    %4768 = vmatprep.subr.bf16.mxu0 0
    %4769 = vmatpush2.bf16.msra.mxu0 0
    %4770 = vmatprep.subr.bf16.mxu0 0
    %4771 = vmatpush2.bf16.msra.mxu0 0
    %4772 = vmatprep.subr.bf16.mxu0 0
    %4773 = vmatpush2.bf16.msra.mxu0 0
    %4774 = vmatprep.subr.bf16.mxu0 0
    %4775 = vmatpush2.bf16.msra.mxu0 0
    %4776 = vmatprep.subr.bf16.mxu0 0
    %4777 = vmatpush2.bf16.msra.mxu0 0
    %4778 = vmatprep.subr.bf16.mxu0 0
    %4779 = vmatpush2.bf16.msra.mxu0 0
    %4780 = vmatprep.mubr.bf16.mxu0 0
    %4781 = vmatmul.mubr.bf16.gmra.mxu0 %v4676
    %v4782 = vpop.f32.mrf.mxu0
    %v4783 = vadd.f32 %v4698, %v4782
    %v4784 = vpop.f32.mrf.mxu0
    %v4785 = vpop.f32.mrf.mxu0
    %v4786 = vpop.f32.mrf.mxu0
    %4787 = vdwg.mxu0
    %v4788 = vpack.c.bf16 %v4783, %v4783
    %v4789 = vld [vmem:[%s11] sm:$0xf]
    %v4790 = vld [vmem:[%s11 + $0x4] sm:$0xf]
    %v4791 = vld [vmem:[%s11 + $0x8] sm:$0xf]
    %v4792 = vld [vmem:[%s11 + $0xc] sm:$0xf]
    %v4793 = vld [vmem:[%s11 + $0x10] sm:$0xf]
    %v4794 = vld [vmem:[%s11 + $0x14] sm:$0xf]
    %v4795 = vld [vmem:[%s11 + $0x18] sm:$0xf]
    %v4796 = vld [vmem:[%s11 + $0x1c] sm:$0xf]
    %v4797 = vld [vmem:[%s11 + $0x20] sm:$0xf]
    %v4798 = vld [vmem:[%s11 + $0x24] sm:$0xf]
    %v4799 = vld [vmem:[%s11 + $0x28] sm:$0xf]
    %v4800 = vld [vmem:[%s11 + $0x2c] sm:$0xf]
    %v4801 = vld [vmem:[%s11 + $0x30] sm:$0xf]
    %v4802 = vld [vmem:[%s11 + $0x34] sm:$0xf]
    %v4803 = vld [vmem:[%s11 + $0x38] sm:$0xf]
    %v4804 = vld [vmem:[%s11 + $0x3c] sm:$0xf]
    %v4805 = vld [vmem:[%s12] sm:$0x1]
    %v4807 = vlaneseq
    %v4808 = vshrl.u32 %v4807, 7
    %v4809 = vsub.s32 0, %v4808
    %v4810 = vrot.slane %v4805, %v4809
    %v4828 = vunpack.c.l.b16 %v4789
    %v4829 = vunpack.c.l.b16 %v4790
    %v4830 = vunpack.c.l.b16 %v4791
    %v4831 = vunpack.c.l.b16 %v4792
    %v4832 = vunpack.c.l.b16 %v4793
    %v4833 = vunpack.c.l.b16 %v4794
    %v4834 = vunpack.c.l.b16 %v4795
    %v4835 = vunpack.c.l.b16 %v4796
    %v4836 = vunpack.c.l.b16 %v4797
    %v4837 = vunpack.c.l.b16 %v4798
    %v4838 = vunpack.c.l.b16 %v4799
    %v4839 = vunpack.c.l.b16 %v4800
    %v4840 = vunpack.c.l.b16 %v4801
    %v4841 = vunpack.c.l.b16 %v4802
    %v4842 = vunpack.c.l.b16 %v4803
    %v4843 = vunpack.c.l.b16 %v4804
    %v4844 = vpack.c.b16 %v4829, %v4828
    %v4845 = vpack.c.b16 %v4831, %v4830
    %v4846 = vpack.c.b16 %v4833, %v4832
    %v4847 = vpack.c.b16 %v4835, %v4834
    %v4848 = vpack.c.b16 %v4837, %v4836
    %v4849 = vpack.c.b16 %v4839, %v4838
    %v4850 = vpack.c.b16 %v4841, %v4840
    %v4851 = vpack.c.b16 %v4843, %v4842
    %4860 = vmatprep.subr.bf16.mxu0 0
    %4861 = vmatpush1.bf16.msra.mxu0 %v4851
    %4862 = vmatprep.subr.bf16.mxu0 0
    %4863 = vmatpush1.bf16.msra.mxu0 %v4850
    %4864 = vmatprep.subr.bf16.mxu0 0
    %4865 = vmatpush1.bf16.msra.mxu0 %v4849
    %4866 = vmatprep.subr.bf16.mxu0 0
    %4867 = vmatpush1.bf16.msra.mxu0 %v4848
    %4868 = vmatprep.subr.bf16.mxu0 0
    %4869 = vmatpush1.bf16.msra.mxu0 %v4847
    %4870 = vmatprep.subr.bf16.mxu0 0
    %4871 = vmatpush1.bf16.msra.mxu0 %v4846
    %4872 = vmatprep.subr.bf16.mxu0 0
    %4873 = vmatpush1.bf16.msra.mxu0 %v4845
    %4874 = vmatprep.subr.bf16.mxu0 0
    %4875 = vmatpush1.bf16.msra.mxu0 %v4844
    %4876 = vmatprep.subr.bf16.mxu0 0
    %4877 = vmatpush2.bf16.msra.mxu0 0
    %4878 = vmatprep.subr.bf16.mxu0 0
    %4879 = vmatpush2.bf16.msra.mxu0 0
    %4880 = vmatprep.subr.bf16.mxu0 0
    %4881 = vmatpush2.bf16.msra.mxu0 0
    %4882 = vmatprep.subr.bf16.mxu0 0
    %4883 = vmatpush2.bf16.msra.mxu0 0
    %4884 = vmatprep.subr.bf16.mxu0 0
    %4885 = vmatpush2.bf16.msra.mxu0 0
    %4886 = vmatprep.subr.bf16.mxu0 0
    %4887 = vmatpush2.bf16.msra.mxu0 0
    %4888 = vmatprep.subr.bf16.mxu0 0
    %4889 = vmatpush2.bf16.msra.mxu0 0
    %4890 = vmatprep.subr.bf16.mxu0 0
    %4891 = vmatpush2.bf16.msra.mxu0 0
    %4892 = vmatprep.mubr.bf16.mxu0 0
    %4893 = vmatmul.mubr.bf16.gmra.mxu0 %v4788
    %v4894 = vpop.f32.mrf.mxu0
    %v4895 = vadd.f32 %v4810, %v4894
    %v4896 = vpop.f32.mrf.mxu0
    %v4897 = vpop.f32.mrf.mxu0
    %v4898 = vpop.f32.mrf.mxu0
    %4899 = vdwg.mxu0
    %vm4900 = vcmask 220160
    %4901 = vst.msk [vmem:[#allocation5] sm:$0xff] %vm4900, %v4895
    // Predicated region
    $region58: #{cnn_forward.1} parent=1 // pred_check
      _
    $region59: #{cnn_forward.1} parent=1 // pred_check_branch
      %4903 = sbr.rel (0) target = $region61
    $region60: #{cnn_forward.1} parent=1 // pred_region
      %s4905 = ssub.s32 128, 128
      %4906 = vsyncadd [#allocation4], %s4905
      %s4908 = sshll.u32 [#allocation5], 4
      %s4909 = int_to_ptr.vmem [resolvable:$true] %s4908
      %4911 = dma.vmem_to_hbm [thread:$0]  %s4909, 128, %s13, [#allocation4]
    $region61: #{cnn_forward.1} parent=1 // pred_fallthru
      _
    // Predicated region
    $region62: #{cnn_forward.1} parent=1 // pred_check
      _
    $region63: #{cnn_forward.1} parent=1 // pred_check_branch
      %4913 = sbr.rel (0) target = $region65
    $region64: #{cnn_forward.1} parent=1 // pred_region
      %4914 = dma.done [#allocation4], 128
    $region65: #{cnn_forward.1} parent=1 // pred_fallthru
      _
    %4915 = vsyncpa [#allocation3], 1
    %4916 = vsyncpa [#allocation4], 1

</llo_original>
